<compile_context>
chip_gen: v7x
topology: tpu7x:2x2x1
jax: 0.10.0
libtpu: 0.0.40
codegen_flags: <defaults>
</compile_context>

<pallas_src>
import functools
import math

import numpy as np
import jax
import jax.numpy as jnp
from jax.experimental import pallas as pl
from jax.experimental.pallas import tpu as pltpu


# ------------------------------ fused forward kernel -------------------------------

def _fused_rel_mha_kernel(x_ref, w3_ref, b3_ref, cb_ref, pb_ref, t_ref,
                          wout_ref, bout_ref, o_ref, *, n_heads, head_dim):
    H, D = n_heads, head_dim
    Bb, L, E = x_ref.shape
    Ep = o_ref.shape[-1]
    M = Bb * L

    # ---- QKV projection on the whole [Bb*L, E] slab (bf16 operands, f32 accum) ----
    x = x_ref[...].reshape(M, E).astype(jnp.bfloat16)
    q = jnp.dot(x, w3_ref[0], preferred_element_type=jnp.float32) + b3_ref[0]
    k = jnp.dot(x, w3_ref[1], preferred_element_type=jnp.float32) + b3_ref[1]  # 1/sqrt(D) pre-folded
    v = jnp.dot(x, w3_ref[2], preferred_element_type=jnp.float32) + b3_ref[2]

    qc = q + cb_ref[...]           # content-biased queries  [M, E] f32
    qp = q + pb_ref[...]           # position-biased queries [M, E] f32
    t = t_ref[...]                 # [D, L, L] shift-folded, pre-scaled positional weights (f32)

    def _split_heads(a2d):         # [L, E] -> [H, L, D] (one relayout; lane dim last)
        return jnp.transpose(a2d.reshape(L, H, D), (1, 0, 2))

    ctx_parts = []
    for b in range(Bb):                                  # static unroll, Bb is small
        rows = slice(b * L, (b + 1) * L)
        qc_h = _split_heads(qc[rows]).astype(jnp.bfloat16)    # MXU operands -> bf16
        k_h  = _split_heads(k[rows]).astype(jnp.bfloat16)
        v_h  = _split_heads(v[rows]).astype(jnp.bfloat16)
        qp_h = _split_heads(qp[rows])                         # stays f32 (VPU path)

        # content scores, head-batched on the MXU: [H, L, L] f32
        content = jnp.einsum('hld,hmd->hlm', qc_h, k_h,
                             preferred_element_type=jnp.float32)

        # positional scores with the relative shift pre-folded into t:
        # pos[h,i,j] = sum_d qp_h[h,i,d] * t[d,i,j]  -- D broadcast-MADs over all heads.
        pos = qp_h[:, :, 0:1] * t[0][None]
        for d in range(1, D):
            pos = pos + qp_h[:, :, d:d + 1] * t[d][None]

        s = content + pos                      # 1/sqrt(D) already folded into k-proj & t
        # TODO(synk): attn_mask (masked_fill with dtype-min) and dropout paths not
        # implemented; forward matches the module for attn_mask=None, dropout_p=0.0.
        m = jnp.max(s, axis=-1, keepdims=True)
        e = jnp.exp(s - m)
        w = e * pl.reciprocal(jnp.sum(e, axis=-1, keepdims=True), approx=True)

        ctx_h = jnp.einsum('hlm,hmd->hld', w.astype(jnp.bfloat16), v_h,
                           preferred_element_type=jnp.float32)        # [H, L, D] f32
        ctx_parts.append(jnp.transpose(ctx_h, (1, 0, 2)).reshape(L, E))

    ctx = ctx_parts[0] if Bb == 1 else jnp.concatenate(ctx_parts, axis=0)   # [M, E]

    # single output projection, lane-dense store (Ep = E rounded up to 128)
    out = jnp.dot(ctx.astype(jnp.bfloat16), wout_ref[...],
                  preferred_element_type=jnp.float32) + bout_ref[...]       # [M, Ep]
    o_ref[...] = out.reshape(Bb, L, Ep).astype(o_ref.dtype)


# ----------------------- x-independent preparation (hoisted) -----------------------

def prepare_rel_mha(pos_embedding, params, n_heads, seq_len):
    """Everything that does not depend on x: bf16 weight re-layouts, scale folding,
    and the projected + relative-shift-skewed positional tensor.  Done once."""
    w_qkv = jnp.asarray(params["w_qkv"])                  # [3E, E] torch layout
    E = w_qkv.shape[1]
    assert E % n_heads == 0
    D = E // n_heads
    L = seq_len
    assert L == E // 2 + 1, "RelativeMultiHeadAttention requires seq_len == embedding_dim//2 + 1"
    scale = 1.0 / math.sqrt(D)

    # positional projection (x-independent) + fold of the Transformer-XL relative shift:
    #   t[d, i, j] = posw[d, (L-1)+j-i], zero where the index equals E (the zero pad)
    posw = pos_embedding @ params["w_pos"].T + params["b_pos"]                  # [D, E]
    posw_pad = jnp.concatenate([posw, jnp.zeros((D, 1), posw.dtype)], axis=1)   # [D, E+1]
    rel = (L - 1) + jnp.arange(L)[None, :] - jnp.arange(L)[:, None]             # [L, L]
    t = posw_pad[:, rel] * scale                                                # scale folded

    # QKV weights pre-transposed / split; fold 1/sqrt(D) into the K projection.
    w3 = w_qkv.reshape(3, E, E).transpose(0, 2, 1)        # [3, E_in, E_out]
    b3 = params["b_qkv"].reshape(3, 1, E)
    w3 = w3.at[1].multiply(scale)
    b3 = b3.at[1].multiply(scale)

    # Output projection pre-transposed and lane-padded to a multiple of 128.
    Ep = ((E + 127) // 128) * 128
    w_out_t = params["w_out"].T                           # [E_in, E_out]
    w_out_p = jnp.zeros((E, Ep), jnp.float32).at[:, :E].set(w_out_t)
    b_out_p = jnp.zeros((1, Ep), jnp.float32).at[:, :E].set(params["b_out"].reshape(1, E))

    return dict(
        w_qkv3=w3.astype(jnp.bfloat16),
        b_qkv3=b3.astype(jnp.float32),
        cb=params["content_bias"].reshape(1, E).astype(jnp.float32),
        pb=params["position_bias"].reshape(1, E).astype(jnp.float32),
        t=t.astype(jnp.float32),
        w_out=w_out_p.astype(jnp.bfloat16),
        b_out=b_out_p,
        n_heads=n_heads, head_dim=D, embed=E, embed_pad=Ep,
    )


def _pick_batch_block(batch, seq_len):
    """Pick Bb so Bb*L fills the MXU M dim (~<=256 rows) while keeping the 'parallel'
    grid length >= 2 (even when possible, for v7x's 2 TensorCores)."""
    limit = max(1, 256 // seq_len)
    candidates = [bb for bb in range(1, batch + 1) if batch % bb == 0 and bb <= limit]
    if not candidates:
        candidates = [1]
    for bb in sorted(candidates, reverse=True):
        g = batch // bb
        if g >= 2 and g % 2 == 0:
            return bb
    for bb in sorted(candidates, reverse=True):
        if batch // bb >= 2:
            return bb
    return max(candidates)


def _vmem_limit_bytes(Bb, L, E, Ep, D, H):
    bf16, f32 = 2, 4
    weights = 3 * E * E * bf16 + 5 * E * f32 + D * L * L * f32 + E * Ep * bf16 + Ep * f32
    blocks = Bb * L * (E + Ep) * f32
    M = Bb * L
    inter = 6 * M * E * f32 + 4 * H * L * L * f32 + 4 * H * L * D * f32 + M * Ep * f32
    est = 2 * (weights + blocks) + 2 * inter        # double-buffered blocks + headroom
    return int(min(64 << 20, max(32 << 20, est)))


def rel_mha_fused(x, prep):
    """Single fused pallas_call for the whole forward (QKV proj + attention + out proj)."""
    B, L, E = x.shape
    H, D = prep["n_heads"], prep["head_dim"]
    Ep = prep["embed_pad"]
    assert E == prep["embed"]
    Bb = _pick_batch_block(B, L)
    G = B // Bb

    kernel = functools.partial(_fused_rel_mha_kernel, n_heads=H, head_dim=D)
    out = pl.pallas_call(
        kernel,
        out_shape=jax.ShapeDtypeStruct((B, L, Ep), x.dtype),
        grid=(G,),
        in_specs=[
            pl.BlockSpec((Bb, L, E), lambda g: (g, 0, 0)),      # x (Bb batch elements)
            # The remaining inputs are grid-invariant.  NOTE: at production E add
            # pipeline_mode=pl.Buffered(1) to single-buffer them (halves weight VMEM,
            # important on v7x's 64 MiB VMEM); omitted here as it is moot at E=32.
            pl.BlockSpec((3, E, E), lambda g: (0, 0, 0)),       # W_q/k/v (bf16, K pre-scaled)
            pl.BlockSpec((3, 1, E), lambda g: (0, 0, 0)),       # b_q/k/v
            pl.BlockSpec((1, E), lambda g: (0, 0)),             # content bias (flat)
            pl.BlockSpec((1, E), lambda g: (0, 0)),             # position bias (flat)
            pl.BlockSpec((D, L, L), lambda g: (0, 0, 0)),       # shift-folded positional t
            pl.BlockSpec((E, Ep), lambda g: (0, 0)),            # W_out (bf16, lane-padded)
            pl.BlockSpec((1, Ep), lambda g: (0, 0)),            # b_out (lane-padded)
        ],
        out_specs=pl.BlockSpec((Bb, L, Ep), lambda g: (g, 0, 0)),
        compiler_params=pltpu.CompilerParams(
            dimension_semantics=("parallel",),                  # batch blocks -> 2 TCs on v7x
            vmem_limit_bytes=_vmem_limit_bytes(Bb, L, E, Ep, D, H)),
    )(x, prep["w_qkv3"], prep["b_qkv3"], prep["cb"], prep["pb"], prep["t"],
      prep["w_out"], prep["b_out"])
    return out if Ep == E else out[..., :E]


def relative_mha_forward(x, pos_embedding, params, n_heads):
    """Convenience wrapper matching the module's forward signature; the prep part is
    x-independent and should be hoisted/cached by the caller in real use."""
    prep = prepare_rel_mha(pos_embedding, params, n_heads, x.shape[1])
    return rel_mha_fused(x, prep)


# ------------------------- pure-JAX reference (torch semantics) --------------------

def relative_mha_reference(x, pos_embedding, params, n_heads):
    B, L, E = x.shape
    D = E // n_heads
    qkv = x @ params["w_qkv"].T + params["b_qkv"]
    q, k, v = jnp.split(qkv, 3, axis=2)
    q = q.reshape(B, L, n_heads, D)
    k = k.reshape(B, L, n_heads, D).transpose(0, 2, 1, 3)
    v = v.reshape(B, L, n_heads, D).transpose(0, 2, 1, 3)
    pos = pos_embedding @ params["w_pos"].T + params["b_pos"]
    content = jnp.matmul((q + params["content_bias"]).transpose(0, 2, 1, 3),
                         k.transpose(0, 1, 3, 2))
    pos_scores = jnp.matmul((q + params["position_bias"]).transpose(0, 2, 1, 3), pos)
    Bsz, H, L1, L2 = pos_scores.shape
    zeros = jnp.zeros((Bsz, H, L1, 1), pos_scores.dtype)
    padded = jnp.concatenate([zeros, pos_scores], axis=3)
    padded = padded.reshape(Bsz, H, L2 + 1, L1)
    shifted = padded[:, :, 1:].reshape(Bsz, H, L1, L2)[:, :, :, :L2 // 2 + 1]
    scores = (content + shifted) * (1.0 / math.sqrt(D))
    w = jax.nn.softmax(scores, axis=3)
    ctx = jnp.matmul(w, v)
    ctx = ctx.transpose(0, 2, 1, 3).reshape(B, L, E)
    return ctx @ params["w_out"].T + params["b_out"]


if __name__ == "__main__":
    E = 32            # embedding_dim
    H = 4             # n_heads
    D = E // H        # head_dim
    L = E // 2 + 1    # seq length must equal E//2 + 1 for the module's shapes to line up
    B = 2

    key = jax.random.PRNGKey(0)
    ks = jax.random.split(key, 10)
    s = 1.0 / math.sqrt(E)
    params = {
        "w_qkv": jax.random.normal(ks[0], (3 * E, E), jnp.float32) * s,
        "b_qkv": jax.random.normal(ks[1], (3 * E,), jnp.float32) * s,
        "w_pos": jax.random.normal(ks[2], (E, E), jnp.float32) * s,
        "b_pos": jax.random.normal(ks[3], (E,), jnp.float32) * s,
        "w_out": jax.random.normal(ks[4], (E, E), jnp.float32) * s,
        "b_out": jax.random.normal(ks[5], (E,), jnp.float32) * s,
        # torch __init__ uses zeros; use small deterministic values to exercise the path
        "content_bias": jax.random.normal(ks[6], (H, D), jnp.float32) * 0.1,
        "position_bias": jax.random.normal(ks[7], (H, D), jnp.float32) * 0.1,
    }
    x = jax.random.normal(ks[8], (B, L, E), jnp.float32)
    pos_embedding = jax.random.normal(ks[9], (D, E), jnp.float32)

    # x-independent prep (bf16 weight re-layout, scale folding, positional shift-skew)
    # is hoisted out of the per-forward path; the forward itself is ONE pallas_call.
    prep = prepare_rel_mha(pos_embedding, params, n_heads=H, seq_len=L)
    out = rel_mha_fused(x, prep)
    out = jax.block_until_ready(out)

    ref = relative_mha_reference(x, pos_embedding, params, H)
    ref = jax.block_until_ready(ref)

    # bf16 MXU operands + approx reciprocal -> slightly looser tolerance than pure f32.
    np.testing.assert_allclose(np.asarray(out), np.asarray(ref), rtol=5e-2, atol=7.5e-2)
    print("KERNEL_OK")
</pallas_src>

<mosaic_0001>
module attributes {stable_mosaic.version = 11 : i64} {
  func.func @_fused_rel_mha_kernel(%arg0: i32, %arg1: memref<1x17x32xf32, #tpu.memory_space<vmem>>, %arg2: memref<3x32x32xbf16, #tpu.memory_space<vmem>>, %arg3: memref<3x1x32xf32, #tpu.memory_space<vmem>>, %arg4: memref<1x32xf32, #tpu.memory_space<vmem>>, %arg5: memref<1x32xf32, #tpu.memory_space<vmem>>, %arg6: memref<8x17x17xf32, #tpu.memory_space<vmem>>, %arg7: memref<32x128xbf16, #tpu.memory_space<vmem>>, %arg8: memref<1x128xf32, #tpu.memory_space<vmem>>, %arg9: memref<1x17x128xf32, #tpu.memory_space<vmem>>) attributes {dimension_semantics = [#tpu.dimension_semantics<parallel>], iteration_bounds = array<i64: 2>, scalar_prefetch = 0 : i64, scratch_operands = 0 : i64, tpu.core_type = #tpu.core_type<tc>, window_params = [{transform_indices = @transform_0, window_bounds = array<i64: 1, 17, 32>}, {pipeline_mode = #tpu.pipeline_mode<synchronous>, transform_indices = @transform_1, window_bounds = array<i64: 3, 32, 32>}, {pipeline_mode = #tpu.pipeline_mode<synchronous>, transform_indices = @transform_2, window_bounds = array<i64: 3, 1, 32>}, {pipeline_mode = #tpu.pipeline_mode<synchronous>, transform_indices = @transform_3, window_bounds = array<i64: 1, 32>}, {pipeline_mode = #tpu.pipeline_mode<synchronous>, transform_indices = @transform_4, window_bounds = array<i64: 1, 32>}, {pipeline_mode = #tpu.pipeline_mode<synchronous>, transform_indices = @transform_5, window_bounds = array<i64: 8, 17, 17>}, {pipeline_mode = #tpu.pipeline_mode<synchronous>, transform_indices = @transform_6, window_bounds = array<i64: 32, 128>}, {pipeline_mode = #tpu.pipeline_mode<synchronous>, transform_indices = @transform_7, window_bounds = array<i64: 1, 128>}, {transform_indices = @transform_8, window_bounds = array<i64: 1, 17, 128>}]} {
    %c0 = arith.constant 0 : index
    %c0_0 = arith.constant 0 : index
    %c0_1 = arith.constant 0 : index
    %0 = vector.load %arg1[%c0, %c0_0, %c0_1] : memref<1x17x32xf32, #tpu.memory_space<vmem>>, vector<1x17x32xf32>
    %1 = vector.shape_cast %0 : vector<1x17x32xf32> to vector<17x32xf32>
    %2 = arith.truncf %1 : vector<17x32xf32> to vector<17x32xbf16>
    %c0_2 = arith.constant 0 : index
    %c0_3 = arith.constant 0 : index
    %c0_4 = arith.constant 0 : index
    %3 = vector.load %arg2[%c0_2, %c0_3, %c0_4] : memref<3x32x32xbf16, #tpu.memory_space<vmem>>, vector<1x32x32xbf16>
    %4 = vector.shape_cast %3 : vector<1x32x32xbf16> to vector<32x32xbf16>
    %cst = arith.constant dense<0.000000e+00> : vector<17x32xf32>
    %5 = tpu.matmul %2, %4, %cst {dimension_numbers = #tpu.dot_dimension_numbers<[1], [0], [0], [1], [0, 0, 1, 1], [], []>} : vector<17x32xbf16>, vector<32x32xbf16>, vector<17x32xf32> -> vector<17x32xf32>
    %c0_5 = arith.constant 0 : index
    %c0_6 = arith.constant 0 : index
    %c0_7 = arith.constant 0 : index
    %6 = vector.load %arg3[%c0_5, %c0_6, %c0_7] : memref<3x1x32xf32, #tpu.memory_space<vmem>>, vector<1x1x32xf32>
    %7 = vector.shape_cast %6 : vector<1x1x32xf32> to vector<1x32xf32>
    %8 = vector.broadcast %7 : vector<1x32xf32> to vector<17x32xf32>
    %9 = arith.addf %5, %8 : vector<17x32xf32>
    %c1 = arith.constant 1 : index
    %c0_8 = arith.constant 0 : index
    %c0_9 = arith.constant 0 : index
    %10 = vector.load %arg2[%c1, %c0_8, %c0_9] : memref<3x32x32xbf16, #tpu.memory_space<vmem>>, vector<1x32x32xbf16>
    %11 = vector.shape_cast %10 : vector<1x32x32xbf16> to vector<32x32xbf16>
    %cst_10 = arith.constant dense<0.000000e+00> : vector<17x32xf32>
    %12 = tpu.matmul %2, %11, %cst_10 {dimension_numbers = #tpu.dot_dimension_numbers<[1], [0], [0], [1], [0, 0, 1, 1], [], []>} : vector<17x32xbf16>, vector<32x32xbf16>, vector<17x32xf32> -> vector<17x32xf32>
    %c1_11 = arith.constant 1 : index
    %c0_12 = arith.constant 0 : index
    %c0_13 = arith.constant 0 : index
    %13 = vector.load %arg3[%c1_11, %c0_12, %c0_13] : memref<3x1x32xf32, #tpu.memory_space<vmem>>, vector<1x1x32xf32>
    %14 = vector.shape_cast %13 : vector<1x1x32xf32> to vector<1x32xf32>
    %15 = vector.broadcast %14 : vector<1x32xf32> to vector<17x32xf32>
    %16 = arith.addf %12, %15 : vector<17x32xf32>
    %c2 = arith.constant 2 : index
    %c0_14 = arith.constant 0 : index
    %c0_15 = arith.constant 0 : index
    %17 = vector.load %arg2[%c2, %c0_14, %c0_15] : memref<3x32x32xbf16, #tpu.memory_space<vmem>>, vector<1x32x32xbf16>
    %18 = vector.shape_cast %17 : vector<1x32x32xbf16> to vector<32x32xbf16>
    %cst_16 = arith.constant dense<0.000000e+00> : vector<17x32xf32>
    %19 = tpu.matmul %2, %18, %cst_16 {dimension_numbers = #tpu.dot_dimension_numbers<[1], [0], [0], [1], [0, 0, 1, 1], [], []>} : vector<17x32xbf16>, vector<32x32xbf16>, vector<17x32xf32> -> vector<17x32xf32>
    %c2_17 = arith.constant 2 : index
    %c0_18 = arith.constant 0 : index
    %c0_19 = arith.constant 0 : index
    %20 = vector.load %arg3[%c2_17, %c0_18, %c0_19] : memref<3x1x32xf32, #tpu.memory_space<vmem>>, vector<1x1x32xf32>
    %21 = vector.shape_cast %20 : vector<1x1x32xf32> to vector<1x32xf32>
    %22 = vector.broadcast %21 : vector<1x32xf32> to vector<17x32xf32>
    %23 = arith.addf %19, %22 : vector<17x32xf32>
    %c0_20 = arith.constant 0 : index
    %c0_21 = arith.constant 0 : index
    %24 = vector.load %arg4[%c0_20, %c0_21] : memref<1x32xf32, #tpu.memory_space<vmem>>, vector<1x32xf32>
    %25 = vector.broadcast %24 : vector<1x32xf32> to vector<17x32xf32>
    %26 = arith.addf %9, %25 : vector<17x32xf32>
    %c0_22 = arith.constant 0 : index
    %c0_23 = arith.constant 0 : index
    %27 = vector.load %arg5[%c0_22, %c0_23] : memref<1x32xf32, #tpu.memory_space<vmem>>, vector<1x32xf32>
    %28 = vector.broadcast %27 : vector<1x32xf32> to vector<17x32xf32>
    %29 = arith.addf %9, %28 : vector<17x32xf32>
    %c0_24 = arith.constant 0 : index
    %c0_25 = arith.constant 0 : index
    %c0_26 = arith.constant 0 : index
    %30 = vector.load %arg6[%c0_24, %c0_25, %c0_26] : memref<8x17x17xf32, #tpu.memory_space<vmem>>, vector<8x17x17xf32>
    %31 = vector.shape_cast %26 : vector<17x32xf32> to vector<17x4x8xf32>
    %32 = tpu.transpose %31, [1, 0, 2] : vector<17x4x8xf32> -> vector<4x17x8xf32>
    %33 = arith.truncf %32 : vector<4x17x8xf32> to vector<4x17x8xbf16>
    %34 = vector.shape_cast %16 : vector<17x32xf32> to vector<17x4x8xf32>
    %35 = tpu.transpose %34, [1, 0, 2] : vector<17x4x8xf32> -> vector<4x17x8xf32>
    %36 = arith.truncf %35 : vector<4x17x8xf32> to vector<4x17x8xbf16>
    %37 = vector.shape_cast %23 : vector<17x32xf32> to vector<17x4x8xf32>
    %38 = tpu.transpose %37, [1, 0, 2] : vector<17x4x8xf32> -> vector<4x17x8xf32>
    %39 = arith.truncf %38 : vector<4x17x8xf32> to vector<4x17x8xbf16>
    %40 = vector.shape_cast %29 : vector<17x32xf32> to vector<17x4x8xf32>
    %41 = tpu.transpose %40, [1, 0, 2] : vector<17x4x8xf32> -> vector<4x17x8xf32>
    "tpu.trace_start"() <{level = 10 : i32, message = "hld,hmd->hlm"}> : () -> ()
    %cst_27 = arith.constant dense<0.000000e+00> : vector<4x17x17xf32>
    %42 = tpu.matmul %33, %36, %cst_27 {dimension_numbers = #tpu.dot_dimension_numbers<[2], [2], [1], [1], [0, 0, 0, 1, 1, 1], [0], [0]>} : vector<4x17x8xbf16>, vector<4x17x8xbf16>, vector<4x17x17xf32> -> vector<4x17x17xf32>
    "tpu.trace_stop"() : () -> ()
    %43 = vector.extract_strided_slice %41 {offsets = [0, 0, 0], sizes = [4, 17, 1], strides = [1, 1, 1]} : vector<4x17x8xf32> to vector<4x17x1xf32>
    %44 = vector.extract_strided_slice %30 {offsets = [0, 0, 0], sizes = [1, 17, 17], strides = [1, 1, 1]} : vector<8x17x17xf32> to vector<1x17x17xf32>
    %45 = vector.shape_cast %44 : vector<1x17x17xf32> to vector<17x17xf32>
    %46 = vector.shape_cast %45 : vector<17x17xf32> to vector<1x17x17xf32>
    %47 = vector.broadcast %43 : vector<4x17x1xf32> to vector<4x17x17xf32>
    %48 = vector.broadcast %46 : vector<1x17x17xf32> to vector<4x17x17xf32>
    %49 = arith.mulf %47, %48 : vector<4x17x17xf32>
    %50 = vector.extract_strided_slice %41 {offsets = [0, 0, 1], sizes = [4, 17, 1], strides = [1, 1, 1]} : vector<4x17x8xf32> to vector<4x17x1xf32>
    %51 = vector.extract_strided_slice %30 {offsets = [1, 0, 0], sizes = [1, 17, 17], strides = [1, 1, 1]} : vector<8x17x17xf32> to vector<1x17x17xf32>
    %52 = vector.shape_cast %51 : vector<1x17x17xf32> to vector<17x17xf32>
    %53 = vector.shape_cast %52 : vector<17x17xf32> to vector<1x17x17xf32>
    %54 = vector.broadcast %50 : vector<4x17x1xf32> to vector<4x17x17xf32>
    %55 = vector.broadcast %53 : vector<1x17x17xf32> to vector<4x17x17xf32>
    %56 = arith.mulf %54, %55 : vector<4x17x17xf32>
    %57 = arith.addf %49, %56 : vector<4x17x17xf32>
    %58 = vector.extract_strided_slice %41 {offsets = [0, 0, 2], sizes = [4, 17, 1], strides = [1, 1, 1]} : vector<4x17x8xf32> to vector<4x17x1xf32>
    %59 = vector.extract_strided_slice %30 {offsets = [2, 0, 0], sizes = [1, 17, 17], strides = [1, 1, 1]} : vector<8x17x17xf32> to vector<1x17x17xf32>
    %60 = vector.shape_cast %59 : vector<1x17x17xf32> to vector<17x17xf32>
    %61 = vector.shape_cast %60 : vector<17x17xf32> to vector<1x17x17xf32>
    %62 = vector.broadcast %58 : vector<4x17x1xf32> to vector<4x17x17xf32>
    %63 = vector.broadcast %61 : vector<1x17x17xf32> to vector<4x17x17xf32>
    %64 = arith.mulf %62, %63 : vector<4x17x17xf32>
    %65 = arith.addf %57, %64 : vector<4x17x17xf32>
    %66 = vector.extract_strided_slice %41 {offsets = [0, 0, 3], sizes = [4, 17, 1], strides = [1, 1, 1]} : vector<4x17x8xf32> to vector<4x17x1xf32>
    %67 = vector.extract_strided_slice %30 {offsets = [3, 0, 0], sizes = [1, 17, 17], strides = [1, 1, 1]} : vector<8x17x17xf32> to vector<1x17x17xf32>
    %68 = vector.shape_cast %67 : vector<1x17x17xf32> to vector<17x17xf32>
    %69 = vector.shape_cast %68 : vector<17x17xf32> to vector<1x17x17xf32>
    %70 = vector.broadcast %66 : vector<4x17x1xf32> to vector<4x17x17xf32>
    %71 = vector.broadcast %69 : vector<1x17x17xf32> to vector<4x17x17xf32>
    %72 = arith.mulf %70, %71 : vector<4x17x17xf32>
    %73 = arith.addf %65, %72 : vector<4x17x17xf32>
    %74 = vector.extract_strided_slice %41 {offsets = [0, 0, 4], sizes = [4, 17, 1], strides = [1, 1, 1]} : vector<4x17x8xf32> to vector<4x17x1xf32>
    %75 = vector.extract_strided_slice %30 {offsets = [4, 0, 0], sizes = [1, 17, 17], strides = [1, 1, 1]} : vector<8x17x17xf32> to vector<1x17x17xf32>
    %76 = vector.shape_cast %75 : vector<1x17x17xf32> to vector<17x17xf32>
    %77 = vector.shape_cast %76 : vector<17x17xf32> to vector<1x17x17xf32>
    %78 = vector.broadcast %74 : vector<4x17x1xf32> to vector<4x17x17xf32>
    %79 = vector.broadcast %77 : vector<1x17x17xf32> to vector<4x17x17xf32>
    %80 = arith.mulf %78, %79 : vector<4x17x17xf32>
    %81 = arith.addf %73, %80 : vector<4x17x17xf32>
    %82 = vector.extract_strided_slice %41 {offsets = [0, 0, 5], sizes = [4, 17, 1], strides = [1, 1, 1]} : vector<4x17x8xf32> to vector<4x17x1xf32>
    %83 = vector.extract_strided_slice %30 {offsets = [5, 0, 0], sizes = [1, 17, 17], strides = [1, 1, 1]} : vector<8x17x17xf32> to vector<1x17x17xf32>
    %84 = vector.shape_cast %83 : vector<1x17x17xf32> to vector<17x17xf32>
    %85 = vector.shape_cast %84 : vector<17x17xf32> to vector<1x17x17xf32>
    %86 = vector.broadcast %82 : vector<4x17x1xf32> to vector<4x17x17xf32>
    %87 = vector.broadcast %85 : vector<1x17x17xf32> to vector<4x17x17xf32>
    %88 = arith.mulf %86, %87 : vector<4x17x17xf32>
    %89 = arith.addf %81, %88 : vector<4x17x17xf32>
    %90 = vector.extract_strided_slice %41 {offsets = [0, 0, 6], sizes = [4, 17, 1], strides = [1, 1, 1]} : vector<4x17x8xf32> to vector<4x17x1xf32>
    %91 = vector.extract_strided_slice %30 {offsets = [6, 0, 0], sizes = [1, 17, 17], strides = [1, 1, 1]} : vector<8x17x17xf32> to vector<1x17x17xf32>
    %92 = vector.shape_cast %91 : vector<1x17x17xf32> to vector<17x17xf32>
    %93 = vector.shape_cast %92 : vector<17x17xf32> to vector<1x17x17xf32>
    %94 = vector.broadcast %90 : vector<4x17x1xf32> to vector<4x17x17xf32>
    %95 = vector.broadcast %93 : vector<1x17x17xf32> to vector<4x17x17xf32>
    %96 = arith.mulf %94, %95 : vector<4x17x17xf32>
    %97 = arith.addf %89, %96 : vector<4x17x17xf32>
    %98 = vector.extract_strided_slice %41 {offsets = [0, 0, 7], sizes = [4, 17, 1], strides = [1, 1, 1]} : vector<4x17x8xf32> to vector<4x17x1xf32>
    %99 = vector.extract_strided_slice %30 {offsets = [7, 0, 0], sizes = [1, 17, 17], strides = [1, 1, 1]} : vector<8x17x17xf32> to vector<1x17x17xf32>
    %100 = vector.shape_cast %99 : vector<1x17x17xf32> to vector<17x17xf32>
    %101 = vector.shape_cast %100 : vector<17x17xf32> to vector<1x17x17xf32>
    %102 = vector.broadcast %98 : vector<4x17x1xf32> to vector<4x17x17xf32>
    %103 = vector.broadcast %101 : vector<1x17x17xf32> to vector<4x17x17xf32>
    %104 = arith.mulf %102, %103 : vector<4x17x17xf32>
    %105 = arith.addf %97, %104 : vector<4x17x17xf32>
    %106 = arith.addf %42, %105 : vector<4x17x17xf32>
    %cst_28 = arith.constant dense<0xFF800000> : vector<4x17xf32>
    %107 = vector.multi_reduction <maximumf>, %106, %cst_28 [2] : vector<4x17x17xf32> to vector<4x17xf32>
    %108 = vector.shape_cast %107 : vector<4x17xf32> to vector<4x17x1xf32>
    %109 = vector.broadcast %108 : vector<4x17x1xf32> to vector<4x17x17xf32>
    %110 = arith.subf %106, %109 : vector<4x17x17xf32>
    %111 = math.exp %110 : vector<4x17x17xf32>
    %cst_29 = arith.constant dense<0.000000e+00> : vector<4x17xf32>
    %112 = vector.multi_reduction <add>, %111, %cst_29 [2] : vector<4x17x17xf32> to vector<4x17xf32>
    %113 = vector.shape_cast %112 : vector<4x17xf32> to vector<4x17x1xf32>
    %114 = tpu.reciprocal %113 {approx = true} : vector<4x17x1xf32> -> vector<4x17x1xf32>
    %115 = vector.broadcast %114 : vector<4x17x1xf32> to vector<4x17x17xf32>
    %116 = arith.mulf %111, %115 : vector<4x17x17xf32>
    %117 = arith.truncf %116 : vector<4x17x17xf32> to vector<4x17x17xbf16>
    "tpu.trace_start"() <{level = 10 : i32, message = "hlm,hmd->hld"}> : () -> ()
    %cst_30 = arith.constant dense<0.000000e+00> : vector<4x17x8xf32>
    %118 = tpu.matmul %117, %39, %cst_30 {dimension_numbers = #tpu.dot_dimension_numbers<[2], [1], [1], [2], [0, 0, 0, 1, 1, 2], [0], [0]>} : vector<4x17x17xbf16>, vector<4x17x8xbf16>, vector<4x17x8xf32> -> vector<4x17x8xf32>
    "tpu.trace_stop"() : () -> ()
    %119 = tpu.transpose %118, [1, 0, 2] : vector<4x17x8xf32> -> vector<17x4x8xf32>
    %120 = vector.shape_cast %119 : vector<17x4x8xf32> to vector<17x32xf32>
    %121 = arith.truncf %120 : vector<17x32xf32> to vector<17x32xbf16>
    %c0_31 = arith.constant 0 : index
    %c0_32 = arith.constant 0 : index
    %122 = vector.load %arg7[%c0_31, %c0_32] : memref<32x128xbf16, #tpu.memory_space<vmem>>, vector<32x128xbf16>
    %cst_33 = arith.constant dense<0.000000e+00> : vector<17x128xf32>
    %123 = tpu.matmul %121, %122, %cst_33 {dimension_numbers = #tpu.dot_dimension_numbers<[1], [0], [0], [1], [0, 0, 1, 1], [], []>} : vector<17x32xbf16>, vector<32x128xbf16>, vector<17x128xf32> -> vector<17x128xf32>
    %c0_34 = arith.constant 0 : index
    %c0_35 = arith.constant 0 : index
    %124 = vector.load %arg8[%c0_34, %c0_35] : memref<1x128xf32, #tpu.memory_space<vmem>>, vector<1x128xf32>
    %125 = vector.broadcast %124 : vector<1x128xf32> to vector<17x128xf32>
    %126 = arith.addf %123, %125 : vector<17x128xf32>
    %127 = vector.shape_cast %126 : vector<17x128xf32> to vector<1x17x128xf32>
    %c0_36 = arith.constant 0 : index
    %c0_37 = arith.constant 0 : index
    %c0_38 = arith.constant 0 : index
    %128 = vector.load %arg9[%c0_36, %c0_37, %c0_38] : memref<1x17x128xf32, #tpu.memory_space<vmem>>, vector<1x17x128xf32>
    tpu.vector_store %arg9[%c0_36, %c0_37, %c0_38], %127 {strides = array<i32>} : memref<1x17x128xf32, #tpu.memory_space<vmem>>, vector<1x17x128xf32>,
    return
  }
  func.func @transform_0(%arg0: i32) -> (i32, i32, i32) {
    %c0_i32 = arith.constant 0 : i32
    %c0_i32_0 = arith.constant 0 : i32
    %c0_i32_1 = arith.constant 0 : i32
    return %arg0, %c0_i32, %c0_i32_0 : i32, i32, i32
  }
  func.func @transform_1(%arg0: i32) -> (i32, i32, i32) {
    %c0_i32 = arith.constant 0 : i32
    %c0_i32_0 = arith.constant 0 : i32
    %c0_i32_1 = arith.constant 0 : i32
    %c0_i32_2 = arith.constant 0 : i32
    return %c0_i32, %c0_i32_0, %c0_i32_1 : i32, i32, i32
  }
  func.func @transform_2(%arg0: i32) -> (i32, i32, i32) {
    %c0_i32 = arith.constant 0 : i32
    %c0_i32_0 = arith.constant 0 : i32
    %c0_i32_1 = arith.constant 0 : i32
    %c0_i32_2 = arith.constant 0 : i32
    return %c0_i32, %c0_i32_0, %c0_i32_1 : i32, i32, i32
  }
  func.func @transform_3(%arg0: i32) -> (i32, i32) {
    %c0_i32 = arith.constant 0 : i32
    %c0_i32_0 = arith.constant 0 : i32
    %c0_i32_1 = arith.constant 0 : i32
    return %c0_i32, %c0_i32_0 : i32, i32
  }
  func.func @transform_4(%arg0: i32) -> (i32, i32) {
    %c0_i32 = arith.constant 0 : i32
    %c0_i32_0 = arith.constant 0 : i32
    %c0_i32_1 = arith.constant 0 : i32
    return %c0_i32, %c0_i32_0 : i32, i32
  }
  func.func @transform_5(%arg0: i32) -> (i32, i32, i32) {
    %c0_i32 = arith.constant 0 : i32
    %c0_i32_0 = arith.constant 0 : i32
    %c0_i32_1 = arith.constant 0 : i32
    %c0_i32_2 = arith.constant 0 : i32
    return %c0_i32, %c0_i32_0, %c0_i32_1 : i32, i32, i32
  }
  func.func @transform_6(%arg0: i32) -> (i32, i32) {
    %c0_i32 = arith.constant 0 : i32
    %c0_i32_0 = arith.constant 0 : i32
    %c0_i32_1 = arith.constant 0 : i32
    return %c0_i32, %c0_i32_0 : i32, i32
  }
  func.func @transform_7(%arg0: i32) -> (i32, i32) {
    %c0_i32 = arith.constant 0 : i32
    %c0_i32_0 = arith.constant 0 : i32
    %c0_i32_1 = arith.constant 0 : i32
    return %c0_i32, %c0_i32_0 : i32, i32
  }
  func.func @transform_8(%arg0: i32) -> (i32, i32, i32) {
    %c0_i32 = arith.constant 0 : i32
    %c0_i32_0 = arith.constant 0 : i32
    %c0_i32_1 = arith.constant 0 : i32
    return %arg0, %c0_i32, %c0_i32_0 : i32, i32, i32
  }
}

</mosaic_0001>

<llo_original>
// kernel: tpu_custom_call.1
$region0: #{tpu_custom_call.1}
  #allocation0 [shape = 'u32[]', space=smem, size = 0x4, offset = 0x4, fixed_abs, tag = 'smem constant byte address 0x4 - core index']
  #allocation1 [shape = 'u32[144,128]{1,0:T(1,128)}', space=vmem, size = 0x12000, scoped, tag = 'internal scratch']
  %s0 = inlined_call_operand.vmem [shape: f32[2,17,32], index: 0, kind: input, shape index: {}]
  %s1 = inlined_call_operand.vmem [shape: bf16[3,32,32], index: 1, kind: input, shape index: {}]
  %s2 = inlined_call_operand.vmem [shape: f32[3,1,32], index: 2, kind: input, shape index: {}]
  %s3 = inlined_call_operand.vmem [shape: f32[1,32], index: 3, kind: input, shape index: {}]
  %s4 = inlined_call_operand.vmem [shape: f32[1,32], index: 4, kind: input, shape index: {}]
  %s5 = inlined_call_operand.vmem [shape: f32[8,17,17], index: 5, kind: input, shape index: {}]
  %s6 = inlined_call_operand.vmem [shape: bf16[32,128], index: 6, kind: input, shape index: {}]
  %s7 = inlined_call_operand.vmem [shape: f32[1,128], index: 7, kind: input, shape index: {}]
  %s8 = inlined_call_operand.vmem [shape: f32[2,17,128], index: 8, kind: output, shape index: {}]
  %s9 = sld [smem:[#allocation0]]
  $region65: #{tpu_custom_call.1} parent=0
    _
  %s11 = ssub.s32 1, %s9
  %s12 = scalar_select 0, %s11, %s9
  loop: start=0, step=1, limit=4
  $region2: #{tpu_custom_call.1} parent=0 // loop_pre_header
    _
  $region3: #{tpu_custom_call.1} parent=0 // loop_header
    %s14 = sphi 0, %s18
    %p15 = scmp.ge.s32.totalorder %s14, 4
    %s24 = sphi 0, %s26
    %s27 = sphi 0, %s24
    %s28 = sphi 0, %s27
    %s44 = sphi 0, %s28
    %s48 = sphi 0, %s48
    %s50 = sphi 0, %s48
    %s51 = sphi 0, %s50
    %s65 = sphi 0, %s51
    %s69 = sphi 0, %s69
    %s71 = sphi 0, %s69
    %s72 = sphi 0, %s71
    %s86 = sphi 0, %s72
    %s90 = sphi 0, %s90
    %s92 = sphi 0, %s90
    %s93 = sphi 0, %s92
    %s107 = sphi 0, %s93
    %s111 = sphi 0, %s111
    %s113 = sphi 0, %s111
    %s114 = sphi 0, %s113
    %s128 = sphi 0, %s114
    %s132 = sphi 0, %s132
    %s134 = sphi 0, %s132
    %s135 = sphi 0, %s134
    %s149 = sphi 0, %s135
    %s153 = sphi 0, %s153
    %s155 = sphi 0, %s153
    %s156 = sphi 0, %s155
    %s170 = sphi 0, %s156
    %s174 = sphi 0, %s174
    %s176 = sphi 0, %s174
    %s177 = sphi 0, %s176
    %s191 = sphi 0, %s177
    %s197 = sphi 0, %s199
    %s200 = sphi 0, %s197
    %s201 = sphi 0, %s200
    %s217 = sphi 0, %s201
  $region4: #{tpu_custom_call.1} parent=0 // loop_header_branch
    %17 = sbr.rel (%p15) target = $region8
  $region5: #{tpu_custom_call.1} parent=0 // loop_body
    %s19 = ssub.s32 %s14, 1
    %s20 = ssub.s32 %s14, 2
    %s21 = sadd.s32 %s14, 1
    %s22 = ssub.s32 %s14, %s21
    %p23 = scmp.eq.s32.totalorder %s22, 0
    %s25 = sadd.s32 %s24, 1
    %s26 = scalar_select %p23, %s24, %s25
    %p29 = pneg %p23
    %p30 = scmp.eq.s32.totalorder %s14, 1
    %p31 = por %p29, %p30
    %p32 = scmp.ne.s32.totalorder %s24, %s27
    %p33 = scmp.eq.s32.totalorder %s14, 0
    %p34 = por %p32, %p33
    %p35 = scmp.ne.s32.totalorder %s24, %s27
    %p36 = scmp.eq.s32.totalorder %s19, 1
    %p37 = por %p35, %p36
    %p38 = scmp.ne.s32.totalorder %s27, %s28
    %p39 = scmp.eq.s32.totalorder %s19, 0
    %p40 = por %p38, %p39
    %p41 = scmp.ne.s32.totalorder %s27, %s28
    %p42 = scmp.eq.s32.totalorder %s20, 1
    %p43 = por %p41, %p42
    %p45 = scmp.ne.s32.totalorder %s28, %s44
    %p46 = scmp.eq.s32.totalorder %s20, 0
    %p47 = por %p45, %p46
    %s49 = sadd.s32 %s48, 1
    %p52 = scmp.eq.s32.totalorder %s14, 1
    %p53 = scmp.ne.s32.totalorder %s48, %s50
    %p54 = scmp.eq.s32.totalorder %s14, 0
    %p55 = por %p53, %p54
    %p56 = scmp.ne.s32.totalorder %s48, %s50
    %p57 = scmp.eq.s32.totalorder %s19, 1
    %p58 = por %p56, %p57
    %p59 = scmp.ne.s32.totalorder %s50, %s51
    %p60 = scmp.eq.s32.totalorder %s19, 0
    %p61 = por %p59, %p60
    %p62 = scmp.ne.s32.totalorder %s50, %s51
    %p63 = scmp.eq.s32.totalorder %s20, 1
    %p64 = por %p62, %p63
    %p66 = scmp.ne.s32.totalorder %s51, %s65
    %p67 = scmp.eq.s32.totalorder %s20, 0
    %p68 = por %p66, %p67
    %s70 = sadd.s32 %s69, 1
    %p73 = scmp.eq.s32.totalorder %s14, 1
    %p74 = scmp.ne.s32.totalorder %s69, %s71
    %p75 = scmp.eq.s32.totalorder %s14, 0
    %p76 = por %p74, %p75
    %p77 = scmp.ne.s32.totalorder %s69, %s71
    %p78 = scmp.eq.s32.totalorder %s19, 1
    %p79 = por %p77, %p78
    %p80 = scmp.ne.s32.totalorder %s71, %s72
    %p81 = scmp.eq.s32.totalorder %s19, 0
    %p82 = por %p80, %p81
    %p83 = scmp.ne.s32.totalorder %s71, %s72
    %p84 = scmp.eq.s32.totalorder %s20, 1
    %p85 = por %p83, %p84
    %p87 = scmp.ne.s32.totalorder %s72, %s86
    %p88 = scmp.eq.s32.totalorder %s20, 0
    %p89 = por %p87, %p88
    %s91 = sadd.s32 %s90, 1
    %p94 = scmp.eq.s32.totalorder %s14, 1
    %p95 = scmp.ne.s32.totalorder %s90, %s92
    %p96 = scmp.eq.s32.totalorder %s14, 0
    %p97 = por %p95, %p96
    %p98 = scmp.ne.s32.totalorder %s90, %s92
    %p99 = scmp.eq.s32.totalorder %s19, 1
    %p100 = por %p98, %p99
    %p101 = scmp.ne.s32.totalorder %s92, %s93
    %p102 = scmp.eq.s32.totalorder %s19, 0
    %p103 = por %p101, %p102
    %p104 = scmp.ne.s32.totalorder %s92, %s93
    %p105 = scmp.eq.s32.totalorder %s20, 1
    %p106 = por %p104, %p105
    %p108 = scmp.ne.s32.totalorder %s93, %s107
    %p109 = scmp.eq.s32.totalorder %s20, 0
    %p110 = por %p108, %p109
    %s112 = sadd.s32 %s111, 1
    %p115 = scmp.eq.s32.totalorder %s14, 1
    %p116 = scmp.ne.s32.totalorder %s111, %s113
    %p117 = scmp.eq.s32.totalorder %s14, 0
    %p118 = por %p116, %p117
    %p119 = scmp.ne.s32.totalorder %s111, %s113
    %p120 = scmp.eq.s32.totalorder %s19, 1
    %p121 = por %p119, %p120
    %p122 = scmp.ne.s32.totalorder %s113, %s114
    %p123 = scmp.eq.s32.totalorder %s19, 0
    %p124 = por %p122, %p123
    %p125 = scmp.ne.s32.totalorder %s113, %s114
    %p126 = scmp.eq.s32.totalorder %s20, 1
    %p127 = por %p125, %p126
    %p129 = scmp.ne.s32.totalorder %s114, %s128
    %p130 = scmp.eq.s32.totalorder %s20, 0
    %p131 = por %p129, %p130
    %s133 = sadd.s32 %s132, 1
    %p136 = scmp.eq.s32.totalorder %s14, 1
    %p137 = scmp.ne.s32.totalorder %s132, %s134
    %p138 = scmp.eq.s32.totalorder %s14, 0
    %p139 = por %p137, %p138
    %p140 = scmp.ne.s32.totalorder %s132, %s134
    %p141 = scmp.eq.s32.totalorder %s19, 1
    %p142 = por %p140, %p141
    %p143 = scmp.ne.s32.totalorder %s134, %s135
    %p144 = scmp.eq.s32.totalorder %s19, 0
    %p145 = por %p143, %p144
    %p146 = scmp.ne.s32.totalorder %s134, %s135
    %p147 = scmp.eq.s32.totalorder %s20, 1
    %p148 = por %p146, %p147
    %p150 = scmp.ne.s32.totalorder %s135, %s149
    %p151 = scmp.eq.s32.totalorder %s20, 0
    %p152 = por %p150, %p151
    %s154 = sadd.s32 %s153, 1
    %p157 = scmp.eq.s32.totalorder %s14, 1
    %p158 = scmp.ne.s32.totalorder %s153, %s155
    %p159 = scmp.eq.s32.totalorder %s14, 0
    %p160 = por %p158, %p159
    %p161 = scmp.ne.s32.totalorder %s153, %s155
    %p162 = scmp.eq.s32.totalorder %s19, 1
    %p163 = por %p161, %p162
    %p164 = scmp.ne.s32.totalorder %s155, %s156
    %p165 = scmp.eq.s32.totalorder %s19, 0
    %p166 = por %p164, %p165
    %p167 = scmp.ne.s32.totalorder %s155, %s156
    %p168 = scmp.eq.s32.totalorder %s20, 1
    %p169 = por %p167, %p168
    %p171 = scmp.ne.s32.totalorder %s156, %s170
    %p172 = scmp.eq.s32.totalorder %s20, 0
    %p173 = por %p171, %p172
    %s175 = sadd.s32 %s174, 1
    %p178 = scmp.eq.s32.totalorder %s14, 1
    %p179 = scmp.ne.s32.totalorder %s174, %s176
    %p180 = scmp.eq.s32.totalorder %s14, 0
    %p181 = por %p179, %p180
    %p182 = scmp.ne.s32.totalorder %s174, %s176
    %p183 = scmp.eq.s32.totalorder %s19, 1
    %p184 = por %p182, %p183
    %p185 = scmp.ne.s32.totalorder %s176, %s177
    %p186 = scmp.eq.s32.totalorder %s19, 0
    %p187 = por %p185, %p186
    %p188 = scmp.ne.s32.totalorder %s176, %s177
    %p189 = scmp.eq.s32.totalorder %s20, 1
    %p190 = por %p188, %p189
    %p192 = scmp.ne.s32.totalorder %s177, %s191
    %p193 = scmp.eq.s32.totalorder %s20, 0
    %p194 = por %p192, %p193
    %s195 = ssub.s32 %s14, %s21
    %p196 = scmp.eq.s32.totalorder %s195, 0
    %s198 = sadd.s32 %s197, 1
    %s199 = scalar_select %p196, %s197, %s198
    %p202 = pneg %p196
    %p203 = scmp.eq.s32.totalorder %s14, 1
    %p204 = por %p202, %p203
    %p205 = scmp.ne.s32.totalorder %s197, %s200
    %p206 = scmp.eq.s32.totalorder %s14, 0
    %p207 = por %p205, %p206
    %p208 = scmp.ne.s32.totalorder %s197, %s200
    %p209 = scmp.eq.s32.totalorder %s19, 1
    %p210 = por %p208, %p209
    %p211 = scmp.ne.s32.totalorder %s200, %s201
    %p212 = scmp.eq.s32.totalorder %s19, 0
    %p213 = por %p211, %p212
    %p214 = scmp.ne.s32.totalorder %s200, %s201
    %p215 = scmp.eq.s32.totalorder %s20, 1
    %p216 = por %p214, %p215
    %p218 = scmp.ne.s32.totalorder %s201, %s217
    %p219 = scmp.eq.s32.totalorder %s20, 0
    %p220 = por %p218, %p219
    %p221 = scmp.le.s32.totalorder 1, %s14
    %p222 = scmp.lt.s32.totalorder %s14, 3
    %p223 = pnand %p221, %p222
    %p224 = pneg %p223
    // Predicated region
    $region9: #{tpu_custom_call.1} parent=5 // pred_check
      _
    $region10: #{tpu_custom_call.1} parent=5 // pred_check_branch
      %226 = sbr.rel (%p223) target = $region12
    $region11: #{tpu_custom_call.1} parent=5 // pred_region
      %s227 = ssub.s32 %s14, 1
      // Predicated region
      $region13: #{tpu_custom_call.1} parent=11 // pred_check
        %p228 = pneg %p61
      $region14: #{tpu_custom_call.1} parent=11 // pred_check_branch
        %230 = sbr.rel (%p228) target = $region16
      $region15: #{tpu_custom_call.1} parent=11 // pred_region
        _
      $region16: #{tpu_custom_call.1} parent=11 // pred_fallthru
        _
      // Predicated region
      $region17: #{tpu_custom_call.1} parent=11 // pred_check
        %p231 = pneg %p82
      $region18: #{tpu_custom_call.1} parent=11 // pred_check_branch
        %233 = sbr.rel (%p231) target = $region20
      $region19: #{tpu_custom_call.1} parent=11 // pred_region
        _
      $region20: #{tpu_custom_call.1} parent=11 // pred_fallthru
        _
      // Predicated region
      $region21: #{tpu_custom_call.1} parent=11 // pred_check
        %p234 = pneg %p103
      $region22: #{tpu_custom_call.1} parent=11 // pred_check_branch
        %236 = sbr.rel (%p234) target = $region24
      $region23: #{tpu_custom_call.1} parent=11 // pred_region
        _
      $region24: #{tpu_custom_call.1} parent=11 // pred_fallthru
        _
      // Predicated region
      $region25: #{tpu_custom_call.1} parent=11 // pred_check
        %p237 = pneg %p124
      $region26: #{tpu_custom_call.1} parent=11 // pred_check_branch
        %239 = sbr.rel (%p237) target = $region28
      $region27: #{tpu_custom_call.1} parent=11 // pred_region
        _
      $region28: #{tpu_custom_call.1} parent=11 // pred_fallthru
        _
      // Predicated region
      $region29: #{tpu_custom_call.1} parent=11 // pred_check
        %p240 = pneg %p145
      $region30: #{tpu_custom_call.1} parent=11 // pred_check_branch
        %242 = sbr.rel (%p240) target = $region32
      $region31: #{tpu_custom_call.1} parent=11 // pred_region
        _
      $region32: #{tpu_custom_call.1} parent=11 // pred_fallthru
        _
      // Predicated region
      $region33: #{tpu_custom_call.1} parent=11 // pred_check
        %p243 = pneg %p166
      $region34: #{tpu_custom_call.1} parent=11 // pred_check_branch
        %245 = sbr.rel (%p243) target = $region36
      $region35: #{tpu_custom_call.1} parent=11 // pred_region
        _
      $region36: #{tpu_custom_call.1} parent=11 // pred_fallthru
        _
      // Predicated region
      $region37: #{tpu_custom_call.1} parent=11 // pred_check
        %p246 = pneg %p187
      $region38: #{tpu_custom_call.1} parent=11 // pred_check_branch
        %248 = sbr.rel (%p246) target = $region40
      $region39: #{tpu_custom_call.1} parent=11 // pred_region
        _
      $region40: #{tpu_custom_call.1} parent=11 // pred_fallthru
        _
    $region12: #{tpu_custom_call.1} parent=5 // pred_fallthru
      _
    %p249 = scmp.lt.s32.totalorder %s14, 2
    // Predicated region
    $region41: #{tpu_custom_call.1} parent=5 // pred_check
      %p250 = pneg %p249
    $region42: #{tpu_custom_call.1} parent=5 // pred_check_branch
      %252 = sbr.rel (%p250) target = $region44
    $region43: #{tpu_custom_call.1} parent=5 // pred_region
      // Predicated region
      $region45: #{tpu_custom_call.1} parent=43 // pred_check
        %p253 = pneg %p34
      $region46: #{tpu_custom_call.1} parent=43 // pred_check_branch
        %255 = sbr.rel (%p253) target = $region48
      $region47: #{tpu_custom_call.1} parent=43 // pred_region
        %p256 = scmp.lt.s32.totalorder %s14, 1
        %s257 = scalar_select %p256, %s14, 1
        %s258 = smul.addr %s257, 3
        %s259 = smul.addr %s258, 8
        %s260 = scalar_lea.vmem %s0, %s259
      $region48: #{tpu_custom_call.1} parent=43 // pred_fallthru
        _
    $region44: #{tpu_custom_call.1} parent=5 // pred_fallthru
      _
    %p261 = scmp.le.s32.totalorder 1, %s14
    %p262 = scmp.lt.s32.totalorder %s14, 3
    %p263 = pnand %p261, %p262
    %p264 = pneg %p263
    // Predicated region
    $region49: #{tpu_custom_call.1} parent=5 // pred_check
      _
    $region50: #{tpu_custom_call.1} parent=5 // pred_check_branch
      %266 = sbr.rel (%p263) target = $region52
    $region51: #{tpu_custom_call.1} parent=5 // pred_region
      %s267 = ssub.s32 %s14, 1
      %p268 = scmp.lt.s32.totalorder %s19, 1
      %s269 = scalar_select %p268, %s19, 1
      %s270 = smul.addr %s269, 3
      %s271 = smul.addr %s270, 8
      %s272 = scalar_lea.vmem %s0, %s271
      %p273 = pneg %p40
      %p274 = pneg %p37
      %p275 = pneg %p61
      %p276 = pneg %p58
      %p277 = pneg %p82
      %p278 = pneg %p79
      %p279 = pneg %p103
      %p280 = pneg %p100
      %p281 = pneg %p124
      %p282 = pneg %p121
      %p283 = pneg %p145
      %p284 = pneg %p142
      %p285 = pneg %p166
      %p286 = pneg %p163
      %p287 = pneg %p187
      %p288 = pneg %p184
      %p289 = pneg %p213
      %p290 = pneg %p210
      %p291 = scmp.lt.s32.totalorder %s19, 1
      %s292 = scalar_select %p291, %s19, 1
      %s293 = smul.addr %s292, 3
      %s294 = smul.addr %s293, 8
      %s295 = scalar_lea.vmem %s8, %s294
      %p296 = scmp.lt.s32.totalorder %s19, 1
      %s297 = scalar_select %p296, %s19, 1
      %s298 = smul.addr %s297, 3
      %s299 = smul.addr %s298, 8
      %s300 = scalar_lea.vmem %s0, %s299
      %p301 = scmp.lt.s32.totalorder %s19, 1
      %s302 = scalar_select %p301, %s19, 1
      %s303 = smul.addr %s302, 3
      %s304 = smul.addr %s303, 8
      %s305 = scalar_lea.vmem %s8, %s304
      %v307 = vld [vmem:[%s300] sm:$0xff]
      %v308 = vld [vmem:[%s300 + $0x8] sm:$0xff]
      %v309 = vld [vmem:[%s300 + $0x10] sm:$0x1]
      %v310 = vpack.c.bf16 %v308, %v307
      %v311 = vpack.c.bf16 %v309, %v309
      %v312 = vld [vmem:[%s1] sm:$0xf]
      %v313 = vld [vmem:[%s1 + $0x4] sm:$0xf]
      %v314 = vld [vmem:[%s1 + $0x8] sm:$0xf]
      %v315 = vld [vmem:[%s1 + $0xc] sm:$0xf]
      %v316 = vld [vmem:[%s2] sm:$0x1]
      %v318 = vlaneseq
      %v319 = vshrl.u32 %v318, 7
      %v320 = vsub.s32 0, %v319
      %v321 = vrot.slane %v316, %v320
      %v327 = vunpack.c.l.b16 %v312
      %v328 = vunpack.c.l.b16 %v313
      %v329 = vunpack.c.l.b16 %v314
      %v330 = vunpack.c.l.b16 %v315
      %v331 = vpack.c.b16 %v328, %v327
      %v332 = vpack.c.b16 %v330, %v329
      %vm335 = vcmask 261120
      %v337 = vsel %vm335, %v310, 0
      %v340 = vsel %vm335, %v311, 0
      %342 = vmatprep.subr.bf16.mxu0 0
      %343 = vmatpush1.bf16.msra.mxu0 %v331
      %344 = vmatprep.subr.bf16.mxu0 0
      %345 = vmatpush1.bf16.msra.mxu0 %v332
      %346 = vmatprep.subr.bf16.mxu0 0
      %347 = vmatpush1.bf16.msra.mxu0 0
      %348 = vmatprep.subr.bf16.mxu0 0
      %349 = vmatpush1.bf16.msra.mxu0 0
      %350 = vmatprep.subr.bf16.mxu0 0
      %351 = vmatpush1.bf16.msra.mxu0 0
      %352 = vmatprep.subr.bf16.mxu0 0
      %353 = vmatpush1.bf16.msra.mxu0 0
      %354 = vmatprep.subr.bf16.mxu0 0
      %355 = vmatpush1.bf16.msra.mxu0 0
      %356 = vmatprep.subr.bf16.mxu0 0
      %357 = vmatpush1.bf16.msra.mxu0 0
      %358 = vmatprep.subr.bf16.mxu0 0
      %359 = vmatpush1.bf16.msra.mxu0 0
      %360 = vmatprep.subr.bf16.mxu0 0
      %361 = vmatpush1.bf16.msra.mxu0 0
      %362 = vmatprep.subr.bf16.mxu0 0
      %363 = vmatpush1.bf16.msra.mxu0 0
      %364 = vmatprep.subr.bf16.mxu0 0
      %365 = vmatpush1.bf16.msra.mxu0 0
      %366 = vmatprep.subr.bf16.mxu0 0
      %367 = vmatpush1.bf16.msra.mxu0 0
      %368 = vmatprep.subr.bf16.mxu0 0
      %369 = vmatpush1.bf16.msra.mxu0 0
      %370 = vmatprep.subr.bf16.mxu0 0
      %371 = vmatpush1.bf16.msra.mxu0 0
      %372 = vmatprep.subr.bf16.mxu0 0
      %373 = vmatpush1.bf16.msra.mxu0 0
      %374 = vmatprep.mubr.bf16.mxu0 0
      %375 = vmatmul.mubr.bf16.gmra.mrb[0].mxu0 %v337
      %v376 = vpop.f32.mrb[0].mxu0
      %v377 = vadd.f32 %v321, %v376
      %v378 = vpop.f32.mrb[0].mxu0
      %v379 = vpop.f32.mrb[0].mxu0
      %v380 = vadd.f32 %v321, %v379
      %v381 = vpop.f32.mrb[0].mxu0
      %382 = vmatprep.mubr.bf16.mxu0 0
      %383 = vmatmul.mubr.bf16.gmra.mrb[0].mxu0 %v340
      %v384 = vpop.f32.mrb[0].mxu0
      %v385 = vadd.f32 %v321, %v384
      %v386 = vpop.f32.mrb[0].mxu0
      %v387 = vpop.f32.mrb[0].mxu0
      %v388 = vpop.f32.mrb[0].mxu0
      %389 = vdwg.mxu0
      %s390 = scalar_lea.vmem %s1, 16
      %v391 = vld [vmem:[%s390] sm:$0xf]
      %v392 = vld [vmem:[%s390 + $0x4] sm:$0xf]
      %v393 = vld [vmem:[%s390 + $0x8] sm:$0xf]
      %v394 = vld [vmem:[%s390 + $0xc] sm:$0xf]
      %s395 = scalar_lea.vmem %s2, 1
      %v396 = vld [vmem:[%s395] sm:$0x1]
      %v398 = vlaneseq
      %v399 = vshrl.u32 %v398, 7
      %v400 = vsub.s32 0, %v399
      %v401 = vrot.slane %v396, %v400
      %v407 = vunpack.c.l.b16 %v391
      %v408 = vunpack.c.l.b16 %v392
      %v409 = vunpack.c.l.b16 %v393
      %v410 = vunpack.c.l.b16 %v394
      %v411 = vpack.c.b16 %v408, %v407
      %v412 = vpack.c.b16 %v410, %v409
      %415 = vmatprep.subr.bf16.mxu0 0
      %416 = vmatpush1.bf16.msra.mxu0 %v411
      %417 = vmatprep.subr.bf16.mxu0 0
      %418 = vmatpush1.bf16.msra.mxu0 %v412
      %419 = vmatprep.subr.bf16.mxu0 0
      %420 = vmatpush1.bf16.msra.mxu0 0
      %421 = vmatprep.subr.bf16.mxu0 0
      %422 = vmatpush1.bf16.msra.mxu0 0
      %423 = vmatprep.subr.bf16.mxu0 0
      %424 = vmatpush1.bf16.msra.mxu0 0
      %425 = vmatprep.subr.bf16.mxu0 0
      %426 = vmatpush1.bf16.msra.mxu0 0
      %427 = vmatprep.subr.bf16.mxu0 0
      %428 = vmatpush1.bf16.msra.mxu0 0
      %429 = vmatprep.subr.bf16.mxu0 0
      %430 = vmatpush1.bf16.msra.mxu0 0
      %431 = vmatprep.subr.bf16.mxu0 0
      %432 = vmatpush1.bf16.msra.mxu0 0
      %433 = vmatprep.subr.bf16.mxu0 0
      %434 = vmatpush1.bf16.msra.mxu0 0
      %435 = vmatprep.subr.bf16.mxu0 0
      %436 = vmatpush1.bf16.msra.mxu0 0
      %437 = vmatprep.subr.bf16.mxu0 0
      %438 = vmatpush1.bf16.msra.mxu0 0
      %439 = vmatprep.subr.bf16.mxu0 0
      %440 = vmatpush1.bf16.msra.mxu0 0
      %441 = vmatprep.subr.bf16.mxu0 0
      %442 = vmatpush1.bf16.msra.mxu0 0
      %443 = vmatprep.subr.bf16.mxu0 0
      %444 = vmatpush1.bf16.msra.mxu0 0
      %445 = vmatprep.subr.bf16.mxu0 0
      %446 = vmatpush1.bf16.msra.mxu0 0
      %447 = vmatprep.mubr.bf16.mxu0 0
      %448 = vmatmul.mubr.bf16.gmra.mrb[0].mxu0 %v337
      %v449 = vpop.f32.mrb[0].mxu0
      %v450 = vadd.f32 %v401, %v449
      %v451 = vpop.f32.mrb[0].mxu0
      %v452 = vpop.f32.mrb[0].mxu0
      %v453 = vadd.f32 %v401, %v452
      %v454 = vpop.f32.mrb[0].mxu0
      %455 = vmatprep.mubr.bf16.mxu0 0
      %456 = vmatmul.mubr.bf16.gmra.mrb[0].mxu0 %v340
      %v457 = vpop.f32.mrb[0].mxu0
      %v458 = vadd.f32 %v401, %v457
      %v459 = vpop.f32.mrb[0].mxu0
      %v460 = vpop.f32.mrb[0].mxu0
      %v461 = vpop.f32.mrb[0].mxu0
      %462 = vdwg.mxu0
      %s463 = scalar_lea.vmem %s1, 32
      %v464 = vld [vmem:[%s463] sm:$0xf]
      %v465 = vld [vmem:[%s463 + $0x4] sm:$0xf]
      %v466 = vld [vmem:[%s463 + $0x8] sm:$0xf]
      %v467 = vld [vmem:[%s463 + $0xc] sm:$0xf]
      %s468 = scalar_lea.vmem %s2, 2
      %v469 = vld [vmem:[%s468] sm:$0x1]
      %v471 = vlaneseq
      %v472 = vshrl.u32 %v471, 7
      %v473 = vsub.s32 0, %v472
      %v474 = vrot.slane %v469, %v473
      %v480 = vunpack.c.l.b16 %v464
      %v481 = vunpack.c.l.b16 %v465
      %v482 = vunpack.c.l.b16 %v466
      %v483 = vunpack.c.l.b16 %v467
      %v484 = vpack.c.b16 %v481, %v480
      %v485 = vpack.c.b16 %v483, %v482
      %488 = vmatprep.subr.bf16.mxu0 0
      %489 = vmatpush1.bf16.msra.mxu0 %v484
      %490 = vmatprep.subr.bf16.mxu0 0
      %491 = vmatpush1.bf16.msra.mxu0 %v485
      %492 = vmatprep.subr.bf16.mxu0 0
      %493 = vmatpush1.bf16.msra.mxu0 0
      %494 = vmatprep.subr.bf16.mxu0 0
      %495 = vmatpush1.bf16.msra.mxu0 0
      %496 = vmatprep.subr.bf16.mxu0 0
      %497 = vmatpush1.bf16.msra.mxu0 0
      %498 = vmatprep.subr.bf16.mxu0 0
      %499 = vmatpush1.bf16.msra.mxu0 0
      %500 = vmatprep.subr.bf16.mxu0 0
      %501 = vmatpush1.bf16.msra.mxu0 0
      %502 = vmatprep.subr.bf16.mxu0 0
      %503 = vmatpush1.bf16.msra.mxu0 0
      %504 = vmatprep.subr.bf16.mxu0 0
      %505 = vmatpush1.bf16.msra.mxu0 0
      %506 = vmatprep.subr.bf16.mxu0 0
      %507 = vmatpush1.bf16.msra.mxu0 0
      %508 = vmatprep.subr.bf16.mxu0 0
      %509 = vmatpush1.bf16.msra.mxu0 0
      %510 = vmatprep.subr.bf16.mxu0 0
      %511 = vmatpush1.bf16.msra.mxu0 0
      %512 = vmatprep.subr.bf16.mxu0 0
      %513 = vmatpush1.bf16.msra.mxu0 0
      %514 = vmatprep.subr.bf16.mxu0 0
      %515 = vmatpush1.bf16.msra.mxu0 0
      %516 = vmatprep.subr.bf16.mxu0 0
      %517 = vmatpush1.bf16.msra.mxu0 0
      %518 = vmatprep.subr.bf16.mxu0 0
      %519 = vmatpush1.bf16.msra.mxu0 0
      %520 = vmatprep.mubr.bf16.mxu0 0
      %521 = vmatmul.mubr.bf16.gmra.mrb[0].mxu0 %v337
      %v522 = vpop.f32.mrb[0].mxu0
      %v523 = vadd.f32 %v474, %v522
      %v524 = vpop.f32.mrb[0].mxu0
      %v525 = vpop.f32.mrb[0].mxu0
      %v526 = vadd.f32 %v474, %v525
      %v527 = vpop.f32.mrb[0].mxu0
      %528 = vmatprep.mubr.bf16.mxu0 0
      %529 = vmatmul.mubr.bf16.gmra.mrb[0].mxu0 %v340
      %v530 = vpop.f32.mrb[0].mxu0
      %v531 = vadd.f32 %v474, %v530
      %v532 = vpop.f32.mrb[0].mxu0
      %v533 = vpop.f32.mrb[0].mxu0
      %v534 = vpop.f32.mrb[0].mxu0
      %535 = vdwg.mxu0
      %v536 = vld [vmem:[%s3] sm:$0x1]
      %v538 = vlaneseq
      %v539 = vshrl.u32 %v538, 7
      %v540 = vsub.s32 0, %v539
      %v541 = vrot.slane %v536, %v540
      %v543 = vadd.f32 %v377, %v541
      %v544 = vadd.f32 %v380, %v541
      %v545 = vadd.f32 %v385, %v541
      %v546 = vld [vmem:[%s4] sm:$0x1]
      %v548 = vlaneseq
      %v549 = vshrl.u32 %v548, 7
      %v550 = vsub.s32 0, %v549
      %v551 = vrot.slane %v546, %v550
      %v553 = vadd.f32 %v377, %v551
      %v554 = vadd.f32 %v380, %v551
      %v555 = vadd.f32 %v385, %v551
      %v556 = vld [vmem:[%s5] sm:$0xff]
      %v557 = vld [vmem:[%s5 + $0x8] sm:$0xff]
      %v558 = vld [vmem:[%s5 + $0x10] sm:$0x1]
      %v559 = vld [vmem:[%s5 + $0x18] sm:$0xff]
      %v560 = vld [vmem:[%s5 + $0x20] sm:$0xff]
      %v561 = vld [vmem:[%s5 + $0x28] sm:$0x1]
      %v562 = vld [vmem:[%s5 + $0x30] sm:$0xff]
      %v563 = vld [vmem:[%s5 + $0x38] sm:$0xff]
      %v564 = vld [vmem:[%s5 + $0x40] sm:$0x1]
      %v565 = vld [vmem:[%s5 + $0x48] sm:$0xff]
      %v566 = vld [vmem:[%s5 + $0x50] sm:$0xff]
      %v567 = vld [vmem:[%s5 + $0x58] sm:$0x1]
      %v568 = vld [vmem:[%s5 + $0x60] sm:$0xff]
      %v569 = vld [vmem:[%s5 + $0x68] sm:$0xff]
      %v570 = vld [vmem:[%s5 + $0x70] sm:$0x1]
      %v571 = vld [vmem:[%s5 + $0x78] sm:$0xff]
      %v572 = vld [vmem:[%s5 + $0x80] sm:$0xff]
      %v573 = vld [vmem:[%s5 + $0x88] sm:$0x1]
      %v574 = vld [vmem:[%s5 + $0x90] sm:$0xff]
      %v575 = vld [vmem:[%s5 + $0x98] sm:$0xff]
      %v576 = vld [vmem:[%s5 + $0xa0] sm:$0x1]
      %v577 = vld [vmem:[%s5 + $0xa8] sm:$0xff]
      %v578 = vld [vmem:[%s5 + $0xb0] sm:$0xff]
      %v579 = vld [vmem:[%s5 + $0xb8] sm:$0x1]
      %583 = vrot.lane.b32.xlu0 %v543, 120
      %v584 = vpop.permute.xlu0 %583
      %585 = vrot.lane.b32.xlu0 %v544, 120
      %v586 = vpop.permute.xlu0 %585
      %587 = vrot.lane.b32.xlu0 %v545, 120
      %v588 = vpop.permute.xlu0 %587
      %592 = vrot.lane.b32.xlu0 %v543, 112
      %v593 = vpop.permute.xlu0 %592
      %594 = vrot.lane.b32.xlu0 %v544, 112
      %v595 = vpop.permute.xlu0 %594
      %596 = vrot.lane.b32.xlu0 %v545, 112
      %v597 = vpop.permute.xlu0 %596
      %601 = vrot.lane.b32.xlu0 %v543, 104
      %v602 = vpop.permute.xlu0 %601
      %603 = vrot.lane.b32.xlu0 %v544, 104
      %v604 = vpop.permute.xlu0 %603
      %605 = vrot.lane.b32.xlu0 %v545, 104
      %v606 = vpop.permute.xlu0 %605
      %v610 = vcombine.low %v543, %v593
      %v611 = vcombine.high %v543, %v593
      %v613 = vunpack.c.l.s4 1983009808
      %v614 = vunpack.c.0.s8 %v613
      %v615 = vlaneseq
      %v616 = vshrl.u32 %v615, 7
      %v617 = vsub.s32 %v614, %v616
      %v618 = vrot.slane %v610, %v617
      %v620 = vunpack.c.l.s4 1983009808
      %v621 = vunpack.c.0.s8 %v620
      %v622 = vlaneseq
      %v623 = vshrl.u32 %v622, 7
      %v624 = vsub.s32 %v621, %v623
      %v625 = vrot.slane %v611, %v624
      %v626 = vcombine.low %v584, %v602
      %v627 = vcombine.high %v584, %v602
      %v629 = vunpack.c.l.s4 1983009808
      %v630 = vunpack.c.0.s8 %v629
      %v631 = vlaneseq
      %v632 = vshrl.u32 %v631, 7
      %v633 = vsub.s32 %v630, %v632
      %v634 = vrot.slane %v626, %v633
      %v636 = vunpack.c.l.s4 1983009808
      %v637 = vunpack.c.0.s8 %v636
      %v638 = vlaneseq
      %v639 = vshrl.u32 %v638, 7
      %v640 = vsub.s32 %v637, %v639
      %v641 = vrot.slane %v627, %v640
      %v642 = vcombine.low %v618, %v634
      %v643 = vcombine.high %v618, %v634
      %v645 = vunpack.c.l.s4 1934713408
      %v646 = vunpack.c.0.s8 %v645
      %v647 = vlaneseq
      %v648 = vshrl.u32 %v647, 7
      %v649 = vsub.s32 %v646, %v648
      %v650 = vrot.slane %v642, %v649
      %v652 = vunpack.c.l.s4 1934713408
      %v653 = vunpack.c.0.s8 %v652
      %v654 = vlaneseq
      %v655 = vshrl.u32 %v654, 7
      %v656 = vsub.s32 %v653, %v655
      %v657 = vrot.slane %v643, %v656
      %v658 = vcombine.low %v625, %v641
      %v659 = vcombine.high %v625, %v641
      %v661 = vunpack.c.l.s4 1934713408
      %v662 = vunpack.c.0.s8 %v661
      %v663 = vlaneseq
      %v664 = vshrl.u32 %v663, 7
      %v665 = vsub.s32 %v662, %v664
      %v666 = vrot.slane %v658, %v665
      %v668 = vunpack.c.l.s4 1934713408
      %v669 = vunpack.c.0.s8 %v668
      %v670 = vlaneseq
      %v671 = vshrl.u32 %v670, 7
      %v672 = vsub.s32 %v669, %v671
      %v673 = vrot.slane %v659, %v672
      %v674 = vcombine.high %v650, 0.0
      %v675 = vcombine.high %v657, 0.0
      %v676 = vcombine.high %v666, 0.0
      %v677 = vcombine.high %v673, 0.0
      %v678 = vcombine.low %v544, %v595
      %v679 = vcombine.high %v544, %v595
      %v681 = vunpack.c.l.s4 1983009808
      %v682 = vunpack.c.0.s8 %v681
      %v683 = vlaneseq
      %v684 = vshrl.u32 %v683, 7
      %v685 = vsub.s32 %v682, %v684
      %v686 = vrot.slane %v678, %v685
      %v688 = vunpack.c.l.s4 1983009808
      %v689 = vunpack.c.0.s8 %v688
      %v690 = vlaneseq
      %v691 = vshrl.u32 %v690, 7
      %v692 = vsub.s32 %v689, %v691
      %v693 = vrot.slane %v679, %v692
      %v694 = vcombine.low %v586, %v604
      %v695 = vcombine.high %v586, %v604
      %v697 = vunpack.c.l.s4 1983009808
      %v698 = vunpack.c.0.s8 %v697
      %v699 = vlaneseq
      %v700 = vshrl.u32 %v699, 7
      %v701 = vsub.s32 %v698, %v700
      %v702 = vrot.slane %v694, %v701
      %v704 = vunpack.c.l.s4 1983009808
      %v705 = vunpack.c.0.s8 %v704
      %v706 = vlaneseq
      %v707 = vshrl.u32 %v706, 7
      %v708 = vsub.s32 %v705, %v707
      %v709 = vrot.slane %v695, %v708
      %v710 = vcombine.low %v686, %v702
      %v711 = vcombine.high %v686, %v702
      %v713 = vunpack.c.l.s4 1934713408
      %v714 = vunpack.c.0.s8 %v713
      %v715 = vlaneseq
      %v716 = vshrl.u32 %v715, 7
      %v717 = vsub.s32 %v714, %v716
      %v718 = vrot.slane %v710, %v717
      %v720 = vunpack.c.l.s4 1934713408
      %v721 = vunpack.c.0.s8 %v720
      %v722 = vlaneseq
      %v723 = vshrl.u32 %v722, 7
      %v724 = vsub.s32 %v721, %v723
      %v725 = vrot.slane %v711, %v724
      %v726 = vcombine.low %v693, %v709
      %v727 = vcombine.high %v693, %v709
      %v729 = vunpack.c.l.s4 1934713408
      %v730 = vunpack.c.0.s8 %v729
      %v731 = vlaneseq
      %v732 = vshrl.u32 %v731, 7
      %v733 = vsub.s32 %v730, %v732
      %v734 = vrot.slane %v726, %v733
      %v736 = vunpack.c.l.s4 1934713408
      %v737 = vunpack.c.0.s8 %v736
      %v738 = vlaneseq
      %v739 = vshrl.u32 %v738, 7
      %v740 = vsub.s32 %v737, %v739
      %v741 = vrot.slane %v727, %v740
      %v742 = vcombine.high %v718, 0.0
      %v743 = vcombine.high %v725, 0.0
      %v744 = vcombine.high %v734, 0.0
      %v745 = vcombine.high %v741, 0.0
      %v746 = vcombine.low %v545, %v597
      %v748 = vunpack.c.l.s4 1983009808
      %v749 = vunpack.c.0.s8 %v748
      %v750 = vlaneseq
      %v751 = vshrl.u32 %v750, 7
      %v752 = vsub.s32 %v749, %v751
      %v753 = vrot.slane %v746, %v752
      %v754 = vcombine.low %v588, %v606
      %v756 = vunpack.c.l.s4 1983009808
      %v757 = vunpack.c.0.s8 %v756
      %v758 = vlaneseq
      %v759 = vshrl.u32 %v758, 7
      %v760 = vsub.s32 %v757, %v759
      %v761 = vrot.slane %v754, %v760
      %v762 = vcombine.low %v753, %v761
      %v763 = vcombine.low %v650, %v657
      %v765 = vunpack.c.l.s4 1983009808
      %v766 = vunpack.c.0.s8 %v765
      %v767 = vlaneseq
      %v768 = vshrl.u32 %v767, 7
      %v769 = vsub.s32 %v766, %v768
      %v770 = vrot.slane %v763, %v769
      %v771 = vcombine.low %v674, %v675
      %v773 = vunpack.c.l.s4 1983009808
      %v774 = vunpack.c.0.s8 %v773
      %v775 = vlaneseq
      %v776 = vshrl.u32 %v775, 7
      %v777 = vsub.s32 %v774, %v776
      %v778 = vrot.slane %v771, %v777
      %v779 = vcombine.low %v666, %v673
      %v781 = vunpack.c.l.s4 1983009808
      %v782 = vunpack.c.0.s8 %v781
      %v783 = vlaneseq
      %v784 = vshrl.u32 %v783, 7
      %v785 = vsub.s32 %v782, %v784
      %v786 = vrot.slane %v779, %v785
      %v787 = vcombine.low %v676, %v677
      %v789 = vunpack.c.l.s4 1983009808
      %v790 = vunpack.c.0.s8 %v789
      %v791 = vlaneseq
      %v792 = vshrl.u32 %v791, 7
      %v793 = vsub.s32 %v790, %v792
      %v794 = vrot.slane %v787, %v793
      %v795 = vcombine.low %v770, %v778
      %v796 = vcombine.high %v770, %v778
      %v798 = vunpack.c.l.s4 1934713408
      %v799 = vunpack.c.0.s8 %v798
      %v800 = vlaneseq
      %v801 = vshrl.u32 %v800, 7
      %v802 = vsub.s32 %v799, %v801
      %v803 = vrot.slane %v795, %v802
      %v805 = vunpack.c.l.s4 1934713408
      %v806 = vunpack.c.0.s8 %v805
      %v807 = vlaneseq
      %v808 = vshrl.u32 %v807, 7
      %v809 = vsub.s32 %v806, %v808
      %v810 = vrot.slane %v796, %v809
      %v811 = vcombine.low %v786, %v794
      %v812 = vcombine.high %v786, %v794
      %v814 = vunpack.c.l.s4 1934713408
      %v815 = vunpack.c.0.s8 %v814
      %v816 = vlaneseq
      %v817 = vshrl.u32 %v816, 7
      %v818 = vsub.s32 %v815, %v817
      %v819 = vrot.slane %v811, %v818
      %v821 = vunpack.c.l.s4 1934713408
      %v822 = vunpack.c.0.s8 %v821
      %v823 = vlaneseq
      %v824 = vshrl.u32 %v823, 7
      %v825 = vsub.s32 %v822, %v824
      %v826 = vrot.slane %v812, %v825
      %v827 = vcombine.low %v803, %v819
      %v828 = vcombine.high %v803, %v819
      %v829 = vcombine.low %v810, %v826
      %v830 = vcombine.high %v810, %v826
      %v831 = vcombine.low %v718, %v725
      %v833 = vunpack.c.l.s4 1983009808
      %v834 = vunpack.c.0.s8 %v833
      %v835 = vlaneseq
      %v836 = vshrl.u32 %v835, 7
      %v837 = vsub.s32 %v834, %v836
      %v838 = vrot.slane %v831, %v837
      %v839 = vcombine.low %v742, %v743
      %v841 = vunpack.c.l.s4 1983009808
      %v842 = vunpack.c.0.s8 %v841
      %v843 = vlaneseq
      %v844 = vshrl.u32 %v843, 7
      %v845 = vsub.s32 %v842, %v844
      %v846 = vrot.slane %v839, %v845
      %v847 = vcombine.low %v734, %v741
      %v849 = vunpack.c.l.s4 1983009808
      %v850 = vunpack.c.0.s8 %v849
      %v851 = vlaneseq
      %v852 = vshrl.u32 %v851, 7
      %v853 = vsub.s32 %v850, %v852
      %v854 = vrot.slane %v847, %v853
      %v855 = vcombine.low %v744, %v745
      %v857 = vunpack.c.l.s4 1983009808
      %v858 = vunpack.c.0.s8 %v857
      %v859 = vlaneseq
      %v860 = vshrl.u32 %v859, 7
      %v861 = vsub.s32 %v858, %v860
      %v862 = vrot.slane %v855, %v861
      %v863 = vcombine.low %v838, %v846
      %v864 = vcombine.high %v838, %v846
      %v866 = vunpack.c.l.s4 1934713408
      %v867 = vunpack.c.0.s8 %v866
      %v868 = vlaneseq
      %v869 = vshrl.u32 %v868, 7
      %v870 = vsub.s32 %v867, %v869
      %v871 = vrot.slane %v863, %v870
      %v873 = vunpack.c.l.s4 1934713408
      %v874 = vunpack.c.0.s8 %v873
      %v875 = vlaneseq
      %v876 = vshrl.u32 %v875, 7
      %v877 = vsub.s32 %v874, %v876
      %v878 = vrot.slane %v864, %v877
      %v879 = vcombine.low %v854, %v862
      %v880 = vcombine.high %v854, %v862
      %v882 = vunpack.c.l.s4 1934713408
      %v883 = vunpack.c.0.s8 %v882
      %v884 = vlaneseq
      %v885 = vshrl.u32 %v884, 7
      %v886 = vsub.s32 %v883, %v885
      %v887 = vrot.slane %v879, %v886
      %v889 = vunpack.c.l.s4 1934713408
      %v890 = vunpack.c.0.s8 %v889
      %v891 = vlaneseq
      %v892 = vshrl.u32 %v891, 7
      %v893 = vsub.s32 %v890, %v892
      %v894 = vrot.slane %v880, %v893
      %v895 = vcombine.low %v871, %v887
      %v896 = vcombine.high %v871, %v887
      %v897 = vcombine.low %v878, %v894
      %v898 = vcombine.high %v878, %v894
      %v900 = vunpack.c.l.s4 1934713408
      %v901 = vunpack.c.0.s8 %v900
      %v902 = vlaneseq
      %v903 = vshrl.u32 %v902, 7
      %v904 = vsub.s32 %v901, %v903
      %v905 = vrot.slane %v762, %v904
      %v907 = vunpack.c.l.s4 1983009808
      %v908 = vunpack.c.0.s8 %v907
      %v909 = vlaneseq
      %v910 = vshrl.u32 %v909, 7
      %v911 = vsub.s32 %v908, %v910
      %v912 = vrot.slane %v905, %v911
      %v913 = vcombine.high %v912, 0.0
      %v915 = vunpack.c.l.s4 1934713408
      %v916 = vunpack.c.0.s8 %v915
      %v917 = vlaneseq
      %v918 = vshrl.u32 %v917, 7
      %v919 = vsub.s32 %v916, %v918
      %v920 = vrot.slane %v912, %v919
      %v922 = vunpack.c.l.s4 1934713408
      %v923 = vunpack.c.0.s8 %v922
      %v924 = vlaneseq
      %v925 = vshrl.u32 %v924, 7
      %v926 = vsub.s32 %v923, %v925
      %v927 = vrot.slane %v913, %v926
      %v928 = vcombine.high %v920, 0.0
      %v929 = vcombine.high %v927, 0.0
      %v930 = vpack.c.bf16 %v895, %v827
      %v931 = vpack.c.bf16 %v920, %v920
      %v932 = vpack.c.bf16 %v896, %v828
      %v933 = vpack.c.bf16 %v928, %v928
      %v934 = vpack.c.bf16 %v897, %v829
      %v935 = vpack.c.bf16 %v927, %v927
      %v936 = vpack.c.bf16 %v898, %v830
      %v937 = vpack.c.bf16 %v929, %v929
      %941 = vrot.lane.b32.xlu0 %v450, 120
      %v942 = vpop.permute.xlu0 %941
      %943 = vrot.lane.b32.xlu0 %v453, 120
      %v944 = vpop.permute.xlu0 %943
      %945 = vrot.lane.b32.xlu0 %v458, 120
      %v946 = vpop.permute.xlu0 %945
      %950 = vrot.lane.b32.xlu0 %v450, 112
      %v951 = vpop.permute.xlu0 %950
      %952 = vrot.lane.b32.xlu0 %v453, 112
      %v953 = vpop.permute.xlu0 %952
      %954 = vrot.lane.b32.xlu0 %v458, 112
      %v955 = vpop.permute.xlu0 %954
      %959 = vrot.lane.b32.xlu0 %v450, 104
      %v960 = vpop.permute.xlu0 %959
      %961 = vrot.lane.b32.xlu0 %v453, 104
      %v962 = vpop.permute.xlu0 %961
      %963 = vrot.lane.b32.xlu0 %v458, 104
      %v964 = vpop.permute.xlu0 %963
      %v968 = vcombine.low %v450, %v951
      %v969 = vcombine.high %v450, %v951
      %v971 = vunpack.c.l.s4 1983009808
      %v972 = vunpack.c.0.s8 %v971
      %v973 = vlaneseq
      %v974 = vshrl.u32 %v973, 7
      %v975 = vsub.s32 %v972, %v974
      %v976 = vrot.slane %v968, %v975
      %v978 = vunpack.c.l.s4 1983009808
      %v979 = vunpack.c.0.s8 %v978
      %v980 = vlaneseq
      %v981 = vshrl.u32 %v980, 7
      %v982 = vsub.s32 %v979, %v981
      %v983 = vrot.slane %v969, %v982
      %v984 = vcombine.low %v942, %v960
      %v985 = vcombine.high %v942, %v960
      %v987 = vunpack.c.l.s4 1983009808
      %v988 = vunpack.c.0.s8 %v987
      %v989 = vlaneseq
      %v990 = vshrl.u32 %v989, 7
      %v991 = vsub.s32 %v988, %v990
      %v992 = vrot.slane %v984, %v991
      %v994 = vunpack.c.l.s4 1983009808
      %v995 = vunpack.c.0.s8 %v994
      %v996 = vlaneseq
      %v997 = vshrl.u32 %v996, 7
      %v998 = vsub.s32 %v995, %v997
      %v999 = vrot.slane %v985, %v998
      %v1000 = vcombine.low %v976, %v992
      %v1001 = vcombine.high %v976, %v992
      %v1003 = vunpack.c.l.s4 1934713408
      %v1004 = vunpack.c.0.s8 %v1003
      %v1005 = vlaneseq
      %v1006 = vshrl.u32 %v1005, 7
      %v1007 = vsub.s32 %v1004, %v1006
      %v1008 = vrot.slane %v1000, %v1007
      %v1010 = vunpack.c.l.s4 1934713408
      %v1011 = vunpack.c.0.s8 %v1010
      %v1012 = vlaneseq
      %v1013 = vshrl.u32 %v1012, 7
      %v1014 = vsub.s32 %v1011, %v1013
      %v1015 = vrot.slane %v1001, %v1014
      %v1016 = vcombine.low %v983, %v999
      %v1017 = vcombine.high %v983, %v999
      %v1019 = vunpack.c.l.s4 1934713408
      %v1020 = vunpack.c.0.s8 %v1019
      %v1021 = vlaneseq
      %v1022 = vshrl.u32 %v1021, 7
      %v1023 = vsub.s32 %v1020, %v1022
      %v1024 = vrot.slane %v1016, %v1023
      %v1026 = vunpack.c.l.s4 1934713408
      %v1027 = vunpack.c.0.s8 %v1026
      %v1028 = vlaneseq
      %v1029 = vshrl.u32 %v1028, 7
      %v1030 = vsub.s32 %v1027, %v1029
      %v1031 = vrot.slane %v1017, %v1030
      %v1032 = vcombine.high %v1008, 0.0
      %v1033 = vcombine.high %v1015, 0.0
      %v1034 = vcombine.high %v1024, 0.0
      %v1035 = vcombine.high %v1031, 0.0
      %v1036 = vcombine.low %v453, %v953
      %v1037 = vcombine.high %v453, %v953
      %v1039 = vunpack.c.l.s4 1983009808
      %v1040 = vunpack.c.0.s8 %v1039
      %v1041 = vlaneseq
      %v1042 = vshrl.u32 %v1041, 7
      %v1043 = vsub.s32 %v1040, %v1042
      %v1044 = vrot.slane %v1036, %v1043
      %v1046 = vunpack.c.l.s4 1983009808
      %v1047 = vunpack.c.0.s8 %v1046
      %v1048 = vlaneseq
      %v1049 = vshrl.u32 %v1048, 7
      %v1050 = vsub.s32 %v1047, %v1049
      %v1051 = vrot.slane %v1037, %v1050
      %v1052 = vcombine.low %v944, %v962
      %v1053 = vcombine.high %v944, %v962
      %v1055 = vunpack.c.l.s4 1983009808
      %v1056 = vunpack.c.0.s8 %v1055
      %v1057 = vlaneseq
      %v1058 = vshrl.u32 %v1057, 7
      %v1059 = vsub.s32 %v1056, %v1058
      %v1060 = vrot.slane %v1052, %v1059
      %v1062 = vunpack.c.l.s4 1983009808
      %v1063 = vunpack.c.0.s8 %v1062
      %v1064 = vlaneseq
      %v1065 = vshrl.u32 %v1064, 7
      %v1066 = vsub.s32 %v1063, %v1065
      %v1067 = vrot.slane %v1053, %v1066
      %v1068 = vcombine.low %v1044, %v1060
      %v1069 = vcombine.high %v1044, %v1060
      %v1071 = vunpack.c.l.s4 1934713408
      %v1072 = vunpack.c.0.s8 %v1071
      %v1073 = vlaneseq
      %v1074 = vshrl.u32 %v1073, 7
      %v1075 = vsub.s32 %v1072, %v1074
      %v1076 = vrot.slane %v1068, %v1075
      %v1078 = vunpack.c.l.s4 1934713408
      %v1079 = vunpack.c.0.s8 %v1078
      %v1080 = vlaneseq
      %v1081 = vshrl.u32 %v1080, 7
      %v1082 = vsub.s32 %v1079, %v1081
      %v1083 = vrot.slane %v1069, %v1082
      %v1084 = vcombine.low %v1051, %v1067
      %v1085 = vcombine.high %v1051, %v1067
      %v1087 = vunpack.c.l.s4 1934713408
      %v1088 = vunpack.c.0.s8 %v1087
      %v1089 = vlaneseq
      %v1090 = vshrl.u32 %v1089, 7
      %v1091 = vsub.s32 %v1088, %v1090
      %v1092 = vrot.slane %v1084, %v1091
      %v1094 = vunpack.c.l.s4 1934713408
      %v1095 = vunpack.c.0.s8 %v1094
      %v1096 = vlaneseq
      %v1097 = vshrl.u32 %v1096, 7
      %v1098 = vsub.s32 %v1095, %v1097
      %v1099 = vrot.slane %v1085, %v1098
      %v1100 = vcombine.high %v1076, 0.0
      %v1101 = vcombine.high %v1083, 0.0
      %v1102 = vcombine.high %v1092, 0.0
      %v1103 = vcombine.high %v1099, 0.0
      %v1104 = vcombine.low %v458, %v955
      %v1106 = vunpack.c.l.s4 1983009808
      %v1107 = vunpack.c.0.s8 %v1106
      %v1108 = vlaneseq
      %v1109 = vshrl.u32 %v1108, 7
      %v1110 = vsub.s32 %v1107, %v1109
      %v1111 = vrot.slane %v1104, %v1110
      %v1112 = vcombine.low %v946, %v964
      %v1114 = vunpack.c.l.s4 1983009808
      %v1115 = vunpack.c.0.s8 %v1114
      %v1116 = vlaneseq
      %v1117 = vshrl.u32 %v1116, 7
      %v1118 = vsub.s32 %v1115, %v1117
      %v1119 = vrot.slane %v1112, %v1118
      %v1120 = vcombine.low %v1111, %v1119
      %v1121 = vcombine.low %v1008, %v1015
      %v1123 = vunpack.c.l.s4 1983009808
      %v1124 = vunpack.c.0.s8 %v1123
      %v1125 = vlaneseq
      %v1126 = vshrl.u32 %v1125, 7
      %v1127 = vsub.s32 %v1124, %v1126
      %v1128 = vrot.slane %v1121, %v1127
      %v1129 = vcombine.low %v1032, %v1033
      %v1131 = vunpack.c.l.s4 1983009808
      %v1132 = vunpack.c.0.s8 %v1131
      %v1133 = vlaneseq
      %v1134 = vshrl.u32 %v1133, 7
      %v1135 = vsub.s32 %v1132, %v1134
      %v1136 = vrot.slane %v1129, %v1135
      %v1137 = vcombine.low %v1024, %v1031
      %v1139 = vunpack.c.l.s4 1983009808
      %v1140 = vunpack.c.0.s8 %v1139
      %v1141 = vlaneseq
      %v1142 = vshrl.u32 %v1141, 7
      %v1143 = vsub.s32 %v1140, %v1142
      %v1144 = vrot.slane %v1137, %v1143
      %v1145 = vcombine.low %v1034, %v1035
      %v1147 = vunpack.c.l.s4 1983009808
      %v1148 = vunpack.c.0.s8 %v1147
      %v1149 = vlaneseq
      %v1150 = vshrl.u32 %v1149, 7
      %v1151 = vsub.s32 %v1148, %v1150
      %v1152 = vrot.slane %v1145, %v1151
      %v1153 = vcombine.low %v1128, %v1136
      %v1154 = vcombine.high %v1128, %v1136
      %v1156 = vunpack.c.l.s4 1934713408
      %v1157 = vunpack.c.0.s8 %v1156
      %v1158 = vlaneseq
      %v1159 = vshrl.u32 %v1158, 7
      %v1160 = vsub.s32 %v1157, %v1159
      %v1161 = vrot.slane %v1153, %v1160
      %v1163 = vunpack.c.l.s4 1934713408
      %v1164 = vunpack.c.0.s8 %v1163
      %v1165 = vlaneseq
      %v1166 = vshrl.u32 %v1165, 7
      %v1167 = vsub.s32 %v1164, %v1166
      %v1168 = vrot.slane %v1154, %v1167
      %v1169 = vcombine.low %v1144, %v1152
      %v1170 = vcombine.high %v1144, %v1152
      %v1172 = vunpack.c.l.s4 1934713408
      %v1173 = vunpack.c.0.s8 %v1172
      %v1174 = vlaneseq
      %v1175 = vshrl.u32 %v1174, 7
      %v1176 = vsub.s32 %v1173, %v1175
      %v1177 = vrot.slane %v1169, %v1176
      %v1179 = vunpack.c.l.s4 1934713408
      %v1180 = vunpack.c.0.s8 %v1179
      %v1181 = vlaneseq
      %v1182 = vshrl.u32 %v1181, 7
      %v1183 = vsub.s32 %v1180, %v1182
      %v1184 = vrot.slane %v1170, %v1183
      %v1185 = vcombine.low %v1161, %v1177
      %v1186 = vcombine.high %v1161, %v1177
      %v1187 = vcombine.low %v1168, %v1184
      %v1188 = vcombine.high %v1168, %v1184
      %v1189 = vcombine.low %v1076, %v1083
      %v1191 = vunpack.c.l.s4 1983009808
      %v1192 = vunpack.c.0.s8 %v1191
      %v1193 = vlaneseq
      %v1194 = vshrl.u32 %v1193, 7
      %v1195 = vsub.s32 %v1192, %v1194
      %v1196 = vrot.slane %v1189, %v1195
      %v1197 = vcombine.low %v1100, %v1101
      %v1199 = vunpack.c.l.s4 1983009808
      %v1200 = vunpack.c.0.s8 %v1199
      %v1201 = vlaneseq
      %v1202 = vshrl.u32 %v1201, 7
      %v1203 = vsub.s32 %v1200, %v1202
      %v1204 = vrot.slane %v1197, %v1203
      %v1205 = vcombine.low %v1092, %v1099
      %v1207 = vunpack.c.l.s4 1983009808
      %v1208 = vunpack.c.0.s8 %v1207
      %v1209 = vlaneseq
      %v1210 = vshrl.u32 %v1209, 7
      %v1211 = vsub.s32 %v1208, %v1210
      %v1212 = vrot.slane %v1205, %v1211
      %v1213 = vcombine.low %v1102, %v1103
      %v1215 = vunpack.c.l.s4 1983009808
      %v1216 = vunpack.c.0.s8 %v1215
      %v1217 = vlaneseq
      %v1218 = vshrl.u32 %v1217, 7
      %v1219 = vsub.s32 %v1216, %v1218
      %v1220 = vrot.slane %v1213, %v1219
      %v1221 = vcombine.low %v1196, %v1204
      %v1222 = vcombine.high %v1196, %v1204
      %v1224 = vunpack.c.l.s4 1934713408
      %v1225 = vunpack.c.0.s8 %v1224
      %v1226 = vlaneseq
      %v1227 = vshrl.u32 %v1226, 7
      %v1228 = vsub.s32 %v1225, %v1227
      %v1229 = vrot.slane %v1221, %v1228
      %v1231 = vunpack.c.l.s4 1934713408
      %v1232 = vunpack.c.0.s8 %v1231
      %v1233 = vlaneseq
      %v1234 = vshrl.u32 %v1233, 7
      %v1235 = vsub.s32 %v1232, %v1234
      %v1236 = vrot.slane %v1222, %v1235
      %v1237 = vcombine.low %v1212, %v1220
      %v1238 = vcombine.high %v1212, %v1220
      %v1240 = vunpack.c.l.s4 1934713408
      %v1241 = vunpack.c.0.s8 %v1240
      %v1242 = vlaneseq
      %v1243 = vshrl.u32 %v1242, 7
      %v1244 = vsub.s32 %v1241, %v1243
      %v1245 = vrot.slane %v1237, %v1244
      %v1247 = vunpack.c.l.s4 1934713408
      %v1248 = vunpack.c.0.s8 %v1247
      %v1249 = vlaneseq
      %v1250 = vshrl.u32 %v1249, 7
      %v1251 = vsub.s32 %v1248, %v1250
      %v1252 = vrot.slane %v1238, %v1251
      %v1253 = vcombine.low %v1229, %v1245
      %v1254 = vcombine.high %v1229, %v1245
      %v1255 = vcombine.low %v1236, %v1252
      %v1256 = vcombine.high %v1236, %v1252
      %v1258 = vunpack.c.l.s4 1934713408
      %v1259 = vunpack.c.0.s8 %v1258
      %v1260 = vlaneseq
      %v1261 = vshrl.u32 %v1260, 7
      %v1262 = vsub.s32 %v1259, %v1261
      %v1263 = vrot.slane %v1120, %v1262
      %v1265 = vunpack.c.l.s4 1983009808
      %v1266 = vunpack.c.0.s8 %v1265
      %v1267 = vlaneseq
      %v1268 = vshrl.u32 %v1267, 7
      %v1269 = vsub.s32 %v1266, %v1268
      %v1270 = vrot.slane %v1263, %v1269
      %v1271 = vcombine.high %v1270, 0.0
      %v1273 = vunpack.c.l.s4 1934713408
      %v1274 = vunpack.c.0.s8 %v1273
      %v1275 = vlaneseq
      %v1276 = vshrl.u32 %v1275, 7
      %v1277 = vsub.s32 %v1274, %v1276
      %v1278 = vrot.slane %v1270, %v1277
      %v1280 = vunpack.c.l.s4 1934713408
      %v1281 = vunpack.c.0.s8 %v1280
      %v1282 = vlaneseq
      %v1283 = vshrl.u32 %v1282, 7
      %v1284 = vsub.s32 %v1281, %v1283
      %v1285 = vrot.slane %v1271, %v1284
      %v1286 = vcombine.high %v1278, 0.0
      %v1287 = vcombine.high %v1285, 0.0
      %v1288 = vpack.c.bf16 %v1253, %v1185
      %v1289 = vpack.c.bf16 %v1278, %v1278
      %v1290 = vpack.c.bf16 %v1254, %v1186
      %v1291 = vpack.c.bf16 %v1286, %v1286
      %v1292 = vpack.c.bf16 %v1255, %v1187
      %v1293 = vpack.c.bf16 %v1285, %v1285
      %v1294 = vpack.c.bf16 %v1256, %v1188
      %v1295 = vpack.c.bf16 %v1287, %v1287
      %1299 = vrot.lane.b32.xlu0 %v523, 120
      %v1300 = vpop.permute.xlu0 %1299
      %1301 = vrot.lane.b32.xlu0 %v526, 120
      %v1302 = vpop.permute.xlu0 %1301
      %1303 = vrot.lane.b32.xlu0 %v531, 120
      %v1304 = vpop.permute.xlu0 %1303
      %1308 = vrot.lane.b32.xlu0 %v523, 112
      %v1309 = vpop.permute.xlu0 %1308
      %1310 = vrot.lane.b32.xlu0 %v526, 112
      %v1311 = vpop.permute.xlu0 %1310
      %1312 = vrot.lane.b32.xlu0 %v531, 112
      %v1313 = vpop.permute.xlu0 %1312
      %1317 = vrot.lane.b32.xlu0 %v523, 104
      %v1318 = vpop.permute.xlu0 %1317
      %1319 = vrot.lane.b32.xlu0 %v526, 104
      %v1320 = vpop.permute.xlu0 %1319
      %1321 = vrot.lane.b32.xlu0 %v531, 104
      %v1322 = vpop.permute.xlu0 %1321
      %v1326 = vcombine.low %v523, %v1309
      %v1327 = vcombine.high %v523, %v1309
      %v1329 = vunpack.c.l.s4 1983009808
      %v1330 = vunpack.c.0.s8 %v1329
      %v1331 = vlaneseq
      %v1332 = vshrl.u32 %v1331, 7
      %v1333 = vsub.s32 %v1330, %v1332
      %v1334 = vrot.slane %v1326, %v1333
      %v1336 = vunpack.c.l.s4 1983009808
      %v1337 = vunpack.c.0.s8 %v1336
      %v1338 = vlaneseq
      %v1339 = vshrl.u32 %v1338, 7
      %v1340 = vsub.s32 %v1337, %v1339
      %v1341 = vrot.slane %v1327, %v1340
      %v1342 = vcombine.low %v1300, %v1318
      %v1343 = vcombine.high %v1300, %v1318
      %v1345 = vunpack.c.l.s4 1983009808
      %v1346 = vunpack.c.0.s8 %v1345
      %v1347 = vlaneseq
      %v1348 = vshrl.u32 %v1347, 7
      %v1349 = vsub.s32 %v1346, %v1348
      %v1350 = vrot.slane %v1342, %v1349
      %v1352 = vunpack.c.l.s4 1983009808
      %v1353 = vunpack.c.0.s8 %v1352
      %v1354 = vlaneseq
      %v1355 = vshrl.u32 %v1354, 7
      %v1356 = vsub.s32 %v1353, %v1355
      %v1357 = vrot.slane %v1343, %v1356
      %v1358 = vcombine.low %v1334, %v1350
      %v1359 = vcombine.high %v1334, %v1350
      %v1361 = vunpack.c.l.s4 1934713408
      %v1362 = vunpack.c.0.s8 %v1361
      %v1363 = vlaneseq
      %v1364 = vshrl.u32 %v1363, 7
      %v1365 = vsub.s32 %v1362, %v1364
      %v1366 = vrot.slane %v1358, %v1365
      %v1368 = vunpack.c.l.s4 1934713408
      %v1369 = vunpack.c.0.s8 %v1368
      %v1370 = vlaneseq
      %v1371 = vshrl.u32 %v1370, 7
      %v1372 = vsub.s32 %v1369, %v1371
      %v1373 = vrot.slane %v1359, %v1372
      %v1374 = vcombine.low %v1341, %v1357
      %v1375 = vcombine.high %v1341, %v1357
      %v1377 = vunpack.c.l.s4 1934713408
      %v1378 = vunpack.c.0.s8 %v1377
      %v1379 = vlaneseq
      %v1380 = vshrl.u32 %v1379, 7
      %v1381 = vsub.s32 %v1378, %v1380
      %v1382 = vrot.slane %v1374, %v1381
      %v1384 = vunpack.c.l.s4 1934713408
      %v1385 = vunpack.c.0.s8 %v1384
      %v1386 = vlaneseq
      %v1387 = vshrl.u32 %v1386, 7
      %v1388 = vsub.s32 %v1385, %v1387
      %v1389 = vrot.slane %v1375, %v1388
      %v1390 = vcombine.high %v1366, 0.0
      %v1391 = vcombine.high %v1373, 0.0
      %v1392 = vcombine.high %v1382, 0.0
      %v1393 = vcombine.high %v1389, 0.0
      %v1394 = vcombine.low %v526, %v1311
      %v1395 = vcombine.high %v526, %v1311
      %v1397 = vunpack.c.l.s4 1983009808
      %v1398 = vunpack.c.0.s8 %v1397
      %v1399 = vlaneseq
      %v1400 = vshrl.u32 %v1399, 7
      %v1401 = vsub.s32 %v1398, %v1400
      %v1402 = vrot.slane %v1394, %v1401
      %v1404 = vunpack.c.l.s4 1983009808
      %v1405 = vunpack.c.0.s8 %v1404
      %v1406 = vlaneseq
      %v1407 = vshrl.u32 %v1406, 7
      %v1408 = vsub.s32 %v1405, %v1407
      %v1409 = vrot.slane %v1395, %v1408
      %v1410 = vcombine.low %v1302, %v1320
      %v1411 = vcombine.high %v1302, %v1320
      %v1413 = vunpack.c.l.s4 1983009808
      %v1414 = vunpack.c.0.s8 %v1413
      %v1415 = vlaneseq
      %v1416 = vshrl.u32 %v1415, 7
      %v1417 = vsub.s32 %v1414, %v1416
      %v1418 = vrot.slane %v1410, %v1417
      %v1420 = vunpack.c.l.s4 1983009808
      %v1421 = vunpack.c.0.s8 %v1420
      %v1422 = vlaneseq
      %v1423 = vshrl.u32 %v1422, 7
      %v1424 = vsub.s32 %v1421, %v1423
      %v1425 = vrot.slane %v1411, %v1424
      %v1426 = vcombine.low %v1402, %v1418
      %v1427 = vcombine.high %v1402, %v1418
      %v1429 = vunpack.c.l.s4 1934713408
      %v1430 = vunpack.c.0.s8 %v1429
      %v1431 = vlaneseq
      %v1432 = vshrl.u32 %v1431, 7
      %v1433 = vsub.s32 %v1430, %v1432
      %v1434 = vrot.slane %v1426, %v1433
      %v1436 = vunpack.c.l.s4 1934713408
      %v1437 = vunpack.c.0.s8 %v1436
      %v1438 = vlaneseq
      %v1439 = vshrl.u32 %v1438, 7
      %v1440 = vsub.s32 %v1437, %v1439
      %v1441 = vrot.slane %v1427, %v1440
      %v1442 = vcombine.low %v1409, %v1425
      %v1443 = vcombine.high %v1409, %v1425
      %v1445 = vunpack.c.l.s4 1934713408
      %v1446 = vunpack.c.0.s8 %v1445
      %v1447 = vlaneseq
      %v1448 = vshrl.u32 %v1447, 7
      %v1449 = vsub.s32 %v1446, %v1448
      %v1450 = vrot.slane %v1442, %v1449
      %v1452 = vunpack.c.l.s4 1934713408
      %v1453 = vunpack.c.0.s8 %v1452
      %v1454 = vlaneseq
      %v1455 = vshrl.u32 %v1454, 7
      %v1456 = vsub.s32 %v1453, %v1455
      %v1457 = vrot.slane %v1443, %v1456
      %v1458 = vcombine.high %v1434, 0.0
      %v1459 = vcombine.high %v1441, 0.0
      %v1460 = vcombine.high %v1450, 0.0
      %v1461 = vcombine.high %v1457, 0.0
      %v1462 = vcombine.low %v531, %v1313
      %v1464 = vunpack.c.l.s4 1983009808
      %v1465 = vunpack.c.0.s8 %v1464
      %v1466 = vlaneseq
      %v1467 = vshrl.u32 %v1466, 7
      %v1468 = vsub.s32 %v1465, %v1467
      %v1469 = vrot.slane %v1462, %v1468
      %v1470 = vcombine.low %v1304, %v1322
      %v1472 = vunpack.c.l.s4 1983009808
      %v1473 = vunpack.c.0.s8 %v1472
      %v1474 = vlaneseq
      %v1475 = vshrl.u32 %v1474, 7
      %v1476 = vsub.s32 %v1473, %v1475
      %v1477 = vrot.slane %v1470, %v1476
      %v1478 = vcombine.low %v1469, %v1477
      %v1479 = vcombine.low %v1366, %v1373
      %v1481 = vunpack.c.l.s4 1983009808
      %v1482 = vunpack.c.0.s8 %v1481
      %v1483 = vlaneseq
      %v1484 = vshrl.u32 %v1483, 7
      %v1485 = vsub.s32 %v1482, %v1484
      %v1486 = vrot.slane %v1479, %v1485
      %v1487 = vcombine.low %v1390, %v1391
      %v1489 = vunpack.c.l.s4 1983009808
      %v1490 = vunpack.c.0.s8 %v1489
      %v1491 = vlaneseq
      %v1492 = vshrl.u32 %v1491, 7
      %v1493 = vsub.s32 %v1490, %v1492
      %v1494 = vrot.slane %v1487, %v1493
      %v1495 = vcombine.low %v1382, %v1389
      %v1497 = vunpack.c.l.s4 1983009808
      %v1498 = vunpack.c.0.s8 %v1497
      %v1499 = vlaneseq
      %v1500 = vshrl.u32 %v1499, 7
      %v1501 = vsub.s32 %v1498, %v1500
      %v1502 = vrot.slane %v1495, %v1501
      %v1503 = vcombine.low %v1392, %v1393
      %v1505 = vunpack.c.l.s4 1983009808
      %v1506 = vunpack.c.0.s8 %v1505
      %v1507 = vlaneseq
      %v1508 = vshrl.u32 %v1507, 7
      %v1509 = vsub.s32 %v1506, %v1508
      %v1510 = vrot.slane %v1503, %v1509
      %v1511 = vcombine.low %v1486, %v1494
      %v1512 = vcombine.high %v1486, %v1494
      %v1514 = vunpack.c.l.s4 1934713408
      %v1515 = vunpack.c.0.s8 %v1514
      %v1516 = vlaneseq
      %v1517 = vshrl.u32 %v1516, 7
      %v1518 = vsub.s32 %v1515, %v1517
      %v1519 = vrot.slane %v1511, %v1518
      %v1521 = vunpack.c.l.s4 1934713408
      %v1522 = vunpack.c.0.s8 %v1521
      %v1523 = vlaneseq
      %v1524 = vshrl.u32 %v1523, 7
      %v1525 = vsub.s32 %v1522, %v1524
      %v1526 = vrot.slane %v1512, %v1525
      %v1527 = vcombine.low %v1502, %v1510
      %v1528 = vcombine.high %v1502, %v1510
      %v1530 = vunpack.c.l.s4 1934713408
      %v1531 = vunpack.c.0.s8 %v1530
      %v1532 = vlaneseq
      %v1533 = vshrl.u32 %v1532, 7
      %v1534 = vsub.s32 %v1531, %v1533
      %v1535 = vrot.slane %v1527, %v1534
      %v1537 = vunpack.c.l.s4 1934713408
      %v1538 = vunpack.c.0.s8 %v1537
      %v1539 = vlaneseq
      %v1540 = vshrl.u32 %v1539, 7
      %v1541 = vsub.s32 %v1538, %v1540
      %v1542 = vrot.slane %v1528, %v1541
      %v1543 = vcombine.low %v1519, %v1535
      %v1544 = vcombine.high %v1519, %v1535
      %v1545 = vcombine.low %v1526, %v1542
      %v1546 = vcombine.high %v1526, %v1542
      %v1547 = vcombine.low %v1434, %v1441
      %v1549 = vunpack.c.l.s4 1983009808
      %v1550 = vunpack.c.0.s8 %v1549
      %v1551 = vlaneseq
      %v1552 = vshrl.u32 %v1551, 7
      %v1553 = vsub.s32 %v1550, %v1552
      %v1554 = vrot.slane %v1547, %v1553
      %v1555 = vcombine.low %v1458, %v1459
      %v1557 = vunpack.c.l.s4 1983009808
      %v1558 = vunpack.c.0.s8 %v1557
      %v1559 = vlaneseq
      %v1560 = vshrl.u32 %v1559, 7
      %v1561 = vsub.s32 %v1558, %v1560
      %v1562 = vrot.slane %v1555, %v1561
      %v1563 = vcombine.low %v1450, %v1457
      %v1565 = vunpack.c.l.s4 1983009808
      %v1566 = vunpack.c.0.s8 %v1565
      %v1567 = vlaneseq
      %v1568 = vshrl.u32 %v1567, 7
      %v1569 = vsub.s32 %v1566, %v1568
      %v1570 = vrot.slane %v1563, %v1569
      %v1571 = vcombine.low %v1460, %v1461
      %v1573 = vunpack.c.l.s4 1983009808
      %v1574 = vunpack.c.0.s8 %v1573
      %v1575 = vlaneseq
      %v1576 = vshrl.u32 %v1575, 7
      %v1577 = vsub.s32 %v1574, %v1576
      %v1578 = vrot.slane %v1571, %v1577
      %v1579 = vcombine.low %v1554, %v1562
      %v1580 = vcombine.high %v1554, %v1562
      %v1582 = vunpack.c.l.s4 1934713408
      %v1583 = vunpack.c.0.s8 %v1582
      %v1584 = vlaneseq
      %v1585 = vshrl.u32 %v1584, 7
      %v1586 = vsub.s32 %v1583, %v1585
      %v1587 = vrot.slane %v1579, %v1586
      %v1589 = vunpack.c.l.s4 1934713408
      %v1590 = vunpack.c.0.s8 %v1589
      %v1591 = vlaneseq
      %v1592 = vshrl.u32 %v1591, 7
      %v1593 = vsub.s32 %v1590, %v1592
      %v1594 = vrot.slane %v1580, %v1593
      %v1595 = vcombine.low %v1570, %v1578
      %v1596 = vcombine.high %v1570, %v1578
      %v1598 = vunpack.c.l.s4 1934713408
      %v1599 = vunpack.c.0.s8 %v1598
      %v1600 = vlaneseq
      %v1601 = vshrl.u32 %v1600, 7
      %v1602 = vsub.s32 %v1599, %v1601
      %v1603 = vrot.slane %v1595, %v1602
      %v1605 = vunpack.c.l.s4 1934713408
      %v1606 = vunpack.c.0.s8 %v1605
      %v1607 = vlaneseq
      %v1608 = vshrl.u32 %v1607, 7
      %v1609 = vsub.s32 %v1606, %v1608
      %v1610 = vrot.slane %v1596, %v1609
      %v1611 = vcombine.low %v1587, %v1603
      %v1612 = vcombine.high %v1587, %v1603
      %v1613 = vcombine.low %v1594, %v1610
      %v1614 = vcombine.high %v1594, %v1610
      %v1616 = vunpack.c.l.s4 1934713408
      %v1617 = vunpack.c.0.s8 %v1616
      %v1618 = vlaneseq
      %v1619 = vshrl.u32 %v1618, 7
      %v1620 = vsub.s32 %v1617, %v1619
      %v1621 = vrot.slane %v1478, %v1620
      %v1623 = vunpack.c.l.s4 1983009808
      %v1624 = vunpack.c.0.s8 %v1623
      %v1625 = vlaneseq
      %v1626 = vshrl.u32 %v1625, 7
      %v1627 = vsub.s32 %v1624, %v1626
      %v1628 = vrot.slane %v1621, %v1627
      %v1629 = vcombine.high %v1628, 0.0
      %v1631 = vunpack.c.l.s4 1934713408
      %v1632 = vunpack.c.0.s8 %v1631
      %v1633 = vlaneseq
      %v1634 = vshrl.u32 %v1633, 7
      %v1635 = vsub.s32 %v1632, %v1634
      %v1636 = vrot.slane %v1628, %v1635
      %v1638 = vunpack.c.l.s4 1934713408
      %v1639 = vunpack.c.0.s8 %v1638
      %v1640 = vlaneseq
      %v1641 = vshrl.u32 %v1640, 7
      %v1642 = vsub.s32 %v1639, %v1641
      %v1643 = vrot.slane %v1629, %v1642
      %v1644 = vcombine.high %v1636, 0.0
      %v1645 = vcombine.high %v1643, 0.0
      %v1646 = vpack.c.bf16 %v1611, %v1543
      %v1647 = vpack.c.bf16 %v1636, %v1636
      %v1648 = vpack.c.bf16 %v1612, %v1544
      %v1649 = vpack.c.bf16 %v1644, %v1644
      %v1650 = vpack.c.bf16 %v1613, %v1545
      %v1651 = vpack.c.bf16 %v1643, %v1643
      %v1652 = vpack.c.bf16 %v1614, %v1546
      %v1653 = vpack.c.bf16 %v1645, %v1645
      %1657 = vrot.lane.b32.xlu0 %v553, 120
      %v1658 = vpop.permute.xlu0 %1657
      %1659 = vrot.lane.b32.xlu0 %v554, 120
      %v1660 = vpop.permute.xlu0 %1659
      %1661 = vrot.lane.b32.xlu0 %v555, 120
      %v1662 = vpop.permute.xlu0 %1661
      %1666 = vrot.lane.b32.xlu0 %v553, 112
      %v1667 = vpop.permute.xlu0 %1666
      %1668 = vrot.lane.b32.xlu0 %v554, 112
      %v1669 = vpop.permute.xlu0 %1668
      %1670 = vrot.lane.b32.xlu0 %v555, 112
      %v1671 = vpop.permute.xlu0 %1670
      %1675 = vrot.lane.b32.xlu0 %v553, 104
      %v1676 = vpop.permute.xlu0 %1675
      %1677 = vrot.lane.b32.xlu0 %v554, 104
      %v1678 = vpop.permute.xlu0 %1677
      %1679 = vrot.lane.b32.xlu0 %v555, 104
      %v1680 = vpop.permute.xlu0 %1679
      %v1684 = vcombine.low %v553, %v1667
      %v1685 = vcombine.high %v553, %v1667
      %v1687 = vunpack.c.l.s4 1983009808
      %v1688 = vunpack.c.0.s8 %v1687
      %v1689 = vlaneseq
      %v1690 = vshrl.u32 %v1689, 7
      %v1691 = vsub.s32 %v1688, %v1690
      %v1692 = vrot.slane %v1684, %v1691
      %v1694 = vunpack.c.l.s4 1983009808
      %v1695 = vunpack.c.0.s8 %v1694
      %v1696 = vlaneseq
      %v1697 = vshrl.u32 %v1696, 7
      %v1698 = vsub.s32 %v1695, %v1697
      %v1699 = vrot.slane %v1685, %v1698
      %v1700 = vcombine.low %v1658, %v1676
      %v1701 = vcombine.high %v1658, %v1676
      %v1703 = vunpack.c.l.s4 1983009808
      %v1704 = vunpack.c.0.s8 %v1703
      %v1705 = vlaneseq
      %v1706 = vshrl.u32 %v1705, 7
      %v1707 = vsub.s32 %v1704, %v1706
      %v1708 = vrot.slane %v1700, %v1707
      %v1710 = vunpack.c.l.s4 1983009808
      %v1711 = vunpack.c.0.s8 %v1710
      %v1712 = vlaneseq
      %v1713 = vshrl.u32 %v1712, 7
      %v1714 = vsub.s32 %v1711, %v1713
      %v1715 = vrot.slane %v1701, %v1714
      %v1716 = vcombine.low %v1692, %v1708
      %v1717 = vcombine.high %v1692, %v1708
      %v1719 = vunpack.c.l.s4 1934713408
      %v1720 = vunpack.c.0.s8 %v1719
      %v1721 = vlaneseq
      %v1722 = vshrl.u32 %v1721, 7
      %v1723 = vsub.s32 %v1720, %v1722
      %v1724 = vrot.slane %v1716, %v1723
      %v1726 = vunpack.c.l.s4 1934713408
      %v1727 = vunpack.c.0.s8 %v1726
      %v1728 = vlaneseq
      %v1729 = vshrl.u32 %v1728, 7
      %v1730 = vsub.s32 %v1727, %v1729
      %v1731 = vrot.slane %v1717, %v1730
      %v1732 = vcombine.low %v1699, %v1715
      %v1733 = vcombine.high %v1699, %v1715
      %v1735 = vunpack.c.l.s4 1934713408
      %v1736 = vunpack.c.0.s8 %v1735
      %v1737 = vlaneseq
      %v1738 = vshrl.u32 %v1737, 7
      %v1739 = vsub.s32 %v1736, %v1738
      %v1740 = vrot.slane %v1732, %v1739
      %v1742 = vunpack.c.l.s4 1934713408
      %v1743 = vunpack.c.0.s8 %v1742
      %v1744 = vlaneseq
      %v1745 = vshrl.u32 %v1744, 7
      %v1746 = vsub.s32 %v1743, %v1745
      %v1747 = vrot.slane %v1733, %v1746
      %v1748 = vcombine.high %v1724, 0.0
      %v1749 = vcombine.high %v1731, 0.0
      %v1750 = vcombine.high %v1740, 0.0
      %v1751 = vcombine.high %v1747, 0.0
      %v1752 = vcombine.low %v554, %v1669
      %v1753 = vcombine.high %v554, %v1669
      %v1755 = vunpack.c.l.s4 1983009808
      %v1756 = vunpack.c.0.s8 %v1755
      %v1757 = vlaneseq
      %v1758 = vshrl.u32 %v1757, 7
      %v1759 = vsub.s32 %v1756, %v1758
      %v1760 = vrot.slane %v1752, %v1759
      %v1762 = vunpack.c.l.s4 1983009808
      %v1763 = vunpack.c.0.s8 %v1762
      %v1764 = vlaneseq
      %v1765 = vshrl.u32 %v1764, 7
      %v1766 = vsub.s32 %v1763, %v1765
      %v1767 = vrot.slane %v1753, %v1766
      %v1768 = vcombine.low %v1660, %v1678
      %v1769 = vcombine.high %v1660, %v1678
      %v1771 = vunpack.c.l.s4 1983009808
      %v1772 = vunpack.c.0.s8 %v1771
      %v1773 = vlaneseq
      %v1774 = vshrl.u32 %v1773, 7
      %v1775 = vsub.s32 %v1772, %v1774
      %v1776 = vrot.slane %v1768, %v1775
      %v1778 = vunpack.c.l.s4 1983009808
      %v1779 = vunpack.c.0.s8 %v1778
      %v1780 = vlaneseq
      %v1781 = vshrl.u32 %v1780, 7
      %v1782 = vsub.s32 %v1779, %v1781
      %v1783 = vrot.slane %v1769, %v1782
      %v1784 = vcombine.low %v1760, %v1776
      %v1785 = vcombine.high %v1760, %v1776
      %v1787 = vunpack.c.l.s4 1934713408
      %v1788 = vunpack.c.0.s8 %v1787
      %v1789 = vlaneseq
      %v1790 = vshrl.u32 %v1789, 7
      %v1791 = vsub.s32 %v1788, %v1790
      %v1792 = vrot.slane %v1784, %v1791
      %v1794 = vunpack.c.l.s4 1934713408
      %v1795 = vunpack.c.0.s8 %v1794
      %v1796 = vlaneseq
      %v1797 = vshrl.u32 %v1796, 7
      %v1798 = vsub.s32 %v1795, %v1797
      %v1799 = vrot.slane %v1785, %v1798
      %v1800 = vcombine.low %v1767, %v1783
      %v1801 = vcombine.high %v1767, %v1783
      %v1803 = vunpack.c.l.s4 1934713408
      %v1804 = vunpack.c.0.s8 %v1803
      %v1805 = vlaneseq
      %v1806 = vshrl.u32 %v1805, 7
      %v1807 = vsub.s32 %v1804, %v1806
      %v1808 = vrot.slane %v1800, %v1807
      %v1810 = vunpack.c.l.s4 1934713408
      %v1811 = vunpack.c.0.s8 %v1810
      %v1812 = vlaneseq
      %v1813 = vshrl.u32 %v1812, 7
      %v1814 = vsub.s32 %v1811, %v1813
      %v1815 = vrot.slane %v1801, %v1814
      %v1816 = vcombine.high %v1792, 0.0
      %v1817 = vcombine.high %v1799, 0.0
      %v1818 = vcombine.high %v1808, 0.0
      %v1819 = vcombine.high %v1815, 0.0
      %v1820 = vcombine.low %v555, %v1671
      %v1822 = vunpack.c.l.s4 1983009808
      %v1823 = vunpack.c.0.s8 %v1822
      %v1824 = vlaneseq
      %v1825 = vshrl.u32 %v1824, 7
      %v1826 = vsub.s32 %v1823, %v1825
      %v1827 = vrot.slane %v1820, %v1826
      %v1828 = vcombine.low %v1662, %v1680
      %v1830 = vunpack.c.l.s4 1983009808
      %v1831 = vunpack.c.0.s8 %v1830
      %v1832 = vlaneseq
      %v1833 = vshrl.u32 %v1832, 7
      %v1834 = vsub.s32 %v1831, %v1833
      %v1835 = vrot.slane %v1828, %v1834
      %v1836 = vcombine.low %v1827, %v1835
      %v1837 = vcombine.low %v1724, %v1731
      %v1839 = vunpack.c.l.s4 1983009808
      %v1840 = vunpack.c.0.s8 %v1839
      %v1841 = vlaneseq
      %v1842 = vshrl.u32 %v1841, 7
      %v1843 = vsub.s32 %v1840, %v1842
      %v1844 = vrot.slane %v1837, %v1843
      %v1845 = vcombine.low %v1748, %v1749
      %v1847 = vunpack.c.l.s4 1983009808
      %v1848 = vunpack.c.0.s8 %v1847
      %v1849 = vlaneseq
      %v1850 = vshrl.u32 %v1849, 7
      %v1851 = vsub.s32 %v1848, %v1850
      %v1852 = vrot.slane %v1845, %v1851
      %v1853 = vcombine.low %v1740, %v1747
      %v1855 = vunpack.c.l.s4 1983009808
      %v1856 = vunpack.c.0.s8 %v1855
      %v1857 = vlaneseq
      %v1858 = vshrl.u32 %v1857, 7
      %v1859 = vsub.s32 %v1856, %v1858
      %v1860 = vrot.slane %v1853, %v1859
      %v1861 = vcombine.low %v1750, %v1751
      %v1863 = vunpack.c.l.s4 1983009808
      %v1864 = vunpack.c.0.s8 %v1863
      %v1865 = vlaneseq
      %v1866 = vshrl.u32 %v1865, 7
      %v1867 = vsub.s32 %v1864, %v1866
      %v1868 = vrot.slane %v1861, %v1867
      %v1869 = vcombine.low %v1844, %v1852
      %v1870 = vcombine.high %v1844, %v1852
      %v1872 = vunpack.c.l.s4 1934713408
      %v1873 = vunpack.c.0.s8 %v1872
      %v1874 = vlaneseq
      %v1875 = vshrl.u32 %v1874, 7
      %v1876 = vsub.s32 %v1873, %v1875
      %v1877 = vrot.slane %v1869, %v1876
      %v1879 = vunpack.c.l.s4 1934713408
      %v1880 = vunpack.c.0.s8 %v1879
      %v1881 = vlaneseq
      %v1882 = vshrl.u32 %v1881, 7
      %v1883 = vsub.s32 %v1880, %v1882
      %v1884 = vrot.slane %v1870, %v1883
      %v1885 = vcombine.low %v1860, %v1868
      %v1886 = vcombine.high %v1860, %v1868
      %v1888 = vunpack.c.l.s4 1934713408
      %v1889 = vunpack.c.0.s8 %v1888
      %v1890 = vlaneseq
      %v1891 = vshrl.u32 %v1890, 7
      %v1892 = vsub.s32 %v1889, %v1891
      %v1893 = vrot.slane %v1885, %v1892
      %v1895 = vunpack.c.l.s4 1934713408
      %v1896 = vunpack.c.0.s8 %v1895
      %v1897 = vlaneseq
      %v1898 = vshrl.u32 %v1897, 7
      %v1899 = vsub.s32 %v1896, %v1898
      %v1900 = vrot.slane %v1886, %v1899
      %v1901 = vcombine.low %v1877, %v1893
      %v1902 = vcombine.high %v1877, %v1893
      %v1903 = vcombine.low %v1884, %v1900
      %v1904 = vcombine.high %v1884, %v1900
      %v1905 = vcombine.low %v1792, %v1799
      %v1907 = vunpack.c.l.s4 1983009808
      %v1908 = vunpack.c.0.s8 %v1907
      %v1909 = vlaneseq
      %v1910 = vshrl.u32 %v1909, 7
      %v1911 = vsub.s32 %v1908, %v1910
      %v1912 = vrot.slane %v1905, %v1911
      %v1913 = vcombine.low %v1816, %v1817
      %v1915 = vunpack.c.l.s4 1983009808
      %v1916 = vunpack.c.0.s8 %v1915
      %v1917 = vlaneseq
      %v1918 = vshrl.u32 %v1917, 7
      %v1919 = vsub.s32 %v1916, %v1918
      %v1920 = vrot.slane %v1913, %v1919
      %v1921 = vcombine.low %v1808, %v1815
      %v1923 = vunpack.c.l.s4 1983009808
      %v1924 = vunpack.c.0.s8 %v1923
      %v1925 = vlaneseq
      %v1926 = vshrl.u32 %v1925, 7
      %v1927 = vsub.s32 %v1924, %v1926
      %v1928 = vrot.slane %v1921, %v1927
      %v1929 = vcombine.low %v1818, %v1819
      %v1931 = vunpack.c.l.s4 1983009808
      %v1932 = vunpack.c.0.s8 %v1931
      %v1933 = vlaneseq
      %v1934 = vshrl.u32 %v1933, 7
      %v1935 = vsub.s32 %v1932, %v1934
      %v1936 = vrot.slane %v1929, %v1935
      %v1937 = vcombine.low %v1912, %v1920
      %v1938 = vcombine.high %v1912, %v1920
      %v1940 = vunpack.c.l.s4 1934713408
      %v1941 = vunpack.c.0.s8 %v1940
      %v1942 = vlaneseq
      %v1943 = vshrl.u32 %v1942, 7
      %v1944 = vsub.s32 %v1941, %v1943
      %v1945 = vrot.slane %v1937, %v1944
      %v1947 = vunpack.c.l.s4 1934713408
      %v1948 = vunpack.c.0.s8 %v1947
      %v1949 = vlaneseq
      %v1950 = vshrl.u32 %v1949, 7
      %v1951 = vsub.s32 %v1948, %v1950
      %v1952 = vrot.slane %v1938, %v1951
      %v1953 = vcombine.low %v1928, %v1936
      %v1954 = vcombine.high %v1928, %v1936
      %v1956 = vunpack.c.l.s4 1934713408
      %v1957 = vunpack.c.0.s8 %v1956
      %v1958 = vlaneseq
      %v1959 = vshrl.u32 %v1958, 7
      %v1960 = vsub.s32 %v1957, %v1959
      %v1961 = vrot.slane %v1953, %v1960
      %v1963 = vunpack.c.l.s4 1934713408
      %v1964 = vunpack.c.0.s8 %v1963
      %v1965 = vlaneseq
      %v1966 = vshrl.u32 %v1965, 7
      %v1967 = vsub.s32 %v1964, %v1966
      %v1968 = vrot.slane %v1954, %v1967
      %v1969 = vcombine.low %v1945, %v1961
      %v1970 = vcombine.high %v1945, %v1961
      %v1971 = vcombine.low %v1952, %v1968
      %v1972 = vcombine.high %v1952, %v1968
      %v1974 = vunpack.c.l.s4 1934713408
      %v1975 = vunpack.c.0.s8 %v1974
      %v1976 = vlaneseq
      %v1977 = vshrl.u32 %v1976, 7
      %v1978 = vsub.s32 %v1975, %v1977
      %v1979 = vrot.slane %v1836, %v1978
      %v1981 = vunpack.c.l.s4 1983009808
      %v1982 = vunpack.c.0.s8 %v1981
      %v1983 = vlaneseq
      %v1984 = vshrl.u32 %v1983, 7
      %v1985 = vsub.s32 %v1982, %v1984
      %v1986 = vrot.slane %v1979, %v1985
      %v1987 = vcombine.high %v1986, 0.0
      %v1989 = vunpack.c.l.s4 1934713408
      %v1990 = vunpack.c.0.s8 %v1989
      %v1991 = vlaneseq
      %v1992 = vshrl.u32 %v1991, 7
      %v1993 = vsub.s32 %v1990, %v1992
      %v1994 = vrot.slane %v1986, %v1993
      %v1996 = vunpack.c.l.s4 1934713408
      %v1997 = vunpack.c.0.s8 %v1996
      %v1998 = vlaneseq
      %v1999 = vshrl.u32 %v1998, 7
      %v2000 = vsub.s32 %v1997, %v1999
      %v2001 = vrot.slane %v1987, %v2000
      %v2002 = vcombine.high %v1994, 0.0
      %v2003 = vcombine.high %v2001, 0.0
      %2005 = vset.pattern.permute.xlu0 0
      %2006 = vperm.xlu0 %2005, %v1901
      %v2007 = vpop.permute.xlu0 %2006
      %2010 = vset.pattern.permute.xlu0 0
      %2011 = vperm.xlu0 %2010, %v1969
      %v2012 = vpop.permute.xlu0 %2011
      %2015 = vset.pattern.permute.xlu0 0
      %2016 = vperm.xlu0 %2015, %v1994
      %v2017 = vpop.permute.xlu0 %2016
      %2020 = vset.pattern.permute.xlu0 0
      %2021 = vperm.xlu0 %2020, %v1902
      %v2022 = vpop.permute.xlu0 %2021
      %2025 = vset.pattern.permute.xlu0 0
      %2026 = vperm.xlu0 %2025, %v1970
      %v2027 = vpop.permute.xlu0 %2026
      %2030 = vset.pattern.permute.xlu0 0
      %2031 = vperm.xlu0 %2030, %v2002
      %v2032 = vpop.permute.xlu0 %2031
      %2035 = vset.pattern.permute.xlu0 0
      %2036 = vperm.xlu0 %2035, %v1903
      %v2037 = vpop.permute.xlu0 %2036
      %2040 = vset.pattern.permute.xlu0 0
      %2041 = vperm.xlu0 %2040, %v1971
      %v2042 = vpop.permute.xlu0 %2041
      %2045 = vset.pattern.permute.xlu0 0
      %2046 = vperm.xlu0 %2045, %v2001
      %v2047 = vpop.permute.xlu0 %2046
      %2050 = vset.pattern.permute.xlu0 0
      %2051 = vperm.xlu0 %2050, %v1904
      %v2052 = vpop.permute.xlu0 %2051
      %2055 = vset.pattern.permute.xlu0 0
      %2056 = vperm.xlu0 %2055, %v1972
      %v2057 = vpop.permute.xlu0 %2056
      %2060 = vset.pattern.permute.xlu0 0
      %2061 = vperm.xlu0 %2060, %v2003
      %v2062 = vpop.permute.xlu0 %2061
      %v2064 = vmul.f32 %v2007, %v556
      %v2065 = vmul.f32 %v2012, %v557
      %v2066 = vmul.f32 %v2017, %v558
      %v2067 = vmul.f32 %v2022, %v556
      %v2068 = vmul.f32 %v2027, %v557
      %v2069 = vmul.f32 %v2032, %v558
      %v2070 = vmul.f32 %v2037, %v556
      %v2071 = vmul.f32 %v2042, %v557
      %v2072 = vmul.f32 %v2047, %v558
      %v2073 = vmul.f32 %v2052, %v556
      %v2074 = vmul.f32 %v2057, %v557
      %v2075 = vmul.f32 %v2062, %v558
      %2076 = vset.pattern.permute.xlu0 1
      %2077 = vperm.xlu0 %2076, %v1901
      %v2078 = vpop.permute.xlu0 %2077
      %2080 = vset.pattern.permute.xlu0 1
      %2081 = vperm.xlu0 %2080, %v1969
      %v2082 = vpop.permute.xlu0 %2081
      %2084 = vset.pattern.permute.xlu0 1
      %2085 = vperm.xlu0 %2084, %v1994
      %v2086 = vpop.permute.xlu0 %2085
      %2088 = vset.pattern.permute.xlu0 1
      %2089 = vperm.xlu0 %2088, %v1902
      %v2090 = vpop.permute.xlu0 %2089
      %2092 = vset.pattern.permute.xlu0 1
      %2093 = vperm.xlu0 %2092, %v1970
      %v2094 = vpop.permute.xlu0 %2093
      %2096 = vset.pattern.permute.xlu0 1
      %2097 = vperm.xlu0 %2096, %v2002
      %v2098 = vpop.permute.xlu0 %2097
      %2100 = vset.pattern.permute.xlu0 1
      %2101 = vperm.xlu0 %2100, %v1903
      %v2102 = vpop.permute.xlu0 %2101
      %2104 = vset.pattern.permute.xlu0 1
      %2105 = vperm.xlu0 %2104, %v1971
      %v2106 = vpop.permute.xlu0 %2105
      %2108 = vset.pattern.permute.xlu0 1
      %2109 = vperm.xlu0 %2108, %v2001
      %v2110 = vpop.permute.xlu0 %2109
      %2112 = vset.pattern.permute.xlu0 1
      %2113 = vperm.xlu0 %2112, %v1904
      %v2114 = vpop.permute.xlu0 %2113
      %2116 = vset.pattern.permute.xlu0 1
      %2117 = vperm.xlu0 %2116, %v1972
      %v2118 = vpop.permute.xlu0 %2117
      %2120 = vset.pattern.permute.xlu0 1
      %2121 = vperm.xlu0 %2120, %v2003
      %v2122 = vpop.permute.xlu0 %2121
      %v2124 = vmul.f32 %v2078, %v559
      %v2125 = vmul.f32 %v2082, %v560
      %v2126 = vmul.f32 %v2086, %v561
      %v2127 = vmul.f32 %v2090, %v559
      %v2128 = vmul.f32 %v2094, %v560
      %v2129 = vmul.f32 %v2098, %v561
      %v2130 = vmul.f32 %v2102, %v559
      %v2131 = vmul.f32 %v2106, %v560
      %v2132 = vmul.f32 %v2110, %v561
      %v2133 = vmul.f32 %v2114, %v559
      %v2134 = vmul.f32 %v2118, %v560
      %v2135 = vmul.f32 %v2122, %v561
      %v2136 = vadd.f32 %v2064, %v2124
      %v2137 = vadd.f32 %v2065, %v2125
      %v2138 = vadd.f32 %v2066, %v2126
      %v2139 = vadd.f32 %v2067, %v2127
      %v2140 = vadd.f32 %v2068, %v2128
      %v2141 = vadd.f32 %v2069, %v2129
      %v2142 = vadd.f32 %v2070, %v2130
      %v2143 = vadd.f32 %v2071, %v2131
      %v2144 = vadd.f32 %v2072, %v2132
      %v2145 = vadd.f32 %v2073, %v2133
      %v2146 = vadd.f32 %v2074, %v2134
      %v2147 = vadd.f32 %v2075, %v2135
      %2148 = vset.pattern.permute.xlu0 2
      %2149 = vperm.xlu0 %2148, %v1901
      %v2150 = vpop.permute.xlu0 %2149
      %2152 = vset.pattern.permute.xlu0 2
      %2153 = vperm.xlu0 %2152, %v1969
      %v2154 = vpop.permute.xlu0 %2153
      %2156 = vset.pattern.permute.xlu0 2
      %2157 = vperm.xlu0 %2156, %v1994
      %v2158 = vpop.permute.xlu0 %2157
      %2160 = vset.pattern.permute.xlu0 2
      %2161 = vperm.xlu0 %2160, %v1902
      %v2162 = vpop.permute.xlu0 %2161
      %2164 = vset.pattern.permute.xlu0 2
      %2165 = vperm.xlu0 %2164, %v1970
      %v2166 = vpop.permute.xlu0 %2165
      %2168 = vset.pattern.permute.xlu0 2
      %2169 = vperm.xlu0 %2168, %v2002
      %v2170 = vpop.permute.xlu0 %2169
      %2172 = vset.pattern.permute.xlu0 2
      %2173 = vperm.xlu0 %2172, %v1903
      %v2174 = vpop.permute.xlu0 %2173
      %2176 = vset.pattern.permute.xlu0 2
      %2177 = vperm.xlu0 %2176, %v1971
      %v2178 = vpop.permute.xlu0 %2177
      %2180 = vset.pattern.permute.xlu0 2
      %2181 = vperm.xlu0 %2180, %v2001
      %v2182 = vpop.permute.xlu0 %2181
      %2184 = vset.pattern.permute.xlu0 2
      %2185 = vperm.xlu0 %2184, %v1904
      %v2186 = vpop.permute.xlu0 %2185
      %2188 = vset.pattern.permute.xlu0 2
      %2189 = vperm.xlu0 %2188, %v1972
      %v2190 = vpop.permute.xlu0 %2189
      %2192 = vset.pattern.permute.xlu0 2
      %2193 = vperm.xlu0 %2192, %v2003
      %v2194 = vpop.permute.xlu0 %2193
      %v2196 = vmul.f32 %v2150, %v562
      %v2197 = vmul.f32 %v2154, %v563
      %v2198 = vmul.f32 %v2158, %v564
      %v2199 = vmul.f32 %v2162, %v562
      %v2200 = vmul.f32 %v2166, %v563
      %v2201 = vmul.f32 %v2170, %v564
      %v2202 = vmul.f32 %v2174, %v562
      %v2203 = vmul.f32 %v2178, %v563
      %v2204 = vmul.f32 %v2182, %v564
      %v2205 = vmul.f32 %v2186, %v562
      %v2206 = vmul.f32 %v2190, %v563
      %v2207 = vmul.f32 %v2194, %v564
      %v2208 = vadd.f32 %v2136, %v2196
      %v2209 = vadd.f32 %v2137, %v2197
      %v2210 = vadd.f32 %v2138, %v2198
      %v2211 = vadd.f32 %v2139, %v2199
      %v2212 = vadd.f32 %v2140, %v2200
      %v2213 = vadd.f32 %v2141, %v2201
      %v2214 = vadd.f32 %v2142, %v2202
      %v2215 = vadd.f32 %v2143, %v2203
      %v2216 = vadd.f32 %v2144, %v2204
      %v2217 = vadd.f32 %v2145, %v2205
      %v2218 = vadd.f32 %v2146, %v2206
      %v2219 = vadd.f32 %v2147, %v2207
      %2220 = vset.pattern.permute.xlu0 3
      %2221 = vperm.xlu0 %2220, %v1901
      %v2222 = vpop.permute.xlu0 %2221
      %2224 = vset.pattern.permute.xlu0 3
      %2225 = vperm.xlu0 %2224, %v1969
      %v2226 = vpop.permute.xlu0 %2225
      %2228 = vset.pattern.permute.xlu0 3
      %2229 = vperm.xlu0 %2228, %v1994
      %v2230 = vpop.permute.xlu0 %2229
      %2232 = vset.pattern.permute.xlu0 3
      %2233 = vperm.xlu0 %2232, %v1902
      %v2234 = vpop.permute.xlu0 %2233
      %2236 = vset.pattern.permute.xlu0 3
      %2237 = vperm.xlu0 %2236, %v1970
      %v2238 = vpop.permute.xlu0 %2237
      %2240 = vset.pattern.permute.xlu0 3
      %2241 = vperm.xlu0 %2240, %v2002
      %v2242 = vpop.permute.xlu0 %2241
      %2244 = vset.pattern.permute.xlu0 3
      %2245 = vperm.xlu0 %2244, %v1903
      %v2246 = vpop.permute.xlu0 %2245
      %2248 = vset.pattern.permute.xlu0 3
      %2249 = vperm.xlu0 %2248, %v1971
      %v2250 = vpop.permute.xlu0 %2249
      %2252 = vset.pattern.permute.xlu0 3
      %2253 = vperm.xlu0 %2252, %v2001
      %v2254 = vpop.permute.xlu0 %2253
      %2256 = vset.pattern.permute.xlu0 3
      %2257 = vperm.xlu0 %2256, %v1904
      %v2258 = vpop.permute.xlu0 %2257
      %2260 = vset.pattern.permute.xlu0 3
      %2261 = vperm.xlu0 %2260, %v1972
      %v2262 = vpop.permute.xlu0 %2261
      %2264 = vset.pattern.permute.xlu0 3
      %2265 = vperm.xlu0 %2264, %v2003
      %v2266 = vpop.permute.xlu0 %2265
      %v2268 = vmul.f32 %v2222, %v565
      %v2269 = vmul.f32 %v2226, %v566
      %v2270 = vmul.f32 %v2230, %v567
      %v2271 = vmul.f32 %v2234, %v565
      %v2272 = vmul.f32 %v2238, %v566
      %v2273 = vmul.f32 %v2242, %v567
      %v2274 = vmul.f32 %v2246, %v565
      %v2275 = vmul.f32 %v2250, %v566
      %v2276 = vmul.f32 %v2254, %v567
      %v2277 = vmul.f32 %v2258, %v565
      %v2278 = vmul.f32 %v2262, %v566
      %v2279 = vmul.f32 %v2266, %v567
      %v2280 = vadd.f32 %v2208, %v2268
      %v2281 = vadd.f32 %v2209, %v2269
      %v2282 = vadd.f32 %v2210, %v2270
      %v2283 = vadd.f32 %v2211, %v2271
      %v2284 = vadd.f32 %v2212, %v2272
      %v2285 = vadd.f32 %v2213, %v2273
      %v2286 = vadd.f32 %v2214, %v2274
      %v2287 = vadd.f32 %v2215, %v2275
      %v2288 = vadd.f32 %v2216, %v2276
      %v2289 = vadd.f32 %v2217, %v2277
      %v2290 = vadd.f32 %v2218, %v2278
      %v2291 = vadd.f32 %v2219, %v2279
      %2292 = vset.pattern.permute.xlu0 4
      %2293 = vperm.xlu0 %2292, %v1901
      %v2294 = vpop.permute.xlu0 %2293
      %2296 = vset.pattern.permute.xlu0 4
      %2297 = vperm.xlu0 %2296, %v1969
      %v2298 = vpop.permute.xlu0 %2297
      %2300 = vset.pattern.permute.xlu0 4
      %2301 = vperm.xlu0 %2300, %v1994
      %v2302 = vpop.permute.xlu0 %2301
      %2304 = vset.pattern.permute.xlu0 4
      %2305 = vperm.xlu0 %2304, %v1902
      %v2306 = vpop.permute.xlu0 %2305
      %2308 = vset.pattern.permute.xlu0 4
      %2309 = vperm.xlu0 %2308, %v1970
      %v2310 = vpop.permute.xlu0 %2309
      %2312 = vset.pattern.permute.xlu0 4
      %2313 = vperm.xlu0 %2312, %v2002
      %v2314 = vpop.permute.xlu0 %2313
      %2316 = vset.pattern.permute.xlu0 4
      %2317 = vperm.xlu0 %2316, %v1903
      %v2318 = vpop.permute.xlu0 %2317
      %2320 = vset.pattern.permute.xlu0 4
      %2321 = vperm.xlu0 %2320, %v1971
      %v2322 = vpop.permute.xlu0 %2321
      %2324 = vset.pattern.permute.xlu0 4
      %2325 = vperm.xlu0 %2324, %v2001
      %v2326 = vpop.permute.xlu0 %2325
      %2328 = vset.pattern.permute.xlu0 4
      %2329 = vperm.xlu0 %2328, %v1904
      %v2330 = vpop.permute.xlu0 %2329
      %2332 = vset.pattern.permute.xlu0 4
      %2333 = vperm.xlu0 %2332, %v1972
      %v2334 = vpop.permute.xlu0 %2333
      %2336 = vset.pattern.permute.xlu0 4
      %2337 = vperm.xlu0 %2336, %v2003
      %v2338 = vpop.permute.xlu0 %2337
      %v2340 = vmul.f32 %v2294, %v568
      %v2341 = vmul.f32 %v2298, %v569
      %v2342 = vmul.f32 %v2302, %v570
      %v2343 = vmul.f32 %v2306, %v568
      %v2344 = vmul.f32 %v2310, %v569
      %v2345 = vmul.f32 %v2314, %v570
      %v2346 = vmul.f32 %v2318, %v568
      %v2347 = vmul.f32 %v2322, %v569
      %v2348 = vmul.f32 %v2326, %v570
      %v2349 = vmul.f32 %v2330, %v568
      %v2350 = vmul.f32 %v2334, %v569
      %v2351 = vmul.f32 %v2338, %v570
      %v2352 = vadd.f32 %v2280, %v2340
      %v2353 = vadd.f32 %v2281, %v2341
      %v2354 = vadd.f32 %v2282, %v2342
      %v2355 = vadd.f32 %v2283, %v2343
      %v2356 = vadd.f32 %v2284, %v2344
      %v2357 = vadd.f32 %v2285, %v2345
      %v2358 = vadd.f32 %v2286, %v2346
      %v2359 = vadd.f32 %v2287, %v2347
      %v2360 = vadd.f32 %v2288, %v2348
      %v2361 = vadd.f32 %v2289, %v2349
      %v2362 = vadd.f32 %v2290, %v2350
      %v2363 = vadd.f32 %v2291, %v2351
      %2364 = vset.pattern.permute.xlu0 5
      %2365 = vperm.xlu0 %2364, %v1901
      %v2366 = vpop.permute.xlu0 %2365
      %2368 = vset.pattern.permute.xlu0 5
      %2369 = vperm.xlu0 %2368, %v1969
      %v2370 = vpop.permute.xlu0 %2369
      %2372 = vset.pattern.permute.xlu0 5
      %2373 = vperm.xlu0 %2372, %v1994
      %v2374 = vpop.permute.xlu0 %2373
      %2376 = vset.pattern.permute.xlu0 5
      %2377 = vperm.xlu0 %2376, %v1902
      %v2378 = vpop.permute.xlu0 %2377
      %2380 = vset.pattern.permute.xlu0 5
      %2381 = vperm.xlu0 %2380, %v1970
      %v2382 = vpop.permute.xlu0 %2381
      %2384 = vset.pattern.permute.xlu0 5
      %2385 = vperm.xlu0 %2384, %v2002
      %v2386 = vpop.permute.xlu0 %2385
      %2388 = vset.pattern.permute.xlu0 5
      %2389 = vperm.xlu0 %2388, %v1903
      %v2390 = vpop.permute.xlu0 %2389
      %2392 = vset.pattern.permute.xlu0 5
      %2393 = vperm.xlu0 %2392, %v1971
      %v2394 = vpop.permute.xlu0 %2393
      %2396 = vset.pattern.permute.xlu0 5
      %2397 = vperm.xlu0 %2396, %v2001
      %v2398 = vpop.permute.xlu0 %2397
      %2400 = vset.pattern.permute.xlu0 5
      %2401 = vperm.xlu0 %2400, %v1904
      %v2402 = vpop.permute.xlu0 %2401
      %2404 = vset.pattern.permute.xlu0 5
      %2405 = vperm.xlu0 %2404, %v1972
      %v2406 = vpop.permute.xlu0 %2405
      %2408 = vset.pattern.permute.xlu0 5
      %2409 = vperm.xlu0 %2408, %v2003
      %v2410 = vpop.permute.xlu0 %2409
      %v2412 = vmul.f32 %v2366, %v571
      %v2413 = vmul.f32 %v2370, %v572
      %v2414 = vmul.f32 %v2374, %v573
      %v2415 = vmul.f32 %v2378, %v571
      %v2416 = vmul.f32 %v2382, %v572
      %v2417 = vmul.f32 %v2386, %v573
      %v2418 = vmul.f32 %v2390, %v571
      %v2419 = vmul.f32 %v2394, %v572
      %v2420 = vmul.f32 %v2398, %v573
      %v2421 = vmul.f32 %v2402, %v571
      %v2422 = vmul.f32 %v2406, %v572
      %v2423 = vmul.f32 %v2410, %v573
      %v2424 = vadd.f32 %v2352, %v2412
      %v2425 = vadd.f32 %v2353, %v2413
      %v2426 = vadd.f32 %v2354, %v2414
      %v2427 = vadd.f32 %v2355, %v2415
      %v2428 = vadd.f32 %v2356, %v2416
      %v2429 = vadd.f32 %v2357, %v2417
      %v2430 = vadd.f32 %v2358, %v2418
      %v2431 = vadd.f32 %v2359, %v2419
      %v2432 = vadd.f32 %v2360, %v2420
      %v2433 = vadd.f32 %v2361, %v2421
      %v2434 = vadd.f32 %v2362, %v2422
      %v2435 = vadd.f32 %v2363, %v2423
      %2436 = vset.pattern.permute.xlu0 6
      %2437 = vperm.xlu0 %2436, %v1901
      %v2438 = vpop.permute.xlu0 %2437
      %2440 = vset.pattern.permute.xlu0 6
      %2441 = vperm.xlu0 %2440, %v1969
      %v2442 = vpop.permute.xlu0 %2441
      %2444 = vset.pattern.permute.xlu0 6
      %2445 = vperm.xlu0 %2444, %v1994
      %v2446 = vpop.permute.xlu0 %2445
      %2448 = vset.pattern.permute.xlu0 6
      %2449 = vperm.xlu0 %2448, %v1902
      %v2450 = vpop.permute.xlu0 %2449
      %2452 = vset.pattern.permute.xlu0 6
      %2453 = vperm.xlu0 %2452, %v1970
      %v2454 = vpop.permute.xlu0 %2453
      %2456 = vset.pattern.permute.xlu0 6
      %2457 = vperm.xlu0 %2456, %v2002
      %v2458 = vpop.permute.xlu0 %2457
      %2460 = vset.pattern.permute.xlu0 6
      %2461 = vperm.xlu0 %2460, %v1903
      %v2462 = vpop.permute.xlu0 %2461
      %2464 = vset.pattern.permute.xlu0 6
      %2465 = vperm.xlu0 %2464, %v1971
      %v2466 = vpop.permute.xlu0 %2465
      %2468 = vset.pattern.permute.xlu0 6
      %2469 = vperm.xlu0 %2468, %v2001
      %v2470 = vpop.permute.xlu0 %2469
      %2472 = vset.pattern.permute.xlu0 6
      %2473 = vperm.xlu0 %2472, %v1904
      %v2474 = vpop.permute.xlu0 %2473
      %2476 = vset.pattern.permute.xlu0 6
      %2477 = vperm.xlu0 %2476, %v1972
      %v2478 = vpop.permute.xlu0 %2477
      %2480 = vset.pattern.permute.xlu0 6
      %2481 = vperm.xlu0 %2480, %v2003
      %v2482 = vpop.permute.xlu0 %2481
      %v2484 = vmul.f32 %v2438, %v574
      %v2485 = vmul.f32 %v2442, %v575
      %v2486 = vmul.f32 %v2446, %v576
      %v2487 = vmul.f32 %v2450, %v574
      %v2488 = vmul.f32 %v2454, %v575
      %v2489 = vmul.f32 %v2458, %v576
      %v2490 = vmul.f32 %v2462, %v574
      %v2491 = vmul.f32 %v2466, %v575
      %v2492 = vmul.f32 %v2470, %v576
      %v2493 = vmul.f32 %v2474, %v574
      %v2494 = vmul.f32 %v2478, %v575
      %v2495 = vmul.f32 %v2482, %v576
      %v2496 = vadd.f32 %v2424, %v2484
      %v2497 = vadd.f32 %v2425, %v2485
      %v2498 = vadd.f32 %v2426, %v2486
      %v2499 = vadd.f32 %v2427, %v2487
      %v2500 = vadd.f32 %v2428, %v2488
      %v2501 = vadd.f32 %v2429, %v2489
      %v2502 = vadd.f32 %v2430, %v2490
      %v2503 = vadd.f32 %v2431, %v2491
      %v2504 = vadd.f32 %v2432, %v2492
      %v2505 = vadd.f32 %v2433, %v2493
      %v2506 = vadd.f32 %v2434, %v2494
      %v2507 = vadd.f32 %v2435, %v2495
      %2508 = vset.pattern.permute.xlu0 7
      %2509 = vperm.xlu0 %2508, %v1901
      %v2510 = vpop.permute.xlu0 %2509
      %2512 = vset.pattern.permute.xlu0 7
      %2513 = vperm.xlu0 %2512, %v1969
      %v2514 = vpop.permute.xlu0 %2513
      %2516 = vset.pattern.permute.xlu0 7
      %2517 = vperm.xlu0 %2516, %v1994
      %v2518 = vpop.permute.xlu0 %2517
      %2520 = vset.pattern.permute.xlu0 7
      %2521 = vperm.xlu0 %2520, %v1902
      %v2522 = vpop.permute.xlu0 %2521
      %2524 = vset.pattern.permute.xlu0 7
      %2525 = vperm.xlu0 %2524, %v1970
      %v2526 = vpop.permute.xlu0 %2525
      %2528 = vset.pattern.permute.xlu0 7
      %2529 = vperm.xlu0 %2528, %v2002
      %v2530 = vpop.permute.xlu0 %2529
      %2532 = vset.pattern.permute.xlu0 7
      %2533 = vperm.xlu0 %2532, %v1903
      %v2534 = vpop.permute.xlu0 %2533
      %2536 = vset.pattern.permute.xlu0 7
      %2537 = vperm.xlu0 %2536, %v1971
      %v2538 = vpop.permute.xlu0 %2537
      %2540 = vset.pattern.permute.xlu0 7
      %2541 = vperm.xlu0 %2540, %v2001
      %v2542 = vpop.permute.xlu0 %2541
      %2544 = vset.pattern.permute.xlu0 7
      %2545 = vperm.xlu0 %2544, %v1904
      %v2546 = vpop.permute.xlu0 %2545
      %2548 = vset.pattern.permute.xlu0 7
      %2549 = vperm.xlu0 %2548, %v1972
      %v2550 = vpop.permute.xlu0 %2549
      %2552 = vset.pattern.permute.xlu0 7
      %2553 = vperm.xlu0 %2552, %v2003
      %v2554 = vpop.permute.xlu0 %2553
      %v2556 = vmul.f32 %v2510, %v577
      %v2557 = vmul.f32 %v2514, %v578
      %v2558 = vmul.f32 %v2518, %v579
      %v2559 = vmul.f32 %v2522, %v577
      %v2560 = vmul.f32 %v2526, %v578
      %v2561 = vmul.f32 %v2530, %v579
      %v2562 = vmul.f32 %v2534, %v577
      %v2563 = vmul.f32 %v2538, %v578
      %v2564 = vmul.f32 %v2542, %v579
      %v2565 = vmul.f32 %v2546, %v577
      %v2566 = vmul.f32 %v2550, %v578
      %v2567 = vmul.f32 %v2554, %v579
      %v2568 = vadd.f32 %v2496, %v2556
      %v2569 = vadd.f32 %v2497, %v2557
      %v2570 = vadd.f32 %v2498, %v2558
      %v2571 = vadd.f32 %v2499, %v2559
      %v2572 = vadd.f32 %v2500, %v2560
      %v2573 = vadd.f32 %v2501, %v2561
      %v2574 = vadd.f32 %v2502, %v2562
      %v2575 = vadd.f32 %v2503, %v2563
      %v2576 = vadd.f32 %v2504, %v2564
      %v2577 = vadd.f32 %v2505, %v2565
      %v2578 = vadd.f32 %v2506, %v2566
      %v2579 = vadd.f32 %v2507, %v2567
      %vm2580 = vcmask 64512
      %v2582 = vsel %vm2580, %v930, 0
      %v2585 = vsel %vm2580, %v931, 0
      %v2588 = vsel %vm2580, %v1288, 0
      %v2591 = vsel %vm2580, %v1289, 0
      %2593 = vmatprep.subr.bf16.mxu0 0
      %2594 = vmatpush1.bf16.xpose.msra.mxu0 %v2588
      %2595 = vmatprep.subr.bf16.mxu0 0
      %2596 = vmatpush1.bf16.xpose.msra.mxu0 %v2591
      %2597 = vmatprep.subr.bf16.mxu0 0
      %2598 = vmatpush1.bf16.xpose.msra.mxu0 0
      %2599 = vmatprep.subr.bf16.mxu0 0
      %2600 = vmatpush1.bf16.xpose.msra.mxu0 0
      %2601 = vmatprep.subr.bf16.mxu0 0
      %2602 = vmatpush1.bf16.xpose.msra.mxu0 0
      %2603 = vmatprep.subr.bf16.mxu0 0
      %2604 = vmatpush1.bf16.xpose.msra.mxu0 0
      %2605 = vmatprep.subr.bf16.mxu0 0
      %2606 = vmatpush1.bf16.xpose.msra.mxu0 0
      %2607 = vmatprep.subr.bf16.mxu0 0
      %2608 = vmatpush1.bf16.xpose.msra.mxu0 0
      %2609 = vmatprep.subr.bf16.mxu0 0
      %2610 = vmatpush1.bf16.xpose.msra.mxu0 0
      %2611 = vmatprep.subr.bf16.mxu0 0
      %2612 = vmatpush1.bf16.xpose.msra.mxu0 0
      %2613 = vmatprep.subr.bf16.mxu0 0
      %2614 = vmatpush1.bf16.xpose.msra.mxu0 0
      %2615 = vmatprep.subr.bf16.mxu0 0
      %2616 = vmatpush1.bf16.xpose.msra.mxu0 0
      %2617 = vmatprep.subr.bf16.mxu0 0
      %2618 = vmatpush1.bf16.xpose.msra.mxu0 0
      %2619 = vmatprep.subr.bf16.mxu0 0
      %2620 = vmatpush1.bf16.xpose.msra.mxu0 0
      %2621 = vmatprep.subr.bf16.mxu0 0
      %2622 = vmatpush1.bf16.xpose.msra.mxu0 0
      %2623 = vmatprep.subr.bf16.mxu0 0
      %2624 = vmatpush1.bf16.xpose.msra.mxu0 0
      %2625 = vmatprep.mubr.bf16.mxu0 0
      %2626 = vmatmul.mubr.bf16.gmra.mrb[0].mxu0 %v2582
      %v2627 = vpop.f32.mrb[0].mxu0
      %v2628 = vadd.f32 %v2568, %v2627
      %v2629 = vpop.f32.mrb[0].mxu0
      %v2630 = vpop.f32.mrb[0].mxu0
      %v2631 = vadd.f32 %v2569, %v2630
      %v2632 = vpop.f32.mrb[0].mxu0
      %2633 = vmatprep.mubr.bf16.mxu0 0
      %2634 = vmatmul.mubr.bf16.gmra.mrb[0].mxu0 %v2585
      %v2635 = vpop.f32.mrb[0].mxu0
      %v2636 = vadd.f32 %v2570, %v2635
      %v2637 = vpop.f32.mrb[0].mxu0
      %v2638 = vpop.f32.mrb[0].mxu0
      %v2639 = vpop.f32.mrb[0].mxu0
      %2640 = vdwg.mxu0
      %v2642 = vsel %vm2580, %v932, 0
      %v2645 = vsel %vm2580, %v933, 0
      %v2648 = vsel %vm2580, %v1290, 0
      %v2651 = vsel %vm2580, %v1291, 0
      %2653 = vmatprep.subr.bf16.mxu0 0
      %2654 = vmatpush1.bf16.xpose.msra.mxu0 %v2648
      %2655 = vmatprep.subr.bf16.mxu0 0
      %2656 = vmatpush1.bf16.xpose.msra.mxu0 %v2651
      %2657 = vmatprep.subr.bf16.mxu0 0
      %2658 = vmatpush1.bf16.xpose.msra.mxu0 0
      %2659 = vmatprep.subr.bf16.mxu0 0
      %2660 = vmatpush1.bf16.xpose.msra.mxu0 0
      %2661 = vmatprep.subr.bf16.mxu0 0
      %2662 = vmatpush1.bf16.xpose.msra.mxu0 0
      %2663 = vmatprep.subr.bf16.mxu0 0
      %2664 = vmatpush1.bf16.xpose.msra.mxu0 0
      %2665 = vmatprep.subr.bf16.mxu0 0
      %2666 = vmatpush1.bf16.xpose.msra.mxu0 0
      %2667 = vmatprep.subr.bf16.mxu0 0
      %2668 = vmatpush1.bf16.xpose.msra.mxu0 0
      %2669 = vmatprep.subr.bf16.mxu0 0
      %2670 = vmatpush1.bf16.xpose.msra.mxu0 0
      %2671 = vmatprep.subr.bf16.mxu0 0
      %2672 = vmatpush1.bf16.xpose.msra.mxu0 0
      %2673 = vmatprep.subr.bf16.mxu0 0
      %2674 = vmatpush1.bf16.xpose.msra.mxu0 0
      %2675 = vmatprep.subr.bf16.mxu0 0
      %2676 = vmatpush1.bf16.xpose.msra.mxu0 0
      %2677 = vmatprep.subr.bf16.mxu0 0
      %2678 = vmatpush1.bf16.xpose.msra.mxu0 0
      %2679 = vmatprep.subr.bf16.mxu0 0
      %2680 = vmatpush1.bf16.xpose.msra.mxu0 0
      %2681 = vmatprep.subr.bf16.mxu0 0
      %2682 = vmatpush1.bf16.xpose.msra.mxu0 0
      %2683 = vmatprep.subr.bf16.mxu0 0
      %2684 = vmatpush1.bf16.xpose.msra.mxu0 0
      %2685 = vmatprep.mubr.bf16.mxu0 0
      %2686 = vmatmul.mubr.bf16.gmra.mrb[0].mxu0 %v2642
      %v2687 = vpop.f32.mrb[0].mxu0
      %v2688 = vadd.f32 %v2571, %v2687
      %v2689 = vpop.f32.mrb[0].mxu0
      %v2690 = vpop.f32.mrb[0].mxu0
      %v2691 = vadd.f32 %v2572, %v2690
      %v2692 = vpop.f32.mrb[0].mxu0
      %2693 = vmatprep.mubr.bf16.mxu0 0
      %2694 = vmatmul.mubr.bf16.gmra.mrb[0].mxu0 %v2645
      %v2695 = vpop.f32.mrb[0].mxu0
      %v2696 = vadd.f32 %v2573, %v2695
      %v2697 = vpop.f32.mrb[0].mxu0
      %v2698 = vpop.f32.mrb[0].mxu0
      %v2699 = vpop.f32.mrb[0].mxu0
      %2700 = vdwg.mxu0
      %v2702 = vsel %vm2580, %v934, 0
      %v2705 = vsel %vm2580, %v935, 0
      %v2708 = vsel %vm2580, %v1292, 0
      %v2711 = vsel %vm2580, %v1293, 0
      %2713 = vmatprep.subr.bf16.mxu0 0
      %2714 = vmatpush1.bf16.xpose.msra.mxu0 %v2708
      %2715 = vmatprep.subr.bf16.mxu0 0
      %2716 = vmatpush1.bf16.xpose.msra.mxu0 %v2711
      %2717 = vmatprep.subr.bf16.mxu0 0
      %2718 = vmatpush1.bf16.xpose.msra.mxu0 0
      %2719 = vmatprep.subr.bf16.mxu0 0
      %2720 = vmatpush1.bf16.xpose.msra.mxu0 0
      %2721 = vmatprep.subr.bf16.mxu0 0
      %2722 = vmatpush1.bf16.xpose.msra.mxu0 0
      %2723 = vmatprep.subr.bf16.mxu0 0
      %2724 = vmatpush1.bf16.xpose.msra.mxu0 0
      %2725 = vmatprep.subr.bf16.mxu0 0
      %2726 = vmatpush1.bf16.xpose.msra.mxu0 0
      %2727 = vmatprep.subr.bf16.mxu0 0
      %2728 = vmatpush1.bf16.xpose.msra.mxu0 0
      %2729 = vmatprep.subr.bf16.mxu0 0
      %2730 = vmatpush1.bf16.xpose.msra.mxu0 0
      %2731 = vmatprep.subr.bf16.mxu0 0
      %2732 = vmatpush1.bf16.xpose.msra.mxu0 0
      %2733 = vmatprep.subr.bf16.mxu0 0
      %2734 = vmatpush1.bf16.xpose.msra.mxu0 0
      %2735 = vmatprep.subr.bf16.mxu0 0
      %2736 = vmatpush1.bf16.xpose.msra.mxu0 0
      %2737 = vmatprep.subr.bf16.mxu0 0
      %2738 = vmatpush1.bf16.xpose.msra.mxu0 0
      %2739 = vmatprep.subr.bf16.mxu0 0
      %2740 = vmatpush1.bf16.xpose.msra.mxu0 0
      %2741 = vmatprep.subr.bf16.mxu0 0
      %2742 = vmatpush1.bf16.xpose.msra.mxu0 0
      %2743 = vmatprep.subr.bf16.mxu0 0
      %2744 = vmatpush1.bf16.xpose.msra.mxu0 0
      %2745 = vmatprep.mubr.bf16.mxu0 0
      %2746 = vmatmul.mubr.bf16.gmra.mrb[0].mxu0 %v2702
      %v2747 = vpop.f32.mrb[0].mxu0
      %v2748 = vadd.f32 %v2574, %v2747
      %v2749 = vpop.f32.mrb[0].mxu0
      %v2750 = vpop.f32.mrb[0].mxu0
      %v2751 = vadd.f32 %v2575, %v2750
      %v2752 = vpop.f32.mrb[0].mxu0
      %2753 = vmatprep.mubr.bf16.mxu0 0
      %2754 = vmatmul.mubr.bf16.gmra.mrb[0].mxu0 %v2705
      %v2755 = vpop.f32.mrb[0].mxu0
      %v2756 = vadd.f32 %v2576, %v2755
      %v2757 = vpop.f32.mrb[0].mxu0
      %v2758 = vpop.f32.mrb[0].mxu0
      %v2759 = vpop.f32.mrb[0].mxu0
      %2760 = vdwg.mxu0
      %v2762 = vsel %vm2580, %v936, 0
      %v2765 = vsel %vm2580, %v937, 0
      %v2768 = vsel %vm2580, %v1294, 0
      %v2771 = vsel %vm2580, %v1295, 0
      %2773 = vmatprep.subr.bf16.mxu0 0
      %2774 = vmatpush1.bf16.xpose.msra.mxu0 %v2768
      %2775 = vmatprep.subr.bf16.mxu0 0
      %2776 = vmatpush1.bf16.xpose.msra.mxu0 %v2771
      %2777 = vmatprep.subr.bf16.mxu0 0
      %2778 = vmatpush1.bf16.xpose.msra.mxu0 0
      %2779 = vmatprep.subr.bf16.mxu0 0
      %2780 = vmatpush1.bf16.xpose.msra.mxu0 0
      %2781 = vmatprep.subr.bf16.mxu0 0
      %2782 = vmatpush1.bf16.xpose.msra.mxu0 0
      %2783 = vmatprep.subr.bf16.mxu0 0
      %2784 = vmatpush1.bf16.xpose.msra.mxu0 0
      %2785 = vmatprep.subr.bf16.mxu0 0
      %2786 = vmatpush1.bf16.xpose.msra.mxu0 0
      %2787 = vmatprep.subr.bf16.mxu0 0
      %2788 = vmatpush1.bf16.xpose.msra.mxu0 0
      %2789 = vmatprep.subr.bf16.mxu0 0
      %2790 = vmatpush1.bf16.xpose.msra.mxu0 0
      %2791 = vmatprep.subr.bf16.mxu0 0
      %2792 = vmatpush1.bf16.xpose.msra.mxu0 0
      %2793 = vmatprep.subr.bf16.mxu0 0
      %2794 = vmatpush1.bf16.xpose.msra.mxu0 0
      %2795 = vmatprep.subr.bf16.mxu0 0
      %2796 = vmatpush1.bf16.xpose.msra.mxu0 0
      %2797 = vmatprep.subr.bf16.mxu0 0
      %2798 = vmatpush1.bf16.xpose.msra.mxu0 0
      %2799 = vmatprep.subr.bf16.mxu0 0
      %2800 = vmatpush1.bf16.xpose.msra.mxu0 0
      %2801 = vmatprep.subr.bf16.mxu0 0
      %2802 = vmatpush1.bf16.xpose.msra.mxu0 0
      %2803 = vmatprep.subr.bf16.mxu0 0
      %2804 = vmatpush1.bf16.xpose.msra.mxu0 0
      %2805 = vmatprep.mubr.bf16.mxu0 0
      %2806 = vmatmul.mubr.bf16.gmra.mrb[0].mxu0 %v2762
      %v2807 = vpop.f32.mrb[0].mxu0
      %v2808 = vadd.f32 %v2577, %v2807
      %v2809 = vpop.f32.mrb[0].mxu0
      %v2810 = vpop.f32.mrb[0].mxu0
      %v2811 = vadd.f32 %v2578, %v2810
      %v2812 = vpop.f32.mrb[0].mxu0
      %2813 = vmatprep.mubr.bf16.mxu0 0
      %2814 = vmatmul.mubr.bf16.gmra.mrb[0].mxu0 %v2765
      %v2815 = vpop.f32.mrb[0].mxu0
      %v2816 = vadd.f32 %v2579, %v2815
      %v2817 = vpop.f32.mrb[0].mxu0
      %v2818 = vpop.f32.mrb[0].mxu0
      %v2819 = vpop.f32.mrb[0].mxu0
      %2820 = vdwg.mxu0
      %vm2821 = vcmask 138240
      %v2822 = vsel %vm2821, %v2628, -inf
      %2823 = vmax.xlane.f32.xlu0 %v2822
      %v2824 = vpop.xlane.xlu0 %2823
      %v2825 = vsel %vm2821, %v2631, -inf
      %2826 = vmax.xlane.f32.xlu0 %v2825
      %v2827 = vpop.xlane.xlu0 %2826
      %vm2828 = vcmask 131072
      %v2829 = vsel %vm2828, %v2636, -inf
      %2830 = vmax.xlane.f32.xlu0 %v2829
      %v2831 = vpop.xlane.xlu0 %2830
      %v2832 = vsel %vm2821, %v2688, -inf
      %2833 = vmax.xlane.f32.xlu0 %v2832
      %v2834 = vpop.xlane.xlu0 %2833
      %v2835 = vsel %vm2821, %v2691, -inf
      %2836 = vmax.xlane.f32.xlu0 %v2835
      %v2837 = vpop.xlane.xlu0 %2836
      %v2838 = vsel %vm2828, %v2696, -inf
      %2839 = vmax.xlane.f32.xlu0 %v2838
      %v2840 = vpop.xlane.xlu0 %2839
      %v2841 = vsel %vm2821, %v2748, -inf
      %2842 = vmax.xlane.f32.xlu0 %v2841
      %v2843 = vpop.xlane.xlu0 %2842
      %v2844 = vsel %vm2821, %v2751, -inf
      %2845 = vmax.xlane.f32.xlu0 %v2844
      %v2846 = vpop.xlane.xlu0 %2845
      %v2847 = vsel %vm2828, %v2756, -inf
      %2848 = vmax.xlane.f32.xlu0 %v2847
      %v2849 = vpop.xlane.xlu0 %2848
      %v2850 = vsel %vm2821, %v2808, -inf
      %2851 = vmax.xlane.f32.xlu0 %v2850
      %v2852 = vpop.xlane.xlu0 %2851
      %v2853 = vsel %vm2821, %v2811, -inf
      %2854 = vmax.xlane.f32.xlu0 %v2853
      %v2855 = vpop.xlane.xlu0 %2854
      %v2856 = vsel %vm2828, %v2816, -inf
      %2857 = vmax.xlane.f32.xlu0 %v2856
      %v2858 = vpop.xlane.xlu0 %2857
      %v2859 = vsub.f32 %v2628, %v2824
      %v2860 = vsub.f32 %v2631, %v2827
      %v2861 = vsub.f32 %v2636, %v2831
      %v2862 = vsub.f32 %v2688, %v2834
      %v2863 = vsub.f32 %v2691, %v2837
      %v2864 = vsub.f32 %v2696, %v2840
      %v2865 = vsub.f32 %v2748, %v2843
      %v2866 = vsub.f32 %v2751, %v2846
      %v2867 = vsub.f32 %v2756, %v2849
      %v2868 = vsub.f32 %v2808, %v2852
      %v2869 = vsub.f32 %v2811, %v2855
      %v2870 = vsub.f32 %v2816, %v2858
      %v2871 = vmul.f32 %v2859, 1.442695
      %v2872 = vpow.pop %v2871
      %v2873 = vmul.f32 %v2860, 1.442695
      %v2874 = vpow.pop %v2873
      %v2875 = vmul.f32 %v2861, 1.442695
      %v2876 = vpow.pop %v2875
      %v2877 = vmul.f32 %v2862, 1.442695
      %v2878 = vpow.pop %v2877
      %v2879 = vmul.f32 %v2863, 1.442695
      %v2880 = vpow.pop %v2879
      %v2881 = vmul.f32 %v2864, 1.442695
      %v2882 = vpow.pop %v2881
      %v2883 = vmul.f32 %v2865, 1.442695
      %v2884 = vpow.pop %v2883
      %v2885 = vmul.f32 %v2866, 1.442695
      %v2886 = vpow.pop %v2885
      %v2887 = vmul.f32 %v2867, 1.442695
      %v2888 = vpow.pop %v2887
      %v2889 = vmul.f32 %v2868, 1.442695
      %v2890 = vpow.pop %v2889
      %v2891 = vmul.f32 %v2869, 1.442695
      %v2892 = vpow.pop %v2891
      %v2893 = vmul.f32 %v2870, 1.442695
      %v2894 = vpow.pop %v2893
      %v2895 = vsel %vm2821, %v2872, 0.0
      %2896 = vadd.xlane.f32.xlu0 %v2895
      %v2897 = vpop.xlane.xlu0 %2896
      %v2898 = vsel %vm2821, %v2874, 0.0
      %2899 = vadd.xlane.f32.xlu0 %v2898
      %v2900 = vpop.xlane.xlu0 %2899
      %v2901 = vsel %vm2828, %v2876, 0.0
      %2902 = vadd.xlane.f32.xlu0 %v2901
      %v2903 = vpop.xlane.xlu0 %2902
      %v2904 = vsel %vm2821, %v2878, 0.0
      %2905 = vadd.xlane.f32.xlu0 %v2904
      %v2906 = vpop.xlane.xlu0 %2905
      %v2907 = vsel %vm2821, %v2880, 0.0
      %2908 = vadd.xlane.f32.xlu0 %v2907
      %v2909 = vpop.xlane.xlu0 %2908
      %v2910 = vsel %vm2828, %v2882, 0.0
      %2911 = vadd.xlane.f32.xlu0 %v2910
      %v2912 = vpop.xlane.xlu0 %2911
      %v2913 = vsel %vm2821, %v2884, 0.0
      %2914 = vadd.xlane.f32.xlu0 %v2913
      %v2915 = vpop.xlane.xlu0 %2914
      %v2916 = vsel %vm2821, %v2886, 0.0
      %2917 = vadd.xlane.f32.xlu0 %v2916
      %v2918 = vpop.xlane.xlu0 %2917
      %v2919 = vsel %vm2828, %v2888, 0.0
      %2920 = vadd.xlane.f32.xlu0 %v2919
      %v2921 = vpop.xlane.xlu0 %2920
      %v2922 = vsel %vm2821, %v2890, 0.0
      %2923 = vadd.xlane.f32.xlu0 %v2922
      %v2924 = vpop.xlane.xlu0 %2923
      %v2925 = vsel %vm2821, %v2892, 0.0
      %2926 = vadd.xlane.f32.xlu0 %v2925
      %v2927 = vpop.xlane.xlu0 %2926
      %v2928 = vsel %vm2828, %v2894, 0.0
      %2929 = vadd.xlane.f32.xlu0 %v2928
      %v2930 = vpop.xlane.xlu0 %2929
      %v2931 = vrcp.pop %v2897
      %v2932 = vrcp.pop %v2900
      %v2933 = vrcp.pop %v2903
      %v2934 = vrcp.pop %v2906
      %v2935 = vrcp.pop %v2909
      %v2936 = vrcp.pop %v2912
      %v2937 = vrcp.pop %v2915
      %v2938 = vrcp.pop %v2918
      %v2939 = vrcp.pop %v2921
      %v2940 = vrcp.pop %v2924
      %v2941 = vrcp.pop %v2927
      %v2942 = vrcp.pop %v2930
      %v2943 = vmul.f32 %v2872, %v2931
      %v2944 = vmul.f32 %v2874, %v2932
      %v2945 = vmul.f32 %v2876, %v2933
      %v2946 = vmul.f32 %v2878, %v2934
      %v2947 = vmul.f32 %v2880, %v2935
      %v2948 = vmul.f32 %v2882, %v2936
      %v2949 = vmul.f32 %v2884, %v2937
      %v2950 = vmul.f32 %v2886, %v2938
      %v2951 = vmul.f32 %v2888, %v2939
      %v2952 = vmul.f32 %v2890, %v2940
      %v2953 = vmul.f32 %v2892, %v2941
      %v2954 = vmul.f32 %v2894, %v2942
      %v2955 = vpack.c.bf16 %v2944, %v2943
      %v2956 = vpack.c.bf16 %v2945, %v2945
      %v2957 = vpack.c.bf16 %v2947, %v2946
      %v2958 = vpack.c.bf16 %v2948, %v2948
      %v2959 = vpack.c.bf16 %v2950, %v2949
      %v2960 = vpack.c.bf16 %v2951, %v2951
      %v2961 = vpack.c.bf16 %v2953, %v2952
      %v2962 = vpack.c.bf16 %v2954, %v2954
      %v2964 = vsel %vm2821, %v2955, 0
      %v2967 = vsel %vm2821, %v2956, 0
      %vm2969 = vcmask 1040384
      %v2970 = vsel 0, 4294967295, 65535
      %v2971 = vsel %vm2969, %v2970, 0
      %v2973 = vand.u32 %v1647, %v2971
      %2975 = vmatprep.subr.bf16.mxu0 0
      %2976 = vmatpush1.bf16.msra.mxu0 %v1646
      %2977 = vmatprep.subr.bf16.mxu0 0
      %2978 = vmatpush1.bf16.msra.mxu0 %v2973
      %2979 = vmatprep.subr.bf16.mxu0 0
      %2980 = vmatpush1.bf16.msra.mxu0 0
      %2981 = vmatprep.subr.bf16.mxu0 0
      %2982 = vmatpush1.bf16.msra.mxu0 0
      %2983 = vmatprep.subr.bf16.mxu0 0
      %2984 = vmatpush1.bf16.msra.mxu0 0
      %2985 = vmatprep.subr.bf16.mxu0 0
      %2986 = vmatpush1.bf16.msra.mxu0 0
      %2987 = vmatprep.subr.bf16.mxu0 0
      %2988 = vmatpush1.bf16.msra.mxu0 0
      %2989 = vmatprep.subr.bf16.mxu0 0
      %2990 = vmatpush1.bf16.msra.mxu0 0
      %2991 = vmatprep.subr.bf16.mxu0 0
      %2992 = vmatpush1.bf16.msra.mxu0 0
      %2993 = vmatprep.subr.bf16.mxu0 0
      %2994 = vmatpush1.bf16.msra.mxu0 0
      %2995 = vmatprep.subr.bf16.mxu0 0
      %2996 = vmatpush1.bf16.msra.mxu0 0
      %2997 = vmatprep.subr.bf16.mxu0 0
      %2998 = vmatpush1.bf16.msra.mxu0 0
      %2999 = vmatprep.subr.bf16.mxu0 0
      %3000 = vmatpush1.bf16.msra.mxu0 0
      %3001 = vmatprep.subr.bf16.mxu0 0
      %3002 = vmatpush1.bf16.msra.mxu0 0
      %3003 = vmatprep.subr.bf16.mxu0 0
      %3004 = vmatpush1.bf16.msra.mxu0 0
      %3005 = vmatprep.subr.bf16.mxu0 0
      %3006 = vmatpush1.bf16.msra.mxu0 0
      %3007 = vmatprep.mubr.bf16.mxu0 0
      %3008 = vmatmul.mubr.bf16.gmra.mrb[0].mxu0 %v2964
      %v3009 = vpop.f32.mrb[0].mxu0
      %v3010 = vadd.f32 0.0, %v3009
      %v3011 = vpop.f32.mrb[0].mxu0
      %v3012 = vpop.f32.mrb[0].mxu0
      %v3013 = vadd.f32 0.0, %v3012
      %v3014 = vpop.f32.mrb[0].mxu0
      %3015 = vmatprep.mubr.bf16.mxu0 0
      %3016 = vmatmul.mubr.bf16.gmra.mrb[0].mxu0 %v2967
      %v3017 = vpop.f32.mrb[0].mxu0
      %v3018 = vadd.f32 0.0, %v3017
      %v3019 = vpop.f32.mrb[0].mxu0
      %v3020 = vpop.f32.mrb[0].mxu0
      %v3021 = vpop.f32.mrb[0].mxu0
      %3022 = vdwg.mxu0
      %v3024 = vsel %vm2821, %v2957, 0
      %v3027 = vsel %vm2821, %v2958, 0
      %v3030 = vand.u32 %v1649, %v2971
      %3032 = vmatprep.subr.bf16.mxu0 0
      %3033 = vmatpush1.bf16.msra.mxu0 %v1648
      %3034 = vmatprep.subr.bf16.mxu0 0
      %3035 = vmatpush1.bf16.msra.mxu0 %v3030
      %3036 = vmatprep.subr.bf16.mxu0 0
      %3037 = vmatpush1.bf16.msra.mxu0 0
      %3038 = vmatprep.subr.bf16.mxu0 0
      %3039 = vmatpush1.bf16.msra.mxu0 0
      %3040 = vmatprep.subr.bf16.mxu0 0
      %3041 = vmatpush1.bf16.msra.mxu0 0
      %3042 = vmatprep.subr.bf16.mxu0 0
      %3043 = vmatpush1.bf16.msra.mxu0 0
      %3044 = vmatprep.subr.bf16.mxu0 0
      %3045 = vmatpush1.bf16.msra.mxu0 0
      %3046 = vmatprep.subr.bf16.mxu0 0
      %3047 = vmatpush1.bf16.msra.mxu0 0
      %3048 = vmatprep.subr.bf16.mxu0 0
      %3049 = vmatpush1.bf16.msra.mxu0 0
      %3050 = vmatprep.subr.bf16.mxu0 0
      %3051 = vmatpush1.bf16.msra.mxu0 0
      %3052 = vmatprep.subr.bf16.mxu0 0
      %3053 = vmatpush1.bf16.msra.mxu0 0
      %3054 = vmatprep.subr.bf16.mxu0 0
      %3055 = vmatpush1.bf16.msra.mxu0 0
      %3056 = vmatprep.subr.bf16.mxu0 0
      %3057 = vmatpush1.bf16.msra.mxu0 0
      %3058 = vmatprep.subr.bf16.mxu0 0
      %3059 = vmatpush1.bf16.msra.mxu0 0
      %3060 = vmatprep.subr.bf16.mxu0 0
      %3061 = vmatpush1.bf16.msra.mxu0 0
      %3062 = vmatprep.subr.bf16.mxu0 0
      %3063 = vmatpush1.bf16.msra.mxu0 0
      %3064 = vmatprep.mubr.bf16.mxu0 0
      %3065 = vmatmul.mubr.bf16.gmra.mrb[0].mxu0 %v3024
      %v3066 = vpop.f32.mrb[0].mxu0
      %v3067 = vadd.f32 0.0, %v3066
      %v3068 = vpop.f32.mrb[0].mxu0
      %v3069 = vpop.f32.mrb[0].mxu0
      %v3070 = vadd.f32 0.0, %v3069
      %v3071 = vpop.f32.mrb[0].mxu0
      %3072 = vmatprep.mubr.bf16.mxu0 0
      %3073 = vmatmul.mubr.bf16.gmra.mrb[0].mxu0 %v3027
      %v3074 = vpop.f32.mrb[0].mxu0
      %v3075 = vadd.f32 0.0, %v3074
      %v3076 = vpop.f32.mrb[0].mxu0
      %v3077 = vpop.f32.mrb[0].mxu0
      %v3078 = vpop.f32.mrb[0].mxu0
      %3079 = vdwg.mxu0
      %v3081 = vsel %vm2821, %v2959, 0
      %v3084 = vsel %vm2821, %v2960, 0
      %v3087 = vand.u32 %v1651, %v2971
      %3089 = vmatprep.subr.bf16.mxu0 0
      %3090 = vmatpush1.bf16.msra.mxu0 %v1650
      %3091 = vmatprep.subr.bf16.mxu0 0
      %3092 = vmatpush1.bf16.msra.mxu0 %v3087
      %3093 = vmatprep.subr.bf16.mxu0 0
      %3094 = vmatpush1.bf16.msra.mxu0 0
      %3095 = vmatprep.subr.bf16.mxu0 0
      %3096 = vmatpush1.bf16.msra.mxu0 0
      %3097 = vmatprep.subr.bf16.mxu0 0
      %3098 = vmatpush1.bf16.msra.mxu0 0
      %3099 = vmatprep.subr.bf16.mxu0 0
      %3100 = vmatpush1.bf16.msra.mxu0 0
      %3101 = vmatprep.subr.bf16.mxu0 0
      %3102 = vmatpush1.bf16.msra.mxu0 0
      %3103 = vmatprep.subr.bf16.mxu0 0
      %3104 = vmatpush1.bf16.msra.mxu0 0
      %3105 = vmatprep.subr.bf16.mxu0 0
      %3106 = vmatpush1.bf16.msra.mxu0 0
      %3107 = vmatprep.subr.bf16.mxu0 0
      %3108 = vmatpush1.bf16.msra.mxu0 0
      %3109 = vmatprep.subr.bf16.mxu0 0
      %3110 = vmatpush1.bf16.msra.mxu0 0
      %3111 = vmatprep.subr.bf16.mxu0 0
      %3112 = vmatpush1.bf16.msra.mxu0 0
      %3113 = vmatprep.subr.bf16.mxu0 0
      %3114 = vmatpush1.bf16.msra.mxu0 0
      %3115 = vmatprep.subr.bf16.mxu0 0
      %3116 = vmatpush1.bf16.msra.mxu0 0
      %3117 = vmatprep.subr.bf16.mxu0 0
      %3118 = vmatpush1.bf16.msra.mxu0 0
      %3119 = vmatprep.subr.bf16.mxu0 0
      %3120 = vmatpush1.bf16.msra.mxu0 0
      %3121 = vmatprep.mubr.bf16.mxu0 0
      %3122 = vmatmul.mubr.bf16.gmra.mrb[0].mxu0 %v3081
      %v3123 = vpop.f32.mrb[0].mxu0
      %v3124 = vadd.f32 0.0, %v3123
      %v3125 = vpop.f32.mrb[0].mxu0
      %v3126 = vpop.f32.mrb[0].mxu0
      %v3127 = vadd.f32 0.0, %v3126
      %v3128 = vpop.f32.mrb[0].mxu0
      %3129 = vmatprep.mubr.bf16.mxu0 0
      %3130 = vmatmul.mubr.bf16.gmra.mrb[0].mxu0 %v3084
      %v3131 = vpop.f32.mrb[0].mxu0
      %v3132 = vadd.f32 0.0, %v3131
      %v3133 = vpop.f32.mrb[0].mxu0
      %v3134 = vpop.f32.mrb[0].mxu0
      %v3135 = vpop.f32.mrb[0].mxu0
      %3136 = vdwg.mxu0
      %v3138 = vsel %vm2821, %v2961, 0
      %v3141 = vsel %vm2821, %v2962, 0
      %v3144 = vand.u32 %v1653, %v2971
      %3146 = vmatprep.subr.bf16.mxu0 0
      %3147 = vmatpush1.bf16.msra.mxu0 %v1652
      %3148 = vmatprep.subr.bf16.mxu0 0
      %3149 = vmatpush1.bf16.msra.mxu0 %v3144
      %3150 = vmatprep.subr.bf16.mxu0 0
      %3151 = vmatpush1.bf16.msra.mxu0 0
      %3152 = vmatprep.subr.bf16.mxu0 0
      %3153 = vmatpush1.bf16.msra.mxu0 0
      %3154 = vmatprep.subr.bf16.mxu0 0
      %3155 = vmatpush1.bf16.msra.mxu0 0
      %3156 = vmatprep.subr.bf16.mxu0 0
      %3157 = vmatpush1.bf16.msra.mxu0 0
      %3158 = vmatprep.subr.bf16.mxu0 0
      %3159 = vmatpush1.bf16.msra.mxu0 0
      %3160 = vmatprep.subr.bf16.mxu0 0
      %3161 = vmatpush1.bf16.msra.mxu0 0
      %3162 = vmatprep.subr.bf16.mxu0 0
      %3163 = vmatpush1.bf16.msra.mxu0 0
      %3164 = vmatprep.subr.bf16.mxu0 0
      %3165 = vmatpush1.bf16.msra.mxu0 0
      %3166 = vmatprep.subr.bf16.mxu0 0
      %3167 = vmatpush1.bf16.msra.mxu0 0
      %3168 = vmatprep.subr.bf16.mxu0 0
      %3169 = vmatpush1.bf16.msra.mxu0 0
      %3170 = vmatprep.subr.bf16.mxu0 0
      %3171 = vmatpush1.bf16.msra.mxu0 0
      %3172 = vmatprep.subr.bf16.mxu0 0
      %3173 = vmatpush1.bf16.msra.mxu0 0
      %3174 = vmatprep.subr.bf16.mxu0 0
      %3175 = vmatpush1.bf16.msra.mxu0 0
      %3176 = vmatprep.subr.bf16.mxu0 0
      %3177 = vmatpush1.bf16.msra.mxu0 0
      %3178 = vmatprep.mubr.bf16.mxu0 0
      %3179 = vmatmul.mubr.bf16.gmra.mrb[0].mxu0 %v3138
      %v3180 = vpop.f32.mrb[0].mxu0
      %v3181 = vadd.f32 0.0, %v3180
      %v3182 = vpop.f32.mrb[0].mxu0
      %v3183 = vpop.f32.mrb[0].mxu0
      %v3184 = vadd.f32 0.0, %v3183
      %v3185 = vpop.f32.mrb[0].mxu0
      %3186 = vmatprep.mubr.bf16.mxu0 0
      %3187 = vmatmul.mubr.bf16.gmra.mrb[0].mxu0 %v3141
      %v3188 = vpop.f32.mrb[0].mxu0
      %v3189 = vadd.f32 0.0, %v3188
      %v3190 = vpop.f32.mrb[0].mxu0
      %v3191 = vpop.f32.mrb[0].mxu0
      %v3192 = vpop.f32.mrb[0].mxu0
      %3193 = vdwg.mxu0
      %v3194 = vcombine.low %v3010, %v3124
      %v3195 = vcombine.high %v3010, %v3124
      %v3197 = vunpack.c.l.s4 1983009808
      %v3198 = vunpack.c.0.s8 %v3197
      %v3199 = vlaneseq
      %v3200 = vshrl.u32 %v3199, 7
      %v3201 = vsub.s32 %v3198, %v3200
      %v3202 = vrot.slane %v3194, %v3201
      %v3204 = vunpack.c.l.s4 1983009808
      %v3205 = vunpack.c.0.s8 %v3204
      %v3206 = vlaneseq
      %v3207 = vshrl.u32 %v3206, 7
      %v3208 = vsub.s32 %v3205, %v3207
      %v3209 = vrot.slane %v3195, %v3208
      %v3210 = vcombine.low %v3067, %v3181
      %v3211 = vcombine.high %v3067, %v3181
      %v3213 = vunpack.c.l.s4 1983009808
      %v3214 = vunpack.c.0.s8 %v3213
      %v3215 = vlaneseq
      %v3216 = vshrl.u32 %v3215, 7
      %v3217 = vsub.s32 %v3214, %v3216
      %v3218 = vrot.slane %v3210, %v3217
      %v3220 = vunpack.c.l.s4 1983009808
      %v3221 = vunpack.c.0.s8 %v3220
      %v3222 = vlaneseq
      %v3223 = vshrl.u32 %v3222, 7
      %v3224 = vsub.s32 %v3221, %v3223
      %v3225 = vrot.slane %v3211, %v3224
      %v3226 = vcombine.low %v3202, %v3218
      %v3227 = vcombine.high %v3202, %v3218
      %v3229 = vunpack.c.l.s4 1934713408
      %v3230 = vunpack.c.0.s8 %v3229
      %v3231 = vlaneseq
      %v3232 = vshrl.u32 %v3231, 7
      %v3233 = vsub.s32 %v3230, %v3232
      %v3234 = vrot.slane %v3226, %v3233
      %v3236 = vunpack.c.l.s4 1934713408
      %v3237 = vunpack.c.0.s8 %v3236
      %v3238 = vlaneseq
      %v3239 = vshrl.u32 %v3238, 7
      %v3240 = vsub.s32 %v3237, %v3239
      %v3241 = vrot.slane %v3227, %v3240
      %v3242 = vcombine.low %v3209, %v3225
      %v3243 = vcombine.high %v3209, %v3225
      %v3245 = vunpack.c.l.s4 1934713408
      %v3246 = vunpack.c.0.s8 %v3245
      %v3247 = vlaneseq
      %v3248 = vshrl.u32 %v3247, 7
      %v3249 = vsub.s32 %v3246, %v3248
      %v3250 = vrot.slane %v3242, %v3249
      %v3252 = vunpack.c.l.s4 1934713408
      %v3253 = vunpack.c.0.s8 %v3252
      %v3254 = vlaneseq
      %v3255 = vshrl.u32 %v3254, 7
      %v3256 = vsub.s32 %v3253, %v3255
      %v3257 = vrot.slane %v3243, %v3256
      %v3258 = vcombine.high %v3234, 0.0
      %v3259 = vcombine.high %v3241, 0.0
      %v3260 = vcombine.high %v3250, 0.0
      %v3261 = vcombine.high %v3257, 0.0
      %v3262 = vcombine.low %v3013, %v3127
      %v3263 = vcombine.high %v3013, %v3127
      %v3265 = vunpack.c.l.s4 1983009808
      %v3266 = vunpack.c.0.s8 %v3265
      %v3267 = vlaneseq
      %v3268 = vshrl.u32 %v3267, 7
      %v3269 = vsub.s32 %v3266, %v3268
      %v3270 = vrot.slane %v3262, %v3269
      %v3272 = vunpack.c.l.s4 1983009808
      %v3273 = vunpack.c.0.s8 %v3272
      %v3274 = vlaneseq
      %v3275 = vshrl.u32 %v3274, 7
      %v3276 = vsub.s32 %v3273, %v3275
      %v3277 = vrot.slane %v3263, %v3276
      %v3278 = vcombine.low %v3070, %v3184
      %v3279 = vcombine.high %v3070, %v3184
      %v3281 = vunpack.c.l.s4 1983009808
      %v3282 = vunpack.c.0.s8 %v3281
      %v3283 = vlaneseq
      %v3284 = vshrl.u32 %v3283, 7
      %v3285 = vsub.s32 %v3282, %v3284
      %v3286 = vrot.slane %v3278, %v3285
      %v3288 = vunpack.c.l.s4 1983009808
      %v3289 = vunpack.c.0.s8 %v3288
      %v3290 = vlaneseq
      %v3291 = vshrl.u32 %v3290, 7
      %v3292 = vsub.s32 %v3289, %v3291
      %v3293 = vrot.slane %v3279, %v3292
      %v3294 = vcombine.low %v3270, %v3286
      %v3295 = vcombine.high %v3270, %v3286
      %v3297 = vunpack.c.l.s4 1934713408
      %v3298 = vunpack.c.0.s8 %v3297
      %v3299 = vlaneseq
      %v3300 = vshrl.u32 %v3299, 7
      %v3301 = vsub.s32 %v3298, %v3300
      %v3302 = vrot.slane %v3294, %v3301
      %v3304 = vunpack.c.l.s4 1934713408
      %v3305 = vunpack.c.0.s8 %v3304
      %v3306 = vlaneseq
      %v3307 = vshrl.u32 %v3306, 7
      %v3308 = vsub.s32 %v3305, %v3307
      %v3309 = vrot.slane %v3295, %v3308
      %v3310 = vcombine.low %v3277, %v3293
      %v3311 = vcombine.high %v3277, %v3293
      %v3313 = vunpack.c.l.s4 1934713408
      %v3314 = vunpack.c.0.s8 %v3313
      %v3315 = vlaneseq
      %v3316 = vshrl.u32 %v3315, 7
      %v3317 = vsub.s32 %v3314, %v3316
      %v3318 = vrot.slane %v3310, %v3317
      %v3320 = vunpack.c.l.s4 1934713408
      %v3321 = vunpack.c.0.s8 %v3320
      %v3322 = vlaneseq
      %v3323 = vshrl.u32 %v3322, 7
      %v3324 = vsub.s32 %v3321, %v3323
      %v3325 = vrot.slane %v3311, %v3324
      %v3326 = vcombine.high %v3302, 0.0
      %v3327 = vcombine.high %v3309, 0.0
      %v3328 = vcombine.high %v3318, 0.0
      %v3329 = vcombine.high %v3325, 0.0
      %v3330 = vcombine.low %v3018, %v3132
      %v3332 = vunpack.c.l.s4 1983009808
      %v3333 = vunpack.c.0.s8 %v3332
      %v3334 = vlaneseq
      %v3335 = vshrl.u32 %v3334, 7
      %v3336 = vsub.s32 %v3333, %v3335
      %v3337 = vrot.slane %v3330, %v3336
      %v3338 = vcombine.low %v3075, %v3189
      %v3340 = vunpack.c.l.s4 1983009808
      %v3341 = vunpack.c.0.s8 %v3340
      %v3342 = vlaneseq
      %v3343 = vshrl.u32 %v3342, 7
      %v3344 = vsub.s32 %v3341, %v3343
      %v3345 = vrot.slane %v3338, %v3344
      %v3346 = vcombine.low %v3337, %v3345
      %v3347 = vcombine.low %v3234, %v3241
      %v3349 = vunpack.c.l.s4 1983009808
      %v3350 = vunpack.c.0.s8 %v3349
      %v3351 = vlaneseq
      %v3352 = vshrl.u32 %v3351, 7
      %v3353 = vsub.s32 %v3350, %v3352
      %v3354 = vrot.slane %v3347, %v3353
      %v3355 = vcombine.low %v3258, %v3259
      %v3357 = vunpack.c.l.s4 1983009808
      %v3358 = vunpack.c.0.s8 %v3357
      %v3359 = vlaneseq
      %v3360 = vshrl.u32 %v3359, 7
      %v3361 = vsub.s32 %v3358, %v3360
      %v3362 = vrot.slane %v3355, %v3361
      %v3363 = vcombine.low %v3250, %v3257
      %v3365 = vunpack.c.l.s4 1983009808
      %v3366 = vunpack.c.0.s8 %v3365
      %v3367 = vlaneseq
      %v3368 = vshrl.u32 %v3367, 7
      %v3369 = vsub.s32 %v3366, %v3368
      %v3370 = vrot.slane %v3363, %v3369
      %v3371 = vcombine.low %v3260, %v3261
      %v3373 = vunpack.c.l.s4 1983009808
      %v3374 = vunpack.c.0.s8 %v3373
      %v3375 = vlaneseq
      %v3376 = vshrl.u32 %v3375, 7
      %v3377 = vsub.s32 %v3374, %v3376
      %v3378 = vrot.slane %v3371, %v3377
      %v3379 = vcombine.low %v3354, %v3362
      %v3380 = vcombine.high %v3354, %v3362
      %v3382 = vunpack.c.l.s4 1934713408
      %v3383 = vunpack.c.0.s8 %v3382
      %v3384 = vlaneseq
      %v3385 = vshrl.u32 %v3384, 7
      %v3386 = vsub.s32 %v3383, %v3385
      %v3387 = vrot.slane %v3379, %v3386
      %v3389 = vunpack.c.l.s4 1934713408
      %v3390 = vunpack.c.0.s8 %v3389
      %v3391 = vlaneseq
      %v3392 = vshrl.u32 %v3391, 7
      %v3393 = vsub.s32 %v3390, %v3392
      %v3394 = vrot.slane %v3380, %v3393
      %v3395 = vcombine.low %v3370, %v3378
      %v3396 = vcombine.high %v3370, %v3378
      %v3398 = vunpack.c.l.s4 1934713408
      %v3399 = vunpack.c.0.s8 %v3398
      %v3400 = vlaneseq
      %v3401 = vshrl.u32 %v3400, 7
      %v3402 = vsub.s32 %v3399, %v3401
      %v3403 = vrot.slane %v3395, %v3402
      %v3405 = vunpack.c.l.s4 1934713408
      %v3406 = vunpack.c.0.s8 %v3405
      %v3407 = vlaneseq
      %v3408 = vshrl.u32 %v3407, 7
      %v3409 = vsub.s32 %v3406, %v3408
      %v3410 = vrot.slane %v3396, %v3409
      %v3411 = vcombine.low %v3387, %v3403
      %v3412 = vcombine.high %v3387, %v3403
      %v3413 = vcombine.low %v3394, %v3410
      %v3414 = vcombine.high %v3394, %v3410
      %v3415 = vcombine.low %v3302, %v3309
      %v3417 = vunpack.c.l.s4 1983009808
      %v3418 = vunpack.c.0.s8 %v3417
      %v3419 = vlaneseq
      %v3420 = vshrl.u32 %v3419, 7
      %v3421 = vsub.s32 %v3418, %v3420
      %v3422 = vrot.slane %v3415, %v3421
      %v3423 = vcombine.low %v3326, %v3327
      %v3425 = vunpack.c.l.s4 1983009808
      %v3426 = vunpack.c.0.s8 %v3425
      %v3427 = vlaneseq
      %v3428 = vshrl.u32 %v3427, 7
      %v3429 = vsub.s32 %v3426, %v3428
      %v3430 = vrot.slane %v3423, %v3429
      %v3431 = vcombine.low %v3318, %v3325
      %v3433 = vunpack.c.l.s4 1983009808
      %v3434 = vunpack.c.0.s8 %v3433
      %v3435 = vlaneseq
      %v3436 = vshrl.u32 %v3435, 7
      %v3437 = vsub.s32 %v3434, %v3436
      %v3438 = vrot.slane %v3431, %v3437
      %v3439 = vcombine.low %v3328, %v3329
      %v3441 = vunpack.c.l.s4 1983009808
      %v3442 = vunpack.c.0.s8 %v3441
      %v3443 = vlaneseq
      %v3444 = vshrl.u32 %v3443, 7
      %v3445 = vsub.s32 %v3442, %v3444
      %v3446 = vrot.slane %v3439, %v3445
      %v3447 = vcombine.low %v3422, %v3430
      %v3448 = vcombine.high %v3422, %v3430
      %v3450 = vunpack.c.l.s4 1934713408
      %v3451 = vunpack.c.0.s8 %v3450
      %v3452 = vlaneseq
      %v3453 = vshrl.u32 %v3452, 7
      %v3454 = vsub.s32 %v3451, %v3453
      %v3455 = vrot.slane %v3447, %v3454
      %v3457 = vunpack.c.l.s4 1934713408
      %v3458 = vunpack.c.0.s8 %v3457
      %v3459 = vlaneseq
      %v3460 = vshrl.u32 %v3459, 7
      %v3461 = vsub.s32 %v3458, %v3460
      %v3462 = vrot.slane %v3448, %v3461
      %v3463 = vcombine.low %v3438, %v3446
      %v3464 = vcombine.high %v3438, %v3446
      %v3466 = vunpack.c.l.s4 1934713408
      %v3467 = vunpack.c.0.s8 %v3466
      %v3468 = vlaneseq
      %v3469 = vshrl.u32 %v3468, 7
      %v3470 = vsub.s32 %v3467, %v3469
      %v3471 = vrot.slane %v3463, %v3470
      %v3473 = vunpack.c.l.s4 1934713408
      %v3474 = vunpack.c.0.s8 %v3473
      %v3475 = vlaneseq
      %v3476 = vshrl.u32 %v3475, 7
      %v3477 = vsub.s32 %v3474, %v3476
      %v3478 = vrot.slane %v3464, %v3477
      %v3479 = vcombine.low %v3455, %v3471
      %v3480 = vcombine.high %v3455, %v3471
      %v3481 = vcombine.low %v3462, %v3478
      %v3482 = vcombine.high %v3462, %v3478
      %v3484 = vunpack.c.l.s4 1934713408
      %v3485 = vunpack.c.0.s8 %v3484
      %v3486 = vlaneseq
      %v3487 = vshrl.u32 %v3486, 7
      %v3488 = vsub.s32 %v3485, %v3487
      %v3489 = vrot.slane %v3346, %v3488
      %v3491 = vunpack.c.l.s4 1983009808
      %v3492 = vunpack.c.0.s8 %v3491
      %v3493 = vlaneseq
      %v3494 = vshrl.u32 %v3493, 7
      %v3495 = vsub.s32 %v3492, %v3494
      %v3496 = vrot.slane %v3489, %v3495
      %v3497 = vcombine.high %v3496, 0.0
      %v3499 = vunpack.c.l.s4 1934713408
      %v3500 = vunpack.c.0.s8 %v3499
      %v3501 = vlaneseq
      %v3502 = vshrl.u32 %v3501, 7
      %v3503 = vsub.s32 %v3500, %v3502
      %v3504 = vrot.slane %v3496, %v3503
      %v3506 = vunpack.c.l.s4 1934713408
      %v3507 = vunpack.c.0.s8 %v3506
      %v3508 = vlaneseq
      %v3509 = vshrl.u32 %v3508, 7
      %v3510 = vsub.s32 %v3507, %v3509
      %v3511 = vrot.slane %v3497, %v3510
      %v3512 = vcombine.high %v3504, 0.0
      %v3513 = vcombine.high %v3511, 0.0
      %3517 = vrot.lane.b32.xlu0 %v3412, 8
      %v3518 = vpop.permute.xlu0 %3517
      %3519 = vrot.lane.b32.xlu0 %v3480, 8
      %v3520 = vpop.permute.xlu0 %3519
      %3521 = vrot.lane.b32.xlu0 %v3512, 8
      %v3522 = vpop.permute.xlu0 %3521
      %3529 = vrot.lane.b32.xlu0 %v3413, 16
      %v3530 = vpop.permute.xlu0 %3529
      %3531 = vrot.lane.b32.xlu0 %v3481, 16
      %v3532 = vpop.permute.xlu0 %3531
      %3533 = vrot.lane.b32.xlu0 %v3511, 16
      %v3534 = vpop.permute.xlu0 %3533
      %3541 = vrot.lane.b32.xlu0 %v3414, 24
      %v3542 = vpop.permute.xlu0 %3541
      %3543 = vrot.lane.b32.xlu0 %v3482, 24
      %v3544 = vpop.permute.xlu0 %3543
      %3545 = vrot.lane.b32.xlu0 %v3513, 24
      %v3546 = vpop.permute.xlu0 %3545
      %v3550 = vsel %vm2580, %v3411, %v3518
      %v3551 = vsel %vm2580, %v3479, %v3520
      %v3552 = vsel %vm2580, %v3504, %v3522
      %vm3553 = vcmask 130048
      %v3554 = vsel %vm3553, %v3550, %v3530
      %v3555 = vsel %vm3553, %v3551, %v3532
      %v3556 = vsel %vm3553, %v3552, %v3534
      %vm3557 = vcmask 195584
      %v3558 = vsel %vm3557, %v3554, %v3542
      %v3559 = vsel %vm3557, %v3555, %v3544
      %v3560 = vsel %vm3557, %v3556, %v3546
      %v3561 = vpack.c.bf16 %v3559, %v3558
      %v3562 = vpack.c.bf16 %v3560, %v3560
      %v3563 = vld [vmem:[%s6] sm:$0xf]
      %v3564 = vld [vmem:[%s6 + $0x4] sm:$0xf]
      %v3565 = vld [vmem:[%s6 + $0x8] sm:$0xf]
      %v3566 = vld [vmem:[%s6 + $0xc] sm:$0xf]
      %v3567 = vld [vmem:[%s7] sm:$0x1]
      %v3569 = vlaneseq
      %v3570 = vshrl.u32 %v3569, 7
      %v3571 = vsub.s32 0, %v3570
      %v3572 = vrot.slane %v3567, %v3571
      %v3578 = vunpack.c.l.b16 %v3563
      %v3579 = vunpack.c.l.b16 %v3564
      %v3580 = vunpack.c.l.b16 %v3565
      %v3581 = vunpack.c.l.b16 %v3566
      %v3582 = vpack.c.b16 %v3579, %v3578
      %v3583 = vpack.c.b16 %v3581, %v3580
      %v3587 = vsel %vm335, %v3561, 0
      %v3590 = vsel %vm335, %v3562, 0
      %3592 = vmatprep.subr.bf16.mxu0 0
      %3593 = vmatpush1.bf16.msra.mxu0 %v3582
      %3594 = vmatprep.subr.bf16.mxu0 0
      %3595 = vmatpush1.bf16.msra.mxu0 %v3583
      %3596 = vmatprep.subr.bf16.mxu0 0
      %3597 = vmatpush1.bf16.msra.mxu0 0
      %3598 = vmatprep.subr.bf16.mxu0 0
      %3599 = vmatpush1.bf16.msra.mxu0 0
      %3600 = vmatprep.subr.bf16.mxu0 0
      %3601 = vmatpush1.bf16.msra.mxu0 0
      %3602 = vmatprep.subr.bf16.mxu0 0
      %3603 = vmatpush1.bf16.msra.mxu0 0
      %3604 = vmatprep.subr.bf16.mxu0 0
      %3605 = vmatpush1.bf16.msra.mxu0 0
      %3606 = vmatprep.subr.bf16.mxu0 0
      %3607 = vmatpush1.bf16.msra.mxu0 0
      %3608 = vmatprep.subr.bf16.mxu0 0
      %3609 = vmatpush1.bf16.msra.mxu0 0
      %3610 = vmatprep.subr.bf16.mxu0 0
      %3611 = vmatpush1.bf16.msra.mxu0 0
      %3612 = vmatprep.subr.bf16.mxu0 0
      %3613 = vmatpush1.bf16.msra.mxu0 0
      %3614 = vmatprep.subr.bf16.mxu0 0
      %3615 = vmatpush1.bf16.msra.mxu0 0
      %3616 = vmatprep.subr.bf16.mxu0 0
      %3617 = vmatpush1.bf16.msra.mxu0 0
      %3618 = vmatprep.subr.bf16.mxu0 0
      %3619 = vmatpush1.bf16.msra.mxu0 0
      %3620 = vmatprep.subr.bf16.mxu0 0
      %3621 = vmatpush1.bf16.msra.mxu0 0
      %3622 = vmatprep.subr.bf16.mxu0 0
      %3623 = vmatpush1.bf16.msra.mxu0 0
      %3624 = vmatprep.mubr.bf16.mxu0 0
      %3625 = vmatmul.mubr.bf16.gmra.mrb[0].mxu0 %v3587
      %v3626 = vpop.f32.mrb[0].mxu0
      %v3627 = vadd.f32 %v3572, %v3626
      %v3628 = vpop.f32.mrb[0].mxu0
      %v3629 = vpop.f32.mrb[0].mxu0
      %v3630 = vadd.f32 %v3572, %v3629
      %v3631 = vpop.f32.mrb[0].mxu0
      %3632 = vmatprep.mubr.bf16.mxu0 0
      %3633 = vmatmul.mubr.bf16.gmra.mrb[0].mxu0 %v3590
      %v3634 = vpop.f32.mrb[0].mxu0
      %v3635 = vadd.f32 %v3572, %v3634
      %v3636 = vpop.f32.mrb[0].mxu0
      %v3637 = vpop.f32.mrb[0].mxu0
      %v3638 = vpop.f32.mrb[0].mxu0
      %3639 = vdwg.mxu0
      %3640 = vst [vmem:[%s305] sm:$0xff] %v3627
      %3641 = vst [vmem:[%s305 + $0x8] sm:$0xff] %v3630
      %3642 = vst [vmem:[%s305 + $0x10] sm:$0x1] %v3635
      %p3643 = scmp.lt.s32.totalorder %s19, 1
      %s3644 = scalar_select %p3643, %s19, 1
      %s3645 = smul.addr %s3644, 3
      %s3646 = smul.addr %s3645, 8
      %s3647 = scalar_lea.vmem %s8, %s3646
      // Predicated region
      $region53: #{tpu_custom_call.1} parent=51 // pred_check
        %p3648 = pneg %p210
      $region54: #{tpu_custom_call.1} parent=51 // pred_check_branch
        %3650 = sbr.rel (%p3648) target = $region56
      $region55: #{tpu_custom_call.1} parent=51 // pred_region
        _
      $region56: #{tpu_custom_call.1} parent=51 // pred_fallthru
        _
    $region52: #{tpu_custom_call.1} parent=5 // pred_fallthru
      _
    %p3651 = scmp.le.s32.totalorder 2, %s14
    // Predicated region
    $region57: #{tpu_custom_call.1} parent=5 // pred_check
      %p3652 = pneg %p3651
    $region58: #{tpu_custom_call.1} parent=5 // pred_check_branch
      %3654 = sbr.rel (%p3652) target = $region60
    $region59: #{tpu_custom_call.1} parent=5 // pred_region
      %s3655 = ssub.s32 %s14, 2
      // Predicated region
      $region61: #{tpu_custom_call.1} parent=59 // pred_check
        %p3656 = pneg %p216
      $region62: #{tpu_custom_call.1} parent=59 // pred_check_branch
        %3658 = sbr.rel (%p3656) target = $region64
      $region63: #{tpu_custom_call.1} parent=59 // pred_region
        %p3659 = scmp.lt.s32.totalorder %s20, 1
        %s3660 = scalar_select %p3659, %s20, 1
        %s3661 = smul.addr %s3660, 3
        %s3662 = smul.addr %s3661, 8
        %s3663 = scalar_lea.vmem %s8, %s3662
      $region64: #{tpu_custom_call.1} parent=59 // pred_fallthru
        _
    $region60: #{tpu_custom_call.1} parent=5 // pred_fallthru
      _
  $region6: #{tpu_custom_call.1} parent=0 // loop_footer
    %s18 = sadd.s32 1, %s14
  $region7: #{tpu_custom_call.1} parent=0 // loop_footer_branch
    %13 = sbr.rel target = $region3
  $region8: #{tpu_custom_call.1} parent=0 // loop_exit
    _

</llo_original>
